<compile_context>
chip_gen: v5e
topology: v5e:2x2
jax: 0.10.0
libtpu: 0.0.40
codegen_flags: <defaults>
</compile_context>

<pallas_src>
import jax
import jax.numpy as jnp
from jax.experimental import pallas as pl
from jax.experimental.pallas import tpu as pltpu


def pileup_mlp_kernel(x_ref, w1_ref, b1_ref, w2_ref, b2_ref,
                      w3_ref, b3_ref, w4_ref, b4_ref, o_ref):
    """Fused 4-layer MLP: relu(fc1) -> relu(fc2) -> relu(fc3) -> relu(fc4).

    Dots take bf16 operands (MXU-native), accumulate in f32; bias+ReLU epilogue in f32.
    """
    h = x_ref[...].astype(jnp.bfloat16)
    h = jnp.dot(h, w1_ref[...], preferred_element_type=jnp.float32) + b1_ref[...]
    h = jnp.maximum(h, 0.0)
    h = jnp.dot(h.astype(jnp.bfloat16), w2_ref[...],
                preferred_element_type=jnp.float32) + b2_ref[...]
    h = jnp.maximum(h, 0.0)
    h = jnp.dot(h.astype(jnp.bfloat16), w3_ref[...],
                preferred_element_type=jnp.float32) + b3_ref[...]
    h = jnp.maximum(h, 0.0)
    h = jnp.dot(h.astype(jnp.bfloat16), w4_ref[...],
                preferred_element_type=jnp.float32) + b4_ref[...]
    h = jnp.maximum(h, 0.0)  # spec: relu is applied after fc4 as well
    o_ref[...] = h.astype(o_ref.dtype)


def pileup_nn_forward(x, params, *, tb=128):
    """Runs the whole MLP in one pallas_call, gridded over batch tiles of size `tb`.

    tb=128 fills the v5e MXU rows; use tb=256..512 on v6e/v7x for larger batches.
    """
    (w1, b1), (w2, b2), (w3, b3), (w4, b4) = params
    batch, input_size = x.shape
    hidden = w1.shape[1]
    out_size = w4.shape[1]

    # Pad batch up to a multiple of the tile size, slice back at the end.
    padded = pl.cdiv(batch, tb) * tb
    if padded != batch:
        x = jnp.pad(x, ((0, padded - batch), (0, 0)))
    grid = (padded // tb,)

    # Advisory cost estimate so XLA can overlap this small custom call.
    flops = 2 * padded * (input_size * hidden + 2 * hidden * hidden + hidden * out_size)
    weight_bytes = sum(int(w.size) * w.dtype.itemsize + int(b.size) * b.dtype.itemsize
                       for (w, b) in params)
    bytes_accessed = weight_bytes + padded * input_size * 4 + padded * out_size * 4

    out = pl.pallas_call(
        pileup_mlp_kernel,
        out_shape=jax.ShapeDtypeStruct((padded, out_size), jnp.float32),
        grid_spec=pltpu.PrefetchScalarGridSpec(
            num_scalar_prefetch=0,
            grid=grid,
            in_specs=[
                # activations: one batch tile per grid step
                pl.BlockSpec((tb, input_size), lambda i: (i, 0)),
                # weights / biases: constant index_map -> VMEM-resident, DMA'd once
                pl.BlockSpec((input_size, hidden), lambda i: (0, 0)),
                pl.BlockSpec((1, hidden), lambda i: (0, 0)),
                pl.BlockSpec((hidden, hidden), lambda i: (0, 0)),
                pl.BlockSpec((1, hidden), lambda i: (0, 0)),
                pl.BlockSpec((hidden, hidden), lambda i: (0, 0)),
                pl.BlockSpec((1, hidden), lambda i: (0, 0)),
                pl.BlockSpec((hidden, out_size), lambda i: (0, 0)),
                pl.BlockSpec((1, out_size), lambda i: (0, 0)),
            ],
            out_specs=pl.BlockSpec((tb, out_size), lambda i: (i, 0)),
        ),
        compiler_params=pltpu.CompilerParams(
            dimension_semantics=("parallel",),   # megacore-shard batch tiles on v7x
            vmem_limit_bytes=32 << 20,           # plenty: ~1.3 MiB weights + small tiles
        ),
        cost_estimate=pl.CostEstimate(flops=flops, transcendentals=0,
                                      bytes_accessed=bytes_accessed),
    )(x, w1, b1, w2, b2, w3, b3, w4, b4)

    return out[:batch]


def init_params(key, input_size=1024, hidden_size=256, output_size=1024):
    """Deterministic init mimicking nn.Linear default (uniform +/- 1/sqrt(fan_in)).

    Weights are stored as (in, out) in bf16; biases as f32 (1, out) lane-aligned rows.
    """
    dims = [(input_size, hidden_size),
            (hidden_size, hidden_size),
            (hidden_size, hidden_size),
            (hidden_size, output_size)]
    params = []
    for (fan_in, fan_out) in dims:
        key, kw, kb = jax.random.split(key, 3)
        bound = 1.0 / (fan_in ** 0.5)
        w = jax.random.uniform(kw, (fan_in, fan_out), jnp.float32, -bound, bound)
        b = jax.random.uniform(kb, (1, fan_out), jnp.float32, -bound, bound)
        params.append((w.astype(jnp.bfloat16), b))
    return params


def reference_forward(x, params):
    """Pure-JAX reference at matching precision (bf16 dot operands, f32 accumulate)."""
    h = x
    for (w, b) in params:
        h = jnp.dot(h.astype(jnp.bfloat16), w,
                    preferred_element_type=jnp.float32) + b
        h = jnp.maximum(h, 0.0)  # ReLU after every layer, incl. fc4 (as in the spec)
    return h


if __name__ == "__main__":
    key = jax.random.PRNGKey(0)
    input_size, hidden_size, output_size = 1024, 256, 1024
    batch = 256  # two 128-row tiles so the batch grid / weight residency is exercised

    kx, kp = jax.random.split(key)
    x = jax.random.normal(kx, (batch, input_size), jnp.float32)
    params = init_params(kp, input_size, hidden_size, output_size)

    out = jax.block_until_ready(pileup_nn_forward(x, params, tb=128))

    ref = reference_forward(x, params)
    assert out.shape == (batch, output_size)
    assert jnp.allclose(out, ref, atol=1e-2, rtol=1e-2), "mismatch vs reference"

    print("KERNEL_OK")
</pallas_src>

<mosaic_0001>
module attributes {stable_mosaic.version = 11 : i64} {
  func.func @pileup_mlp_kernel(%arg0: i32, %arg1: memref<128x1024xf32, #tpu.memory_space<vmem>>, %arg2: memref<1024x256xbf16, #tpu.memory_space<vmem>>, %arg3: memref<1x256xf32, #tpu.memory_space<vmem>>, %arg4: memref<256x256xbf16, #tpu.memory_space<vmem>>, %arg5: memref<1x256xf32, #tpu.memory_space<vmem>>, %arg6: memref<256x256xbf16, #tpu.memory_space<vmem>>, %arg7: memref<1x256xf32, #tpu.memory_space<vmem>>, %arg8: memref<256x1024xbf16, #tpu.memory_space<vmem>>, %arg9: memref<1x1024xf32, #tpu.memory_space<vmem>>, %arg10: memref<128x1024xf32, #tpu.memory_space<vmem>>) attributes {dimension_semantics = [#tpu.dimension_semantics<parallel>], iteration_bounds = array<i64: 2>, scalar_prefetch = 0 : i64, scratch_operands = 0 : i64, tpu.core_type = #tpu.core_type<tc>, window_params = [{transform_indices = @transform_0, window_bounds = array<i64: 128, 1024>}, {pipeline_mode = #tpu.pipeline_mode<synchronous>, transform_indices = @transform_1, window_bounds = array<i64: 1024, 256>}, {pipeline_mode = #tpu.pipeline_mode<synchronous>, transform_indices = @transform_2, window_bounds = array<i64: 1, 256>}, {pipeline_mode = #tpu.pipeline_mode<synchronous>, transform_indices = @transform_3, window_bounds = array<i64: 256, 256>}, {pipeline_mode = #tpu.pipeline_mode<synchronous>, transform_indices = @transform_4, window_bounds = array<i64: 1, 256>}, {pipeline_mode = #tpu.pipeline_mode<synchronous>, transform_indices = @transform_5, window_bounds = array<i64: 256, 256>}, {pipeline_mode = #tpu.pipeline_mode<synchronous>, transform_indices = @transform_6, window_bounds = array<i64: 1, 256>}, {pipeline_mode = #tpu.pipeline_mode<synchronous>, transform_indices = @transform_7, window_bounds = array<i64: 256, 1024>}, {pipeline_mode = #tpu.pipeline_mode<synchronous>, transform_indices = @transform_8, window_bounds = array<i64: 1, 1024>}, {transform_indices = @transform_9, window_bounds = array<i64: 128, 1024>}]} {
    %c0 = arith.constant 0 : index
    %c0_0 = arith.constant 0 : index
    %0 = vector.load %arg1[%c0, %c0_0] : memref<128x1024xf32, #tpu.memory_space<vmem>>, vector<128x1024xf32>
    %1 = arith.truncf %0 : vector<128x1024xf32> to vector<128x1024xbf16>
    %c0_1 = arith.constant 0 : index
    %c0_2 = arith.constant 0 : index
    %2 = vector.load %arg2[%c0_1, %c0_2] : memref<1024x256xbf16, #tpu.memory_space<vmem>>, vector<1024x256xbf16>
    %cst = arith.constant dense<0.000000e+00> : vector<128x256xf32>
    %3 = tpu.matmul %1, %2, %cst {dimension_numbers = #tpu.dot_dimension_numbers<[1], [0], [0], [1], [0, 0, 1, 1], [], []>} : vector<128x1024xbf16>, vector<1024x256xbf16>, vector<128x256xf32> -> vector<128x256xf32>
    %c0_3 = arith.constant 0 : index
    %c0_4 = arith.constant 0 : index
    %4 = vector.load %arg3[%c0_3, %c0_4] : memref<1x256xf32, #tpu.memory_space<vmem>>, vector<1x256xf32>
    %5 = vector.broadcast %4 : vector<1x256xf32> to vector<128x256xf32>
    %6 = arith.addf %3, %5 : vector<128x256xf32>
    %cst_5 = arith.constant 0.000000e+00 : f32
    %7 = vector.broadcast %cst_5 : f32 to vector<128x256xf32>
    %8 = arith.maximumf %6, %7 : vector<128x256xf32>
    %9 = arith.truncf %8 : vector<128x256xf32> to vector<128x256xbf16>
    %c0_6 = arith.constant 0 : index
    %c0_7 = arith.constant 0 : index
    %10 = vector.load %arg4[%c0_6, %c0_7] : memref<256x256xbf16, #tpu.memory_space<vmem>>, vector<256x256xbf16>
    %cst_8 = arith.constant dense<0.000000e+00> : vector<128x256xf32>
    %11 = tpu.matmul %9, %10, %cst_8 {dimension_numbers = #tpu.dot_dimension_numbers<[1], [0], [0], [1], [0, 0, 1, 1], [], []>} : vector<128x256xbf16>, vector<256x256xbf16>, vector<128x256xf32> -> vector<128x256xf32>
    %c0_9 = arith.constant 0 : index
    %c0_10 = arith.constant 0 : index
    %12 = vector.load %arg5[%c0_9, %c0_10] : memref<1x256xf32, #tpu.memory_space<vmem>>, vector<1x256xf32>
    %13 = vector.broadcast %12 : vector<1x256xf32> to vector<128x256xf32>
    %14 = arith.addf %11, %13 : vector<128x256xf32>
    %cst_11 = arith.constant 0.000000e+00 : f32
    %15 = vector.broadcast %cst_11 : f32 to vector<128x256xf32>
    %16 = arith.maximumf %14, %15 : vector<128x256xf32>
    %17 = arith.truncf %16 : vector<128x256xf32> to vector<128x256xbf16>
    %c0_12 = arith.constant 0 : index
    %c0_13 = arith.constant 0 : index
    %18 = vector.load %arg6[%c0_12, %c0_13] : memref<256x256xbf16, #tpu.memory_space<vmem>>, vector<256x256xbf16>
    %cst_14 = arith.constant dense<0.000000e+00> : vector<128x256xf32>
    %19 = tpu.matmul %17, %18, %cst_14 {dimension_numbers = #tpu.dot_dimension_numbers<[1], [0], [0], [1], [0, 0, 1, 1], [], []>} : vector<128x256xbf16>, vector<256x256xbf16>, vector<128x256xf32> -> vector<128x256xf32>
    %c0_15 = arith.constant 0 : index
    %c0_16 = arith.constant 0 : index
    %20 = vector.load %arg7[%c0_15, %c0_16] : memref<1x256xf32, #tpu.memory_space<vmem>>, vector<1x256xf32>
    %21 = vector.broadcast %20 : vector<1x256xf32> to vector<128x256xf32>
    %22 = arith.addf %19, %21 : vector<128x256xf32>
    %cst_17 = arith.constant 0.000000e+00 : f32
    %23 = vector.broadcast %cst_17 : f32 to vector<128x256xf32>
    %24 = arith.maximumf %22, %23 : vector<128x256xf32>
    %25 = arith.truncf %24 : vector<128x256xf32> to vector<128x256xbf16>
    %c0_18 = arith.constant 0 : index
    %c0_19 = arith.constant 0 : index
    %26 = vector.load %arg8[%c0_18, %c0_19] : memref<256x1024xbf16, #tpu.memory_space<vmem>>, vector<256x1024xbf16>
    %cst_20 = arith.constant dense<0.000000e+00> : vector<128x1024xf32>
    %27 = tpu.matmul %25, %26, %cst_20 {dimension_numbers = #tpu.dot_dimension_numbers<[1], [0], [0], [1], [0, 0, 1, 1], [], []>} : vector<128x256xbf16>, vector<256x1024xbf16>, vector<128x1024xf32> -> vector<128x1024xf32>
    %c0_21 = arith.constant 0 : index
    %c0_22 = arith.constant 0 : index
    %28 = vector.load %arg9[%c0_21, %c0_22] : memref<1x1024xf32, #tpu.memory_space<vmem>>, vector<1x1024xf32>
    %29 = vector.broadcast %28 : vector<1x1024xf32> to vector<128x1024xf32>
    %30 = arith.addf %27, %29 : vector<128x1024xf32>
    %cst_23 = arith.constant 0.000000e+00 : f32
    %31 = vector.broadcast %cst_23 : f32 to vector<128x1024xf32>
    %32 = arith.maximumf %30, %31 : vector<128x1024xf32>
    %c0_24 = arith.constant 0 : index
    %c0_25 = arith.constant 0 : index
    %33 = vector.load %arg10[%c0_24, %c0_25] : memref<128x1024xf32, #tpu.memory_space<vmem>>, vector<128x1024xf32>
    tpu.vector_store %arg10[%c0_24, %c0_25], %32 {strides = array<i32>} : memref<128x1024xf32, #tpu.memory_space<vmem>>, vector<128x1024xf32>,
    return
  }
  func.func @transform_0(%arg0: i32) -> (i32, i32) {
    %c0_i32 = arith.constant 0 : i32
    %c0_i32_0 = arith.constant 0 : i32
    return %arg0, %c0_i32 : i32, i32
  }
  func.func @transform_1(%arg0: i32) -> (i32, i32) {
    %c0_i32 = arith.constant 0 : i32
    %c0_i32_0 = arith.constant 0 : i32
    %c0_i32_1 = arith.constant 0 : i32
    return %c0_i32, %c0_i32_0 : i32, i32
  }
  func.func @transform_2(%arg0: i32) -> (i32, i32) {
    %c0_i32 = arith.constant 0 : i32
    %c0_i32_0 = arith.constant 0 : i32
    %c0_i32_1 = arith.constant 0 : i32
    return %c0_i32, %c0_i32_0 : i32, i32
  }
  func.func @transform_3(%arg0: i32) -> (i32, i32) {
    %c0_i32 = arith.constant 0 : i32
    %c0_i32_0 = arith.constant 0 : i32
    %c0_i32_1 = arith.constant 0 : i32
    return %c0_i32, %c0_i32_0 : i32, i32
  }
  func.func @transform_4(%arg0: i32) -> (i32, i32) {
    %c0_i32 = arith.constant 0 : i32
    %c0_i32_0 = arith.constant 0 : i32
    %c0_i32_1 = arith.constant 0 : i32
    return %c0_i32, %c0_i32_0 : i32, i32
  }
  func.func @transform_5(%arg0: i32) -> (i32, i32) {
    %c0_i32 = arith.constant 0 : i32
    %c0_i32_0 = arith.constant 0 : i32
    %c0_i32_1 = arith.constant 0 : i32
    return %c0_i32, %c0_i32_0 : i32, i32
  }
  func.func @transform_6(%arg0: i32) -> (i32, i32) {
    %c0_i32 = arith.constant 0 : i32
    %c0_i32_0 = arith.constant 0 : i32
    %c0_i32_1 = arith.constant 0 : i32
    return %c0_i32, %c0_i32_0 : i32, i32
  }
  func.func @transform_7(%arg0: i32) -> (i32, i32) {
    %c0_i32 = arith.constant 0 : i32
    %c0_i32_0 = arith.constant 0 : i32
    %c0_i32_1 = arith.constant 0 : i32
    return %c0_i32, %c0_i32_0 : i32, i32
  }
  func.func @transform_8(%arg0: i32) -> (i32, i32) {
    %c0_i32 = arith.constant 0 : i32
    %c0_i32_0 = arith.constant 0 : i32
    %c0_i32_1 = arith.constant 0 : i32
    return %c0_i32, %c0_i32_0 : i32, i32
  }
  func.func @transform_9(%arg0: i32) -> (i32, i32) {
    %c0_i32 = arith.constant 0 : i32
    %c0_i32_0 = arith.constant 0 : i32
    return %arg0, %c0_i32 : i32, i32
  }
}

</mosaic_0001>

<llo_original>
// kernel: tpu_custom_call.1
$region0: #{tpu_custom_call.1}
  #allocation0 [shape = 'u32[]', space=smem, size = 0x4, offset = 0x4, fixed_abs, tag = 'smem constant byte address 0x4 - core index']
  #allocation1 [shape = 'u32[72,128]{1,0:T(1,128)}', space=vmem, size = 0x9000, scoped, tag = 'internal scratch']
  %s0 = inlined_call_operand.hbm [shape: f32[256,1024], index: 0, kind: input, shape index: {}]
  %s1 = inlined_call_operand.hbm [shape: bf16[1024,256], index: 1, kind: input, shape index: {}]
  %s2 = inlined_call_operand.hbm [shape: f32[1,256], index: 2, kind: input, shape index: {}]
  %s3 = inlined_call_operand.hbm [shape: bf16[256,256], index: 3, kind: input, shape index: {}]
  %s4 = inlined_call_operand.vmem [shape: f32[1,256], index: 4, kind: input, shape index: {}]
  %s5 = inlined_call_operand.hbm [shape: bf16[256,256], index: 5, kind: input, shape index: {}]
  %s6 = inlined_call_operand.vmem [shape: f32[1,256], index: 6, kind: input, shape index: {}]
  %s7 = inlined_call_operand.hbm [shape: bf16[256,1024], index: 7, kind: input, shape index: {}]
  %s8 = inlined_call_operand.hbm [shape: f32[1,1024], index: 8, kind: input, shape index: {}]
  %s9 = inlined_call_operand.hbm [shape: f32[256,1024], index: 9, kind: output, shape index: {}]
  %s10 = sld [smem:[#allocation0]]
  $region97: #{tpu_custom_call.1} parent=0
    _
  %s12 = ssub.s32 1, %s10
  %s13 = scalar_select 0, %s12, %s10
  $region1: #{tpu_custom_call.1} parent=0
    #allocation2 [shape = 'u8[1048576]{0}', space=vmem, size = 0x100000, scoped, tag = 'input window, operand 0']
    #allocation3 [shape = 's32[2]{0}', space=sflag, size = 0x8, scoped, tag = 'scoped memory for tpu_custom_call.1']
    #allocation4 [shape = 's32[2]{0}', space=sflag, size = 0x8, scoped, tag = 'scoped memory for tpu_custom_call.1']
    #allocation5 [shape = 'u8[524288]{0}', space=vmem, size = 0x80000, scoped, tag = 'input window, operand 1, single buffered']
    #allocation6 [shape = 's32[1]{0}', space=sflag, size = 0x4, scoped, tag = 'scoped memory for tpu_custom_call.1']
    #allocation7 [shape = 'u8[1024]{0}', space=vmem, size = 0x400, scoped, tag = 'input window, operand 2, single buffered']
    #allocation8 [shape = 'u8[131072]{0}', space=vmem, size = 0x20000, scoped, tag = 'input window, operand 3, single buffered']
    #allocation9 [shape = 's32[1]{0}', space=sflag, size = 0x4, scoped, tag = 'scoped memory for tpu_custom_call.1']
    #allocation10 [shape = 'u8[131072]{0}', space=vmem, size = 0x20000, scoped, tag = 'input window, operand 5, single buffered']
    #allocation11 [shape = 'u8[524288]{0}', space=vmem, size = 0x80000, scoped, tag = 'input window, operand 7, single buffered']
    #allocation12 [shape = 's32[1]{0}', space=sflag, size = 0x4, scoped, tag = 'scoped memory for tpu_custom_call.1']
    #allocation13 [shape = 'u8[4096]{0}', space=vmem, size = 0x1000, scoped, tag = 'input window, operand 8, single buffered']
    #allocation14 [shape = 'u8[1048576]{0}', space=vmem, size = 0x100000, scoped, tag = 'output window, operand 0']
    %14 = vsyncpa [#allocation3], 0
    %s15 = scalar_lea.sflag [#allocation3], 1
    %16 = vsyncpa %s15, 0
    %17 = vsyncpa [#allocation6], 0
    %18 = vsyncpa [#allocation9], 0
    %19 = vsyncpa [#allocation12], 0
    %20 = vsyncpa [#allocation4], 0
    %s21 = scalar_lea.sflag [#allocation4], 1
    %22 = vsyncpa %s21, 0
    loop: start=0, step=1, limit=4
    $region2: #{tpu_custom_call.1} parent=1 // loop_pre_header
      _
    $region3: #{tpu_custom_call.1} parent=1 // loop_header
      %s24 = sphi 0, %s28
      %p25 = scmp.ge.s32.totalorder %s24, 4
      %s34 = sphi 0, %s36
      %s37 = sphi 0, %s34
      %s38 = sphi 0, %s37
      %s54 = sphi 0, %s38
      %s58 = sphi 0, %s58
      %s60 = sphi 0, %s58
      %s61 = sphi 0, %s60
      %s75 = sphi 0, %s61
      %s79 = sphi 0, %s79
      %s81 = sphi 0, %s79
      %s82 = sphi 0, %s81
      %s96 = sphi 0, %s82
      %s100 = sphi 0, %s100
      %s102 = sphi 0, %s100
      %s103 = sphi 0, %s102
      %s117 = sphi 0, %s103
      %s121 = sphi 0, %s121
      %s123 = sphi 0, %s121
      %s124 = sphi 0, %s123
      %s138 = sphi 0, %s124
      %s142 = sphi 0, %s142
      %s144 = sphi 0, %s142
      %s145 = sphi 0, %s144
      %s159 = sphi 0, %s145
      %s163 = sphi 0, %s163
      %s165 = sphi 0, %s163
      %s166 = sphi 0, %s165
      %s180 = sphi 0, %s166
      %s184 = sphi 0, %s184
      %s186 = sphi 0, %s184
      %s187 = sphi 0, %s186
      %s201 = sphi 0, %s187
      %s205 = sphi 0, %s205
      %s207 = sphi 0, %s205
      %s208 = sphi 0, %s207
      %s222 = sphi 0, %s208
      %s228 = sphi 0, %s230
      %s231 = sphi 0, %s228
      %s232 = sphi 0, %s231
      %s248 = sphi 0, %s232
    $region4: #{tpu_custom_call.1} parent=1 // loop_header_branch
      %27 = sbr.rel (%p25) target = $region8
    $region5: #{tpu_custom_call.1} parent=1 // loop_body
      %s29 = ssub.s32 %s24, 1
      %s30 = ssub.s32 %s24, 2
      %s31 = sadd.s32 %s24, 1
      %s32 = ssub.s32 %s24, %s31
      %p33 = scmp.eq.s32.totalorder %s32, 0
      %s35 = sadd.s32 %s34, 1
      %s36 = scalar_select %p33, %s34, %s35
      %p39 = pneg %p33
      %p40 = scmp.eq.s32.totalorder %s24, 1
      %p41 = por %p39, %p40
      %p42 = scmp.ne.s32.totalorder %s34, %s37
      %p43 = scmp.eq.s32.totalorder %s24, 0
      %p44 = por %p42, %p43
      %p45 = scmp.ne.s32.totalorder %s34, %s37
      %p46 = scmp.eq.s32.totalorder %s29, 1
      %p47 = por %p45, %p46
      %p48 = scmp.ne.s32.totalorder %s37, %s38
      %p49 = scmp.eq.s32.totalorder %s29, 0
      %p50 = por %p48, %p49
      %p51 = scmp.ne.s32.totalorder %s37, %s38
      %p52 = scmp.eq.s32.totalorder %s30, 1
      %p53 = por %p51, %p52
      %p55 = scmp.ne.s32.totalorder %s38, %s54
      %p56 = scmp.eq.s32.totalorder %s30, 0
      %p57 = por %p55, %p56
      %s59 = sadd.s32 %s58, 1
      %p62 = scmp.eq.s32.totalorder %s24, 1
      %p63 = scmp.ne.s32.totalorder %s58, %s60
      %p64 = scmp.eq.s32.totalorder %s24, 0
      %p65 = por %p63, %p64
      %p66 = scmp.ne.s32.totalorder %s58, %s60
      %p67 = scmp.eq.s32.totalorder %s29, 1
      %p68 = por %p66, %p67
      %p69 = scmp.ne.s32.totalorder %s60, %s61
      %p70 = scmp.eq.s32.totalorder %s29, 0
      %p71 = por %p69, %p70
      %p72 = scmp.ne.s32.totalorder %s60, %s61
      %p73 = scmp.eq.s32.totalorder %s30, 1
      %p74 = por %p72, %p73
      %p76 = scmp.ne.s32.totalorder %s61, %s75
      %p77 = scmp.eq.s32.totalorder %s30, 0
      %p78 = por %p76, %p77
      %s80 = sadd.s32 %s79, 1
      %p83 = scmp.eq.s32.totalorder %s24, 1
      %p84 = scmp.ne.s32.totalorder %s79, %s81
      %p85 = scmp.eq.s32.totalorder %s24, 0
      %p86 = por %p84, %p85
      %p87 = scmp.ne.s32.totalorder %s79, %s81
      %p88 = scmp.eq.s32.totalorder %s29, 1
      %p89 = por %p87, %p88
      %p90 = scmp.ne.s32.totalorder %s81, %s82
      %p91 = scmp.eq.s32.totalorder %s29, 0
      %p92 = por %p90, %p91
      %p93 = scmp.ne.s32.totalorder %s81, %s82
      %p94 = scmp.eq.s32.totalorder %s30, 1
      %p95 = por %p93, %p94
      %p97 = scmp.ne.s32.totalorder %s82, %s96
      %p98 = scmp.eq.s32.totalorder %s30, 0
      %p99 = por %p97, %p98
      %s101 = sadd.s32 %s100, 1
      %p104 = scmp.eq.s32.totalorder %s24, 1
      %p105 = scmp.ne.s32.totalorder %s100, %s102
      %p106 = scmp.eq.s32.totalorder %s24, 0
      %p107 = por %p105, %p106
      %p108 = scmp.ne.s32.totalorder %s100, %s102
      %p109 = scmp.eq.s32.totalorder %s29, 1
      %p110 = por %p108, %p109
      %p111 = scmp.ne.s32.totalorder %s102, %s103
      %p112 = scmp.eq.s32.totalorder %s29, 0
      %p113 = por %p111, %p112
      %p114 = scmp.ne.s32.totalorder %s102, %s103
      %p115 = scmp.eq.s32.totalorder %s30, 1
      %p116 = por %p114, %p115
      %p118 = scmp.ne.s32.totalorder %s103, %s117
      %p119 = scmp.eq.s32.totalorder %s30, 0
      %p120 = por %p118, %p119
      %s122 = sadd.s32 %s121, 1
      %p125 = scmp.eq.s32.totalorder %s24, 1
      %p126 = scmp.ne.s32.totalorder %s121, %s123
      %p127 = scmp.eq.s32.totalorder %s24, 0
      %p128 = por %p126, %p127
      %p129 = scmp.ne.s32.totalorder %s121, %s123
      %p130 = scmp.eq.s32.totalorder %s29, 1
      %p131 = por %p129, %p130
      %p132 = scmp.ne.s32.totalorder %s123, %s124
      %p133 = scmp.eq.s32.totalorder %s29, 0
      %p134 = por %p132, %p133
      %p135 = scmp.ne.s32.totalorder %s123, %s124
      %p136 = scmp.eq.s32.totalorder %s30, 1
      %p137 = por %p135, %p136
      %p139 = scmp.ne.s32.totalorder %s124, %s138
      %p140 = scmp.eq.s32.totalorder %s30, 0
      %p141 = por %p139, %p140
      %s143 = sadd.s32 %s142, 1
      %p146 = scmp.eq.s32.totalorder %s24, 1
      %p147 = scmp.ne.s32.totalorder %s142, %s144
      %p148 = scmp.eq.s32.totalorder %s24, 0
      %p149 = por %p147, %p148
      %p150 = scmp.ne.s32.totalorder %s142, %s144
      %p151 = scmp.eq.s32.totalorder %s29, 1
      %p152 = por %p150, %p151
      %p153 = scmp.ne.s32.totalorder %s144, %s145
      %p154 = scmp.eq.s32.totalorder %s29, 0
      %p155 = por %p153, %p154
      %p156 = scmp.ne.s32.totalorder %s144, %s145
      %p157 = scmp.eq.s32.totalorder %s30, 1
      %p158 = por %p156, %p157
      %p160 = scmp.ne.s32.totalorder %s145, %s159
      %p161 = scmp.eq.s32.totalorder %s30, 0
      %p162 = por %p160, %p161
      %s164 = sadd.s32 %s163, 1
      %p167 = scmp.eq.s32.totalorder %s24, 1
      %p168 = scmp.ne.s32.totalorder %s163, %s165
      %p169 = scmp.eq.s32.totalorder %s24, 0
      %p170 = por %p168, %p169
      %p171 = scmp.ne.s32.totalorder %s163, %s165
      %p172 = scmp.eq.s32.totalorder %s29, 1
      %p173 = por %p171, %p172
      %p174 = scmp.ne.s32.totalorder %s165, %s166
      %p175 = scmp.eq.s32.totalorder %s29, 0
      %p176 = por %p174, %p175
      %p177 = scmp.ne.s32.totalorder %s165, %s166
      %p178 = scmp.eq.s32.totalorder %s30, 1
      %p179 = por %p177, %p178
      %p181 = scmp.ne.s32.totalorder %s166, %s180
      %p182 = scmp.eq.s32.totalorder %s30, 0
      %p183 = por %p181, %p182
      %s185 = sadd.s32 %s184, 1
      %p188 = scmp.eq.s32.totalorder %s24, 1
      %p189 = scmp.ne.s32.totalorder %s184, %s186
      %p190 = scmp.eq.s32.totalorder %s24, 0
      %p191 = por %p189, %p190
      %p192 = scmp.ne.s32.totalorder %s184, %s186
      %p193 = scmp.eq.s32.totalorder %s29, 1
      %p194 = por %p192, %p193
      %p195 = scmp.ne.s32.totalorder %s186, %s187
      %p196 = scmp.eq.s32.totalorder %s29, 0
      %p197 = por %p195, %p196
      %p198 = scmp.ne.s32.totalorder %s186, %s187
      %p199 = scmp.eq.s32.totalorder %s30, 1
      %p200 = por %p198, %p199
      %p202 = scmp.ne.s32.totalorder %s187, %s201
      %p203 = scmp.eq.s32.totalorder %s30, 0
      %p204 = por %p202, %p203
      %s206 = sadd.s32 %s205, 1
      %p209 = scmp.eq.s32.totalorder %s24, 1
      %p210 = scmp.ne.s32.totalorder %s205, %s207
      %p211 = scmp.eq.s32.totalorder %s24, 0
      %p212 = por %p210, %p211
      %p213 = scmp.ne.s32.totalorder %s205, %s207
      %p214 = scmp.eq.s32.totalorder %s29, 1
      %p215 = por %p213, %p214
      %p216 = scmp.ne.s32.totalorder %s207, %s208
      %p217 = scmp.eq.s32.totalorder %s29, 0
      %p218 = por %p216, %p217
      %p219 = scmp.ne.s32.totalorder %s207, %s208
      %p220 = scmp.eq.s32.totalorder %s30, 1
      %p221 = por %p219, %p220
      %p223 = scmp.ne.s32.totalorder %s208, %s222
      %p224 = scmp.eq.s32.totalorder %s30, 0
      %p225 = por %p223, %p224
      %s226 = ssub.s32 %s24, %s31
      %p227 = scmp.eq.s32.totalorder %s226, 0
      %s229 = sadd.s32 %s228, 1
      %s230 = scalar_select %p227, %s228, %s229
      %p233 = pneg %p227
      %p234 = scmp.eq.s32.totalorder %s24, 1
      %p235 = por %p233, %p234
      %p236 = scmp.ne.s32.totalorder %s228, %s231
      %p237 = scmp.eq.s32.totalorder %s24, 0
      %p238 = por %p236, %p237
      %p239 = scmp.ne.s32.totalorder %s228, %s231
      %p240 = scmp.eq.s32.totalorder %s29, 1
      %p241 = por %p239, %p240
      %p242 = scmp.ne.s32.totalorder %s231, %s232
      %p243 = scmp.eq.s32.totalorder %s29, 0
      %p244 = por %p242, %p243
      %p245 = scmp.ne.s32.totalorder %s231, %s232
      %p246 = scmp.eq.s32.totalorder %s30, 1
      %p247 = por %p245, %p246
      %p249 = scmp.ne.s32.totalorder %s232, %s248
      %p250 = scmp.eq.s32.totalorder %s30, 0
      %p251 = por %p249, %p250
      %p252 = scmp.le.s32.totalorder 1, %s24
      %p253 = scmp.lt.s32.totalorder %s24, 3
      %p254 = pnand %p252, %p253
      %p255 = pneg %p254
      // Predicated region
      $region9: #{tpu_custom_call.1} parent=5 // pred_check
        _
      $region10: #{tpu_custom_call.1} parent=5 // pred_check_branch
        %257 = sbr.rel (%p254) target = $region12
      $region11: #{tpu_custom_call.1} parent=5 // pred_region
        %s258 = ssub.s32 %s24, 1
        // Predicated region
        $region13: #{tpu_custom_call.1} parent=11 // pred_check
          %p259 = pneg %p71
        $region14: #{tpu_custom_call.1} parent=11 // pred_check_branch
          %261 = sbr.rel (%p259) target = $region16
        $region15: #{tpu_custom_call.1} parent=11 // pred_region
          %263 = vsyncadd [#allocation6], 0
          %s264 = sshll.u32 %s1, 4
          %s265 = int_to_ptr.hbm [resolvable:$true] %s264
          %s266 = sshll.u32 [#allocation5], 4
          %s267 = int_to_ptr.vmem [resolvable:$true] %s266
          %272 = dma.hbm_to_vmem [thread:$0]  %s265, 16384, %s267, [#allocation6], 128, 128, 8
        $region16: #{tpu_custom_call.1} parent=11 // pred_fallthru
          _
        // Predicated region
        $region17: #{tpu_custom_call.1} parent=11 // pred_check
          %p273 = pneg %p92
        $region18: #{tpu_custom_call.1} parent=11 // pred_check_branch
          %275 = sbr.rel (%p273) target = $region20
        $region19: #{tpu_custom_call.1} parent=11 // pred_region
          %277 = vsyncadd [#allocation6], 0
          %s279 = sshll.u32 %s2, 4
          %s280 = int_to_ptr.hbm [resolvable:$true] %s279
          %s281 = sshll.u32 [#allocation7], 4
          %s282 = int_to_ptr.vmem [resolvable:$true] %s281
          %284 = dma.hbm_to_vmem [thread:$0]  %s280, 32, %s282, [#allocation6]
        $region20: #{tpu_custom_call.1} parent=11 // pred_fallthru
          _
        // Predicated region
        $region21: #{tpu_custom_call.1} parent=11 // pred_check
          %p285 = pneg %p113
        $region22: #{tpu_custom_call.1} parent=11 // pred_check_branch
          %287 = sbr.rel (%p285) target = $region24
        $region23: #{tpu_custom_call.1} parent=11 // pred_region
          %289 = vsyncadd [#allocation9], 0
          %s290 = sshll.u32 %s3, 4
          %s291 = int_to_ptr.hbm [resolvable:$true] %s290
          %s292 = sshll.u32 [#allocation8], 4
          %s293 = int_to_ptr.vmem [resolvable:$true] %s292
          %298 = dma.hbm_to_vmem [thread:$0]  %s291, 4096, %s293, [#allocation9], 128, 128, 8
        $region24: #{tpu_custom_call.1} parent=11 // pred_fallthru
          _
        // Predicated region
        $region25: #{tpu_custom_call.1} parent=11 // pred_check
          %p299 = pneg %p134
        $region26: #{tpu_custom_call.1} parent=11 // pred_check_branch
          %301 = sbr.rel (%p299) target = $region28
        $region27: #{tpu_custom_call.1} parent=11 // pred_region
          _
        $region28: #{tpu_custom_call.1} parent=11 // pred_fallthru
          _
        // Predicated region
        $region29: #{tpu_custom_call.1} parent=11 // pred_check
          %p302 = pneg %p155
        $region30: #{tpu_custom_call.1} parent=11 // pred_check_branch
          %304 = sbr.rel (%p302) target = $region32
        $region31: #{tpu_custom_call.1} parent=11 // pred_region
          %306 = vsyncadd [#allocation9], 0
          %s307 = sshll.u32 %s5, 4
          %s308 = int_to_ptr.hbm [resolvable:$true] %s307
          %s309 = sshll.u32 [#allocation10], 4
          %s310 = int_to_ptr.vmem [resolvable:$true] %s309
          %315 = dma.hbm_to_vmem [thread:$0]  %s308, 4096, %s310, [#allocation9], 128, 128, 8
        $region32: #{tpu_custom_call.1} parent=11 // pred_fallthru
          _
        // Predicated region
        $region33: #{tpu_custom_call.1} parent=11 // pred_check
          %p316 = pneg %p176
        $region34: #{tpu_custom_call.1} parent=11 // pred_check_branch
          %318 = sbr.rel (%p316) target = $region36
        $region35: #{tpu_custom_call.1} parent=11 // pred_region
          _
        $region36: #{tpu_custom_call.1} parent=11 // pred_fallthru
          _
        // Predicated region
        $region37: #{tpu_custom_call.1} parent=11 // pred_check
          %p319 = pneg %p197
        $region38: #{tpu_custom_call.1} parent=11 // pred_check_branch
          %321 = sbr.rel (%p319) target = $region40
        $region39: #{tpu_custom_call.1} parent=11 // pred_region
          %323 = vsyncadd [#allocation12], 0
          %s324 = sshll.u32 %s7, 4
          %s325 = int_to_ptr.hbm [resolvable:$true] %s324
          %s326 = sshll.u32 [#allocation11], 4
          %s327 = int_to_ptr.vmem [resolvable:$true] %s326
          %332 = dma.hbm_to_vmem [thread:$0]  %s325, 16384, %s327, [#allocation12], 512, 512, 32
        $region40: #{tpu_custom_call.1} parent=11 // pred_fallthru
          _
        // Predicated region
        $region41: #{tpu_custom_call.1} parent=11 // pred_check
          %p333 = pneg %p218
        $region42: #{tpu_custom_call.1} parent=11 // pred_check_branch
          %335 = sbr.rel (%p333) target = $region44
        $region43: #{tpu_custom_call.1} parent=11 // pred_region
          %337 = vsyncadd [#allocation12], 0
          %s339 = sshll.u32 %s8, 4
          %s340 = int_to_ptr.hbm [resolvable:$true] %s339
          %s341 = sshll.u32 [#allocation13], 4
          %s342 = int_to_ptr.vmem [resolvable:$true] %s341
          %344 = dma.hbm_to_vmem [thread:$0]  %s340, 128, %s342, [#allocation12]
        $region44: #{tpu_custom_call.1} parent=11 // pred_fallthru
          _
      $region12: #{tpu_custom_call.1} parent=5 // pred_fallthru
        _
      %p345 = scmp.lt.s32.totalorder %s24, 2
      // Predicated region
      $region45: #{tpu_custom_call.1} parent=5 // pred_check
        %p346 = pneg %p345
      $region46: #{tpu_custom_call.1} parent=5 // pred_check_branch
        %348 = sbr.rel (%p346) target = $region48
      $region47: #{tpu_custom_call.1} parent=5 // pred_region
        // Predicated region
        $region49: #{tpu_custom_call.1} parent=47 // pred_check
          %p349 = pneg %p44
        $region50: #{tpu_custom_call.1} parent=47 // pred_check_branch
          %351 = sbr.rel (%p349) target = $region52
        $region51: #{tpu_custom_call.1} parent=47 // pred_region
          %s352 = sand.u32 %s34, 1
          %s353 = scalar_lea.sflag [#allocation3], %s352
          %s354 = sand.u32 %s34, 1
          %s355 = smul.addr %s354, 1024
          %s356 = scalar_lea.vmem [#allocation2], %s355
          %s357 = smul.u32 16, %s24
          %359 = vsyncadd %s353, 0
          %s360 = smul.addr %s357, 8
          %s361 = smul.addr %s360, 8
          %s362 = scalar_lea.hbm %s0, %s361
          %s363 = sshll.u32 %s362, 4
          %s364 = int_to_ptr.hbm [resolvable:$true] %s363
          %s365 = sshll.u32 %s356, 4
          %s366 = int_to_ptr.vmem [resolvable:$true] %s365
          %371 = dma.hbm_to_vmem [thread:$0]  %s364, 16384, %s366, %s353, 1024, 1024, 64
        $region52: #{tpu_custom_call.1} parent=47 // pred_fallthru
          _
      $region48: #{tpu_custom_call.1} parent=5 // pred_fallthru
        _
      %p372 = scmp.le.s32.totalorder 1, %s24
      %p373 = scmp.lt.s32.totalorder %s24, 3
      %p374 = pnand %p372, %p373
      %p375 = pneg %p374
      // Predicated region
      $region53: #{tpu_custom_call.1} parent=5 // pred_check
        _
      $region54: #{tpu_custom_call.1} parent=5 // pred_check_branch
        %377 = sbr.rel (%p374) target = $region56
      $region55: #{tpu_custom_call.1} parent=5 // pred_region
        %s378 = ssub.s32 %s24, 1
        %s379 = sand.u32 %s37, 1
        %s380 = scalar_lea.sflag [#allocation3], %s379
        %s381 = sand.u32 %s37, 1
        %s382 = smul.addr %s381, 1024
        %s383 = scalar_lea.vmem [#allocation2], %s382
        // Predicated region
        $region57: #{tpu_custom_call.1} parent=55 // pred_check
          %p384 = pneg %p50
        $region58: #{tpu_custom_call.1} parent=55 // pred_check_branch
          %386 = sbr.rel (%p384) target = $region60
        $region59: #{tpu_custom_call.1} parent=55 // pred_region
          %388 = dma.done %s380, 16384
        $region60: #{tpu_custom_call.1} parent=55 // pred_fallthru
          _
        // Predicated region
        $region61: #{tpu_custom_call.1} parent=55 // pred_check
          %p389 = pneg %p71
        $region62: #{tpu_custom_call.1} parent=55 // pred_check_branch
          %391 = sbr.rel (%p389) target = $region64
        $region63: #{tpu_custom_call.1} parent=55 // pred_region
          %393 = dma.done [#allocation6], 16384
        $region64: #{tpu_custom_call.1} parent=55 // pred_fallthru
          _
        // Predicated region
        $region65: #{tpu_custom_call.1} parent=55 // pred_check
          %p394 = pneg %p92
        $region66: #{tpu_custom_call.1} parent=55 // pred_check_branch
          %396 = sbr.rel (%p394) target = $region68
        $region67: #{tpu_custom_call.1} parent=55 // pred_region
          %398 = dma.done [#allocation6], 32
        $region68: #{tpu_custom_call.1} parent=55 // pred_fallthru
          _
        // Predicated region
        $region69: #{tpu_custom_call.1} parent=55 // pred_check
          %p399 = pneg %p113
        $region70: #{tpu_custom_call.1} parent=55 // pred_check_branch
          %401 = sbr.rel (%p399) target = $region72
        $region71: #{tpu_custom_call.1} parent=55 // pred_region
          %403 = dma.done [#allocation9], 4096
        $region72: #{tpu_custom_call.1} parent=55 // pred_fallthru
          _
        // Predicated region
        $region73: #{tpu_custom_call.1} parent=55 // pred_check
          %p404 = pneg %p155
        $region74: #{tpu_custom_call.1} parent=55 // pred_check_branch
          %406 = sbr.rel (%p404) target = $region76
        $region75: #{tpu_custom_call.1} parent=55 // pred_region
          %408 = dma.done [#allocation9], 4096
        $region76: #{tpu_custom_call.1} parent=55 // pred_fallthru
          _
        // Predicated region
        $region77: #{tpu_custom_call.1} parent=55 // pred_check
          %p409 = pneg %p197
        $region78: #{tpu_custom_call.1} parent=55 // pred_check_branch
          %411 = sbr.rel (%p409) target = $region80
        $region79: #{tpu_custom_call.1} parent=55 // pred_region
          %413 = dma.done [#allocation12], 16384
        $region80: #{tpu_custom_call.1} parent=55 // pred_fallthru
          _
        // Predicated region
        $region81: #{tpu_custom_call.1} parent=55 // pred_check
          %p414 = pneg %p218
        $region82: #{tpu_custom_call.1} parent=55 // pred_check_branch
          %416 = sbr.rel (%p414) target = $region84
        $region83: #{tpu_custom_call.1} parent=55 // pred_region
          %418 = dma.done [#allocation12], 128
        $region84: #{tpu_custom_call.1} parent=55 // pred_fallthru
          _
        %s419 = sand.u32 %s37, 1
        %s420 = scalar_lea.sflag [#allocation3], %s419
        %s421 = sand.u32 %s37, 1
        %s422 = smul.addr %s421, 1024
        %s423 = scalar_lea.vmem [#allocation2], %s422
        %p424 = pneg %p50
        %p425 = pneg %p47
        %p426 = pneg %p71
        %p427 = pneg %p68
        %p428 = pneg %p92
        %p429 = pneg %p89
        %p430 = pneg %p113
        %p431 = pneg %p110
        %p432 = pneg %p134
        %p433 = pneg %p131
        %p434 = pneg %p155
        %p435 = pneg %p152
        %p436 = pneg %p176
        %p437 = pneg %p173
        %p438 = pneg %p197
        %p439 = pneg %p194
        %p440 = pneg %p218
        %p441 = pneg %p215
        %p442 = pneg %p244
        %p443 = pneg %p241
        %s444 = sand.u32 %s231, 1
        %s445 = scalar_lea.sflag [#allocation4], %s444
        %s446 = sand.u32 %s231, 1
        %s447 = smul.addr %s446, 1024
        %s448 = scalar_lea.vmem [#allocation14], %s447
        %s449 = smul.u32 16, %s29
        %s450 = smul.u32 16, %s29
        %v451 = vld [vmem:[%s383] sm:$0xff]
        %v452 = vld [vmem:[%s383 + $0x8] sm:$0xff]
        %v453 = vld [vmem:[%s383 + $0x10] sm:$0xff]
        %v454 = vld [vmem:[%s383 + $0x18] sm:$0xff]
        %v455 = vld [vmem:[%s383 + $0x20] sm:$0xff]
        %v456 = vld [vmem:[%s383 + $0x28] sm:$0xff]
        %v457 = vld [vmem:[%s383 + $0x30] sm:$0xff]
        %v458 = vld [vmem:[%s383 + $0x38] sm:$0xff]
        %v459 = vld [vmem:[%s383 + $0x40] sm:$0xff]
        %v460 = vld [vmem:[%s383 + $0x48] sm:$0xff]
        %v461 = vld [vmem:[%s383 + $0x50] sm:$0xff]
        %v462 = vld [vmem:[%s383 + $0x58] sm:$0xff]
        %v463 = vld [vmem:[%s383 + $0x60] sm:$0xff]
        %v464 = vld [vmem:[%s383 + $0x68] sm:$0xff]
        %v465 = vld [vmem:[%s383 + $0x70] sm:$0xff]
        %v466 = vld [vmem:[%s383 + $0x78] sm:$0xff]
        %v467 = vld [vmem:[%s383 + $0x80] sm:$0xff]
        %v468 = vld [vmem:[%s383 + $0x88] sm:$0xff]
        %v469 = vld [vmem:[%s383 + $0x90] sm:$0xff]
        %v470 = vld [vmem:[%s383 + $0x98] sm:$0xff]
        %v471 = vld [vmem:[%s383 + $0xa0] sm:$0xff]
        %v472 = vld [vmem:[%s383 + $0xa8] sm:$0xff]
        %v473 = vld [vmem:[%s383 + $0xb0] sm:$0xff]
        %v474 = vld [vmem:[%s383 + $0xb8] sm:$0xff]
        %v475 = vld [vmem:[%s383 + $0xc0] sm:$0xff]
        %v476 = vld [vmem:[%s383 + $0xc8] sm:$0xff]
        %v477 = vld [vmem:[%s383 + $0xd0] sm:$0xff]
        %v478 = vld [vmem:[%s383 + $0xd8] sm:$0xff]
        %v479 = vld [vmem:[%s383 + $0xe0] sm:$0xff]
        %v480 = vld [vmem:[%s383 + $0xe8] sm:$0xff]
        %v481 = vld [vmem:[%s383 + $0xf0] sm:$0xff]
        %v482 = vld [vmem:[%s383 + $0xf8] sm:$0xff]
        %v483 = vld [vmem:[%s383 + $0x100] sm:$0xff]
        %v484 = vld [vmem:[%s383 + $0x108] sm:$0xff]
        %v485 = vld [vmem:[%s383 + $0x110] sm:$0xff]
        %v486 = vld [vmem:[%s383 + $0x118] sm:$0xff]
        %v487 = vld [vmem:[%s383 + $0x120] sm:$0xff]
        %v488 = vld [vmem:[%s383 + $0x128] sm:$0xff]
        %v489 = vld [vmem:[%s383 + $0x130] sm:$0xff]
        %v490 = vld [vmem:[%s383 + $0x138] sm:$0xff]
        %v491 = vld [vmem:[%s383 + $0x140] sm:$0xff]
        %v492 = vld [vmem:[%s383 + $0x148] sm:$0xff]
        %v493 = vld [vmem:[%s383 + $0x150] sm:$0xff]
        %v494 = vld [vmem:[%s383 + $0x158] sm:$0xff]
        %v495 = vld [vmem:[%s383 + $0x160] sm:$0xff]
        %v496 = vld [vmem:[%s383 + $0x168] sm:$0xff]
        %v497 = vld [vmem:[%s383 + $0x170] sm:$0xff]
        %v498 = vld [vmem:[%s383 + $0x178] sm:$0xff]
        %v499 = vld [vmem:[%s383 + $0x180] sm:$0xff]
        %v500 = vld [vmem:[%s383 + $0x188] sm:$0xff]
        %v501 = vld [vmem:[%s383 + $0x190] sm:$0xff]
        %v502 = vld [vmem:[%s383 + $0x198] sm:$0xff]
        %v503 = vld [vmem:[%s383 + $0x1a0] sm:$0xff]
        %v504 = vld [vmem:[%s383 + $0x1a8] sm:$0xff]
        %v505 = vld [vmem:[%s383 + $0x1b0] sm:$0xff]
        %v506 = vld [vmem:[%s383 + $0x1b8] sm:$0xff]
        %v507 = vld [vmem:[%s383 + $0x1c0] sm:$0xff]
        %v508 = vld [vmem:[%s383 + $0x1c8] sm:$0xff]
        %v509 = vld [vmem:[%s383 + $0x1d0] sm:$0xff]
        %v510 = vld [vmem:[%s383 + $0x1d8] sm:$0xff]
        %v511 = vld [vmem:[%s383 + $0x1e0] sm:$0xff]
        %v512 = vld [vmem:[%s383 + $0x1e8] sm:$0xff]
        %v513 = vld [vmem:[%s383 + $0x1f0] sm:$0xff]
        %v514 = vld [vmem:[%s383 + $0x1f8] sm:$0xff]
        %v515 = vld [vmem:[%s383 + $0x200] sm:$0xff]
        %v516 = vld [vmem:[%s383 + $0x208] sm:$0xff]
        %v517 = vld [vmem:[%s383 + $0x210] sm:$0xff]
        %v518 = vld [vmem:[%s383 + $0x218] sm:$0xff]
        %v519 = vld [vmem:[%s383 + $0x220] sm:$0xff]
        %v520 = vld [vmem:[%s383 + $0x228] sm:$0xff]
        %v521 = vld [vmem:[%s383 + $0x230] sm:$0xff]
        %v522 = vld [vmem:[%s383 + $0x238] sm:$0xff]
        %v523 = vld [vmem:[%s383 + $0x240] sm:$0xff]
        %v524 = vld [vmem:[%s383 + $0x248] sm:$0xff]
        %v525 = vld [vmem:[%s383 + $0x250] sm:$0xff]
        %v526 = vld [vmem:[%s383 + $0x258] sm:$0xff]
        %v527 = vld [vmem:[%s383 + $0x260] sm:$0xff]
        %v528 = vld [vmem:[%s383 + $0x268] sm:$0xff]
        %v529 = vld [vmem:[%s383 + $0x270] sm:$0xff]
        %v530 = vld [vmem:[%s383 + $0x278] sm:$0xff]
        %v531 = vld [vmem:[%s383 + $0x280] sm:$0xff]
        %v532 = vld [vmem:[%s383 + $0x288] sm:$0xff]
        %v533 = vld [vmem:[%s383 + $0x290] sm:$0xff]
        %v534 = vld [vmem:[%s383 + $0x298] sm:$0xff]
        %v535 = vld [vmem:[%s383 + $0x2a0] sm:$0xff]
        %v536 = vld [vmem:[%s383 + $0x2a8] sm:$0xff]
        %v537 = vld [vmem:[%s383 + $0x2b0] sm:$0xff]
        %v538 = vld [vmem:[%s383 + $0x2b8] sm:$0xff]
        %v539 = vld [vmem:[%s383 + $0x2c0] sm:$0xff]
        %v540 = vld [vmem:[%s383 + $0x2c8] sm:$0xff]
        %v541 = vld [vmem:[%s383 + $0x2d0] sm:$0xff]
        %v542 = vld [vmem:[%s383 + $0x2d8] sm:$0xff]
        %v543 = vld [vmem:[%s383 + $0x2e0] sm:$0xff]
        %v544 = vld [vmem:[%s383 + $0x2e8] sm:$0xff]
        %v545 = vld [vmem:[%s383 + $0x2f0] sm:$0xff]
        %v546 = vld [vmem:[%s383 + $0x2f8] sm:$0xff]
        %v547 = vld [vmem:[%s383 + $0x300] sm:$0xff]
        %v548 = vld [vmem:[%s383 + $0x308] sm:$0xff]
        %v549 = vld [vmem:[%s383 + $0x310] sm:$0xff]
        %v550 = vld [vmem:[%s383 + $0x318] sm:$0xff]
        %v551 = vld [vmem:[%s383 + $0x320] sm:$0xff]
        %v552 = vld [vmem:[%s383 + $0x328] sm:$0xff]
        %v553 = vld [vmem:[%s383 + $0x330] sm:$0xff]
        %v554 = vld [vmem:[%s383 + $0x338] sm:$0xff]
        %v555 = vld [vmem:[%s383 + $0x340] sm:$0xff]
        %v556 = vld [vmem:[%s383 + $0x348] sm:$0xff]
        %v557 = vld [vmem:[%s383 + $0x350] sm:$0xff]
        %v558 = vld [vmem:[%s383 + $0x358] sm:$0xff]
        %v559 = vld [vmem:[%s383 + $0x360] sm:$0xff]
        %v560 = vld [vmem:[%s383 + $0x368] sm:$0xff]
        %v561 = vld [vmem:[%s383 + $0x370] sm:$0xff]
        %v562 = vld [vmem:[%s383 + $0x378] sm:$0xff]
        %v563 = vld [vmem:[%s383 + $0x380] sm:$0xff]
        %v564 = vld [vmem:[%s383 + $0x388] sm:$0xff]
        %v565 = vld [vmem:[%s383 + $0x390] sm:$0xff]
        %v566 = vld [vmem:[%s383 + $0x398] sm:$0xff]
        %v567 = vld [vmem:[%s383 + $0x3a0] sm:$0xff]
        %v568 = vld [vmem:[%s383 + $0x3a8] sm:$0xff]
        %v569 = vld [vmem:[%s383 + $0x3b0] sm:$0xff]
        %v570 = vld [vmem:[%s383 + $0x3b8] sm:$0xff]
        %v571 = vld [vmem:[%s383 + $0x3c0] sm:$0xff]
        %v572 = vld [vmem:[%s383 + $0x3c8] sm:$0xff]
        %v573 = vld [vmem:[%s383 + $0x3d0] sm:$0xff]
        %v574 = vld [vmem:[%s383 + $0x3d8] sm:$0xff]
        %v575 = vld [vmem:[%s383 + $0x3e0] sm:$0xff]
        %v576 = vld [vmem:[%s383 + $0x3e8] sm:$0xff]
        %v577 = vld [vmem:[%s383 + $0x3f0] sm:$0xff]
        %v578 = vld [vmem:[%s383 + $0x3f8] sm:$0xff]
        %v579 = vpack.c.bf16 %v459, %v451
        %v580 = vpack.c.bf16 %v460, %v452
        %v581 = vpack.c.bf16 %v461, %v453
        %v582 = vpack.c.bf16 %v462, %v454
        %v583 = vpack.c.bf16 %v463, %v455
        %v584 = vpack.c.bf16 %v464, %v456
        %v585 = vpack.c.bf16 %v465, %v457
        %v586 = vpack.c.bf16 %v466, %v458
        %v587 = vpack.c.bf16 %v475, %v467
        %v588 = vpack.c.bf16 %v476, %v468
        %v589 = vpack.c.bf16 %v477, %v469
        %v590 = vpack.c.bf16 %v478, %v470
        %v591 = vpack.c.bf16 %v479, %v471
        %v592 = vpack.c.bf16 %v480, %v472
        %v593 = vpack.c.bf16 %v481, %v473
        %v594 = vpack.c.bf16 %v482, %v474
        %v595 = vpack.c.bf16 %v491, %v483
        %v596 = vpack.c.bf16 %v492, %v484
        %v597 = vpack.c.bf16 %v493, %v485
        %v598 = vpack.c.bf16 %v494, %v486
        %v599 = vpack.c.bf16 %v495, %v487
        %v600 = vpack.c.bf16 %v496, %v488
        %v601 = vpack.c.bf16 %v497, %v489
        %v602 = vpack.c.bf16 %v498, %v490
        %v603 = vpack.c.bf16 %v507, %v499
        %v604 = vpack.c.bf16 %v508, %v500
        %v605 = vpack.c.bf16 %v509, %v501
        %v606 = vpack.c.bf16 %v510, %v502
        %v607 = vpack.c.bf16 %v511, %v503
        %v608 = vpack.c.bf16 %v512, %v504
        %v609 = vpack.c.bf16 %v513, %v505
        %v610 = vpack.c.bf16 %v514, %v506
        %v611 = vpack.c.bf16 %v523, %v515
        %v612 = vpack.c.bf16 %v524, %v516
        %v613 = vpack.c.bf16 %v525, %v517
        %v614 = vpack.c.bf16 %v526, %v518
        %v615 = vpack.c.bf16 %v527, %v519
        %v616 = vpack.c.bf16 %v528, %v520
        %v617 = vpack.c.bf16 %v529, %v521
        %v618 = vpack.c.bf16 %v530, %v522
        %v619 = vpack.c.bf16 %v539, %v531
        %v620 = vpack.c.bf16 %v540, %v532
        %v621 = vpack.c.bf16 %v541, %v533
        %v622 = vpack.c.bf16 %v542, %v534
        %v623 = vpack.c.bf16 %v543, %v535
        %v624 = vpack.c.bf16 %v544, %v536
        %v625 = vpack.c.bf16 %v545, %v537
        %v626 = vpack.c.bf16 %v546, %v538
        %v627 = vpack.c.bf16 %v555, %v547
        %v628 = vpack.c.bf16 %v556, %v548
        %v629 = vpack.c.bf16 %v557, %v549
        %v630 = vpack.c.bf16 %v558, %v550
        %v631 = vpack.c.bf16 %v559, %v551
        %v632 = vpack.c.bf16 %v560, %v552
        %v633 = vpack.c.bf16 %v561, %v553
        %v634 = vpack.c.bf16 %v562, %v554
        %v635 = vpack.c.bf16 %v571, %v563
        %v636 = vpack.c.bf16 %v572, %v564
        %v637 = vpack.c.bf16 %v573, %v565
        %v638 = vpack.c.bf16 %v574, %v566
        %v639 = vpack.c.bf16 %v575, %v567
        %v640 = vpack.c.bf16 %v576, %v568
        %v641 = vpack.c.bf16 %v577, %v569
        %v642 = vpack.c.bf16 %v578, %v570
        %v643 = vld [vmem:[#allocation5] sm:$0xff]
        %v644 = vld [vmem:[#allocation5 + $0x8] sm:$0xff]
        %v645 = vld [vmem:[#allocation5 + $0x10] sm:$0xff]
        %v646 = vld [vmem:[#allocation5 + $0x18] sm:$0xff]
        %v647 = vld [vmem:[#allocation5 + $0x20] sm:$0xff]
        %v648 = vld [vmem:[#allocation5 + $0x28] sm:$0xff]
        %v649 = vld [vmem:[#allocation5 + $0x30] sm:$0xff]
        %v650 = vld [vmem:[#allocation5 + $0x38] sm:$0xff]
        %v651 = vld [vmem:[#allocation5 + $0x40] sm:$0xff]
        %v652 = vld [vmem:[#allocation5 + $0x48] sm:$0xff]
        %v653 = vld [vmem:[#allocation5 + $0x50] sm:$0xff]
        %v654 = vld [vmem:[#allocation5 + $0x58] sm:$0xff]
        %v655 = vld [vmem:[#allocation5 + $0x60] sm:$0xff]
        %v656 = vld [vmem:[#allocation5 + $0x68] sm:$0xff]
        %v657 = vld [vmem:[#allocation5 + $0x70] sm:$0xff]
        %v658 = vld [vmem:[#allocation5 + $0x78] sm:$0xff]
        %v659 = vld [vmem:[#allocation5 + $0x80] sm:$0xff]
        %v660 = vld [vmem:[#allocation5 + $0x88] sm:$0xff]
        %v661 = vld [vmem:[#allocation5 + $0x90] sm:$0xff]
        %v662 = vld [vmem:[#allocation5 + $0x98] sm:$0xff]
        %v663 = vld [vmem:[#allocation5 + $0xa0] sm:$0xff]
        %v664 = vld [vmem:[#allocation5 + $0xa8] sm:$0xff]
        %v665 = vld [vmem:[#allocation5 + $0xb0] sm:$0xff]
        %v666 = vld [vmem:[#allocation5 + $0xb8] sm:$0xff]
        %v667 = vld [vmem:[#allocation5 + $0xc0] sm:$0xff]
        %v668 = vld [vmem:[#allocation5 + $0xc8] sm:$0xff]
        %v669 = vld [vmem:[#allocation5 + $0xd0] sm:$0xff]
        %v670 = vld [vmem:[#allocation5 + $0xd8] sm:$0xff]
        %v671 = vld [vmem:[#allocation5 + $0xe0] sm:$0xff]
        %v672 = vld [vmem:[#allocation5 + $0xe8] sm:$0xff]
        %v673 = vld [vmem:[#allocation5 + $0xf0] sm:$0xff]
        %v674 = vld [vmem:[#allocation5 + $0xf8] sm:$0xff]
        %v675 = vld [vmem:[#allocation5 + $0x100] sm:$0xff]
        %v676 = vld [vmem:[#allocation5 + $0x108] sm:$0xff]
        %v677 = vld [vmem:[#allocation5 + $0x110] sm:$0xff]
        %v678 = vld [vmem:[#allocation5 + $0x118] sm:$0xff]
        %v679 = vld [vmem:[#allocation5 + $0x120] sm:$0xff]
        %v680 = vld [vmem:[#allocation5 + $0x128] sm:$0xff]
        %v681 = vld [vmem:[#allocation5 + $0x130] sm:$0xff]
        %v682 = vld [vmem:[#allocation5 + $0x138] sm:$0xff]
        %v683 = vld [vmem:[#allocation5 + $0x140] sm:$0xff]
        %v684 = vld [vmem:[#allocation5 + $0x148] sm:$0xff]
        %v685 = vld [vmem:[#allocation5 + $0x150] sm:$0xff]
        %v686 = vld [vmem:[#allocation5 + $0x158] sm:$0xff]
        %v687 = vld [vmem:[#allocation5 + $0x160] sm:$0xff]
        %v688 = vld [vmem:[#allocation5 + $0x168] sm:$0xff]
        %v689 = vld [vmem:[#allocation5 + $0x170] sm:$0xff]
        %v690 = vld [vmem:[#allocation5 + $0x178] sm:$0xff]
        %v691 = vld [vmem:[#allocation5 + $0x180] sm:$0xff]
        %v692 = vld [vmem:[#allocation5 + $0x188] sm:$0xff]
        %v693 = vld [vmem:[#allocation5 + $0x190] sm:$0xff]
        %v694 = vld [vmem:[#allocation5 + $0x198] sm:$0xff]
        %v695 = vld [vmem:[#allocation5 + $0x1a0] sm:$0xff]
        %v696 = vld [vmem:[#allocation5 + $0x1a8] sm:$0xff]
        %v697 = vld [vmem:[#allocation5 + $0x1b0] sm:$0xff]
        %v698 = vld [vmem:[#allocation5 + $0x1b8] sm:$0xff]
        %v699 = vld [vmem:[#allocation5 + $0x1c0] sm:$0xff]
        %v700 = vld [vmem:[#allocation5 + $0x1c8] sm:$0xff]
        %v701 = vld [vmem:[#allocation5 + $0x1d0] sm:$0xff]
        %v702 = vld [vmem:[#allocation5 + $0x1d8] sm:$0xff]
        %v703 = vld [vmem:[#allocation5 + $0x1e0] sm:$0xff]
        %v704 = vld [vmem:[#allocation5 + $0x1e8] sm:$0xff]
        %v705 = vld [vmem:[#allocation5 + $0x1f0] sm:$0xff]
        %v706 = vld [vmem:[#allocation5 + $0x1f8] sm:$0xff]
        %v707 = vld [vmem:[#allocation5 + $0x200] sm:$0xff]
        %v708 = vld [vmem:[#allocation5 + $0x208] sm:$0xff]
        %v709 = vld [vmem:[#allocation5 + $0x210] sm:$0xff]
        %v710 = vld [vmem:[#allocation5 + $0x218] sm:$0xff]
        %v711 = vld [vmem:[#allocation5 + $0x220] sm:$0xff]
        %v712 = vld [vmem:[#allocation5 + $0x228] sm:$0xff]
        %v713 = vld [vmem:[#allocation5 + $0x230] sm:$0xff]
        %v714 = vld [vmem:[#allocation5 + $0x238] sm:$0xff]
        %v715 = vld [vmem:[#allocation5 + $0x240] sm:$0xff]
        %v716 = vld [vmem:[#allocation5 + $0x248] sm:$0xff]
        %v717 = vld [vmem:[#allocation5 + $0x250] sm:$0xff]
        %v718 = vld [vmem:[#allocation5 + $0x258] sm:$0xff]
        %v719 = vld [vmem:[#allocation5 + $0x260] sm:$0xff]
        %v720 = vld [vmem:[#allocation5 + $0x268] sm:$0xff]
        %v721 = vld [vmem:[#allocation5 + $0x270] sm:$0xff]
        %v722 = vld [vmem:[#allocation5 + $0x278] sm:$0xff]
        %v723 = vld [vmem:[#allocation5 + $0x280] sm:$0xff]
        %v724 = vld [vmem:[#allocation5 + $0x288] sm:$0xff]
        %v725 = vld [vmem:[#allocation5 + $0x290] sm:$0xff]
        %v726 = vld [vmem:[#allocation5 + $0x298] sm:$0xff]
        %v727 = vld [vmem:[#allocation5 + $0x2a0] sm:$0xff]
        %v728 = vld [vmem:[#allocation5 + $0x2a8] sm:$0xff]
        %v729 = vld [vmem:[#allocation5 + $0x2b0] sm:$0xff]
        %v730 = vld [vmem:[#allocation5 + $0x2b8] sm:$0xff]
        %v731 = vld [vmem:[#allocation5 + $0x2c0] sm:$0xff]
        %v732 = vld [vmem:[#allocation5 + $0x2c8] sm:$0xff]
        %v733 = vld [vmem:[#allocation5 + $0x2d0] sm:$0xff]
        %v734 = vld [vmem:[#allocation5 + $0x2d8] sm:$0xff]
        %v735 = vld [vmem:[#allocation5 + $0x2e0] sm:$0xff]
        %v736 = vld [vmem:[#allocation5 + $0x2e8] sm:$0xff]
        %v737 = vld [vmem:[#allocation5 + $0x2f0] sm:$0xff]
        %v738 = vld [vmem:[#allocation5 + $0x2f8] sm:$0xff]
        %v739 = vld [vmem:[#allocation5 + $0x300] sm:$0xff]
        %v740 = vld [vmem:[#allocation5 + $0x308] sm:$0xff]
        %v741 = vld [vmem:[#allocation5 + $0x310] sm:$0xff]
        %v742 = vld [vmem:[#allocation5 + $0x318] sm:$0xff]
        %v743 = vld [vmem:[#allocation5 + $0x320] sm:$0xff]
        %v744 = vld [vmem:[#allocation5 + $0x328] sm:$0xff]
        %v745 = vld [vmem:[#allocation5 + $0x330] sm:$0xff]
        %v746 = vld [vmem:[#allocation5 + $0x338] sm:$0xff]
        %v747 = vld [vmem:[#allocation5 + $0x340] sm:$0xff]
        %v748 = vld [vmem:[#allocation5 + $0x348] sm:$0xff]
        %v749 = vld [vmem:[#allocation5 + $0x350] sm:$0xff]
        %v750 = vld [vmem:[#allocation5 + $0x358] sm:$0xff]
        %v751 = vld [vmem:[#allocation5 + $0x360] sm:$0xff]
        %v752 = vld [vmem:[#allocation5 + $0x368] sm:$0xff]
        %v753 = vld [vmem:[#allocation5 + $0x370] sm:$0xff]
        %v754 = vld [vmem:[#allocation5 + $0x378] sm:$0xff]
        %v755 = vld [vmem:[#allocation5 + $0x380] sm:$0xff]
        %v756 = vld [vmem:[#allocation5 + $0x388] sm:$0xff]
        %v757 = vld [vmem:[#allocation5 + $0x390] sm:$0xff]
        %v758 = vld [vmem:[#allocation5 + $0x398] sm:$0xff]
        %v759 = vld [vmem:[#allocation5 + $0x3a0] sm:$0xff]
        %v760 = vld [vmem:[#allocation5 + $0x3a8] sm:$0xff]
        %v761 = vld [vmem:[#allocation5 + $0x3b0] sm:$0xff]
        %v762 = vld [vmem:[#allocation5 + $0x3b8] sm:$0xff]
        %v763 = vld [vmem:[#allocation5 + $0x3c0] sm:$0xff]
        %v764 = vld [vmem:[#allocation5 + $0x3c8] sm:$0xff]
        %v765 = vld [vmem:[#allocation5 + $0x3d0] sm:$0xff]
        %v766 = vld [vmem:[#allocation5 + $0x3d8] sm:$0xff]
        %v767 = vld [vmem:[#allocation5 + $0x3e0] sm:$0xff]
        %v768 = vld [vmem:[#allocation5 + $0x3e8] sm:$0xff]
        %v769 = vld [vmem:[#allocation5 + $0x3f0] sm:$0xff]
        %v770 = vld [vmem:[#allocation5 + $0x3f8] sm:$0xff]
        %v771 = vld [vmem:[#allocation7] sm:$0x3]
        %v773 = vperm.slane %v771, 0
        %v774 = vperm.slane %v771, 1
        %v905 = vunpack.c.l.b16 %v643
        %v906 = vunpack.c.h.b16 %v643
        %v907 = vunpack.c.l.b16 %v644
        %v908 = vunpack.c.h.b16 %v644
        %v909 = vunpack.c.l.b16 %v645
        %v910 = vunpack.c.h.b16 %v645
        %v911 = vunpack.c.l.b16 %v646
        %v912 = vunpack.c.h.b16 %v646
        %v913 = vunpack.c.l.b16 %v647
        %v914 = vunpack.c.h.b16 %v647
        %v915 = vunpack.c.l.b16 %v648
        %v916 = vunpack.c.h.b16 %v648
        %v917 = vunpack.c.l.b16 %v649
        %v918 = vunpack.c.h.b16 %v649
        %v919 = vunpack.c.l.b16 %v650
        %v920 = vunpack.c.h.b16 %v650
        %v921 = vunpack.c.l.b16 %v651
        %v922 = vunpack.c.h.b16 %v651
        %v923 = vunpack.c.l.b16 %v652
        %v924 = vunpack.c.h.b16 %v652
        %v925 = vunpack.c.l.b16 %v653
        %v926 = vunpack.c.h.b16 %v653
        %v927 = vunpack.c.l.b16 %v654
        %v928 = vunpack.c.h.b16 %v654
        %v929 = vunpack.c.l.b16 %v655
        %v930 = vunpack.c.h.b16 %v655
        %v931 = vunpack.c.l.b16 %v656
        %v932 = vunpack.c.h.b16 %v656
        %v933 = vunpack.c.l.b16 %v657
        %v934 = vunpack.c.h.b16 %v657
        %v935 = vunpack.c.l.b16 %v658
        %v936 = vunpack.c.h.b16 %v658
        %v937 = vunpack.c.l.b16 %v659
        %v938 = vunpack.c.h.b16 %v659
        %v939 = vunpack.c.l.b16 %v660
        %v940 = vunpack.c.h.b16 %v660
        %v941 = vunpack.c.l.b16 %v661
        %v942 = vunpack.c.h.b16 %v661
        %v943 = vunpack.c.l.b16 %v662
        %v944 = vunpack.c.h.b16 %v662
        %v945 = vunpack.c.l.b16 %v663
        %v946 = vunpack.c.h.b16 %v663
        %v947 = vunpack.c.l.b16 %v664
        %v948 = vunpack.c.h.b16 %v664
        %v949 = vunpack.c.l.b16 %v665
        %v950 = vunpack.c.h.b16 %v665
        %v951 = vunpack.c.l.b16 %v666
        %v952 = vunpack.c.h.b16 %v666
        %v953 = vunpack.c.l.b16 %v667
        %v954 = vunpack.c.h.b16 %v667
        %v955 = vunpack.c.l.b16 %v668
        %v956 = vunpack.c.h.b16 %v668
        %v957 = vunpack.c.l.b16 %v669
        %v958 = vunpack.c.h.b16 %v669
        %v959 = vunpack.c.l.b16 %v670
        %v960 = vunpack.c.h.b16 %v670
        %v961 = vunpack.c.l.b16 %v671
        %v962 = vunpack.c.h.b16 %v671
        %v963 = vunpack.c.l.b16 %v672
        %v964 = vunpack.c.h.b16 %v672
        %v965 = vunpack.c.l.b16 %v673
        %v966 = vunpack.c.h.b16 %v673
        %v967 = vunpack.c.l.b16 %v674
        %v968 = vunpack.c.h.b16 %v674
        %v969 = vunpack.c.l.b16 %v675
        %v970 = vunpack.c.h.b16 %v675
        %v971 = vunpack.c.l.b16 %v676
        %v972 = vunpack.c.h.b16 %v676
        %v973 = vunpack.c.l.b16 %v677
        %v974 = vunpack.c.h.b16 %v677
        %v975 = vunpack.c.l.b16 %v678
        %v976 = vunpack.c.h.b16 %v678
        %v977 = vunpack.c.l.b16 %v679
        %v978 = vunpack.c.h.b16 %v679
        %v979 = vunpack.c.l.b16 %v680
        %v980 = vunpack.c.h.b16 %v680
        %v981 = vunpack.c.l.b16 %v681
        %v982 = vunpack.c.h.b16 %v681
        %v983 = vunpack.c.l.b16 %v682
        %v984 = vunpack.c.h.b16 %v682
        %v985 = vunpack.c.l.b16 %v683
        %v986 = vunpack.c.h.b16 %v683
        %v987 = vunpack.c.l.b16 %v684
        %v988 = vunpack.c.h.b16 %v684
        %v989 = vunpack.c.l.b16 %v685
        %v990 = vunpack.c.h.b16 %v685
        %v991 = vunpack.c.l.b16 %v686
        %v992 = vunpack.c.h.b16 %v686
        %v993 = vunpack.c.l.b16 %v687
        %v994 = vunpack.c.h.b16 %v687
        %v995 = vunpack.c.l.b16 %v688
        %v996 = vunpack.c.h.b16 %v688
        %v997 = vunpack.c.l.b16 %v689
        %v998 = vunpack.c.h.b16 %v689
        %v999 = vunpack.c.l.b16 %v690
        %v1000 = vunpack.c.h.b16 %v690
        %v1001 = vunpack.c.l.b16 %v691
        %v1002 = vunpack.c.h.b16 %v691
        %v1003 = vunpack.c.l.b16 %v692
        %v1004 = vunpack.c.h.b16 %v692
        %v1005 = vunpack.c.l.b16 %v693
        %v1006 = vunpack.c.h.b16 %v693
        %v1007 = vunpack.c.l.b16 %v694
        %v1008 = vunpack.c.h.b16 %v694
        %v1009 = vunpack.c.l.b16 %v695
        %v1010 = vunpack.c.h.b16 %v695
        %v1011 = vunpack.c.l.b16 %v696
        %v1012 = vunpack.c.h.b16 %v696
        %v1013 = vunpack.c.l.b16 %v697
        %v1014 = vunpack.c.h.b16 %v697
        %v1015 = vunpack.c.l.b16 %v698
        %v1016 = vunpack.c.h.b16 %v698
        %v1017 = vunpack.c.l.b16 %v699
        %v1018 = vunpack.c.h.b16 %v699
        %v1019 = vunpack.c.l.b16 %v700
        %v1020 = vunpack.c.h.b16 %v700
        %v1021 = vunpack.c.l.b16 %v701
        %v1022 = vunpack.c.h.b16 %v701
        %v1023 = vunpack.c.l.b16 %v702
        %v1024 = vunpack.c.h.b16 %v702
        %v1025 = vunpack.c.l.b16 %v703
        %v1026 = vunpack.c.h.b16 %v703
        %v1027 = vunpack.c.l.b16 %v704
        %v1028 = vunpack.c.h.b16 %v704
        %v1029 = vunpack.c.l.b16 %v705
        %v1030 = vunpack.c.h.b16 %v705
        %v1031 = vunpack.c.l.b16 %v706
        %v1032 = vunpack.c.h.b16 %v706
        %v1033 = vunpack.c.l.b16 %v707
        %v1034 = vunpack.c.h.b16 %v707
        %v1035 = vunpack.c.l.b16 %v708
        %v1036 = vunpack.c.h.b16 %v708
        %v1037 = vunpack.c.l.b16 %v709
        %v1038 = vunpack.c.h.b16 %v709
        %v1039 = vunpack.c.l.b16 %v710
        %v1040 = vunpack.c.h.b16 %v710
        %v1041 = vunpack.c.l.b16 %v711
        %v1042 = vunpack.c.h.b16 %v711
        %v1043 = vunpack.c.l.b16 %v712
        %v1044 = vunpack.c.h.b16 %v712
        %v1045 = vunpack.c.l.b16 %v713
        %v1046 = vunpack.c.h.b16 %v713
        %v1047 = vunpack.c.l.b16 %v714
        %v1048 = vunpack.c.h.b16 %v714
        %v1049 = vunpack.c.l.b16 %v715
        %v1050 = vunpack.c.h.b16 %v715
        %v1051 = vunpack.c.l.b16 %v716
        %v1052 = vunpack.c.h.b16 %v716
        %v1053 = vunpack.c.l.b16 %v717
        %v1054 = vunpack.c.h.b16 %v717
        %v1055 = vunpack.c.l.b16 %v718
        %v1056 = vunpack.c.h.b16 %v718
        %v1057 = vunpack.c.l.b16 %v719
        %v1058 = vunpack.c.h.b16 %v719
        %v1059 = vunpack.c.l.b16 %v720
        %v1060 = vunpack.c.h.b16 %v720
        %v1061 = vunpack.c.l.b16 %v721
        %v1062 = vunpack.c.h.b16 %v721
        %v1063 = vunpack.c.l.b16 %v722
        %v1064 = vunpack.c.h.b16 %v722
        %v1065 = vunpack.c.l.b16 %v723
        %v1066 = vunpack.c.h.b16 %v723
        %v1067 = vunpack.c.l.b16 %v724
        %v1068 = vunpack.c.h.b16 %v724
        %v1069 = vunpack.c.l.b16 %v725
        %v1070 = vunpack.c.h.b16 %v725
        %v1071 = vunpack.c.l.b16 %v726
        %v1072 = vunpack.c.h.b16 %v726
        %v1073 = vunpack.c.l.b16 %v727
        %v1074 = vunpack.c.h.b16 %v727
        %v1075 = vunpack.c.l.b16 %v728
        %v1076 = vunpack.c.h.b16 %v728
        %v1077 = vunpack.c.l.b16 %v729
        %v1078 = vunpack.c.h.b16 %v729
        %v1079 = vunpack.c.l.b16 %v730
        %v1080 = vunpack.c.h.b16 %v730
        %v1081 = vunpack.c.l.b16 %v731
        %v1082 = vunpack.c.h.b16 %v731
        %v1083 = vunpack.c.l.b16 %v732
        %v1084 = vunpack.c.h.b16 %v732
        %v1085 = vunpack.c.l.b16 %v733
        %v1086 = vunpack.c.h.b16 %v733
        %v1087 = vunpack.c.l.b16 %v734
        %v1088 = vunpack.c.h.b16 %v734
        %v1089 = vunpack.c.l.b16 %v735
        %v1090 = vunpack.c.h.b16 %v735
        %v1091 = vunpack.c.l.b16 %v736
        %v1092 = vunpack.c.h.b16 %v736
        %v1093 = vunpack.c.l.b16 %v737
        %v1094 = vunpack.c.h.b16 %v737
        %v1095 = vunpack.c.l.b16 %v738
        %v1096 = vunpack.c.h.b16 %v738
        %v1097 = vunpack.c.l.b16 %v739
        %v1098 = vunpack.c.h.b16 %v739
        %v1099 = vunpack.c.l.b16 %v740
        %v1100 = vunpack.c.h.b16 %v740
        %v1101 = vunpack.c.l.b16 %v741
        %v1102 = vunpack.c.h.b16 %v741
        %v1103 = vunpack.c.l.b16 %v742
        %v1104 = vunpack.c.h.b16 %v742
        %v1105 = vunpack.c.l.b16 %v743
        %v1106 = vunpack.c.h.b16 %v743
        %v1107 = vunpack.c.l.b16 %v744
        %v1108 = vunpack.c.h.b16 %v744
        %v1109 = vunpack.c.l.b16 %v745
        %v1110 = vunpack.c.h.b16 %v745
        %v1111 = vunpack.c.l.b16 %v746
        %v1112 = vunpack.c.h.b16 %v746
        %v1113 = vunpack.c.l.b16 %v747
        %v1114 = vunpack.c.h.b16 %v747
        %v1115 = vunpack.c.l.b16 %v748
        %v1116 = vunpack.c.h.b16 %v748
        %v1117 = vunpack.c.l.b16 %v749
        %v1118 = vunpack.c.h.b16 %v749
        %v1119 = vunpack.c.l.b16 %v750
        %v1120 = vunpack.c.h.b16 %v750
        %v1121 = vunpack.c.l.b16 %v751
        %v1122 = vunpack.c.h.b16 %v751
        %v1123 = vunpack.c.l.b16 %v752
        %v1124 = vunpack.c.h.b16 %v752
        %v1125 = vunpack.c.l.b16 %v753
        %v1126 = vunpack.c.h.b16 %v753
        %v1127 = vunpack.c.l.b16 %v754
        %v1128 = vunpack.c.h.b16 %v754
        %v1129 = vunpack.c.l.b16 %v755
        %v1130 = vunpack.c.h.b16 %v755
        %v1131 = vunpack.c.l.b16 %v756
        %v1132 = vunpack.c.h.b16 %v756
        %v1133 = vunpack.c.l.b16 %v757
        %v1134 = vunpack.c.h.b16 %v757
        %v1135 = vunpack.c.l.b16 %v758
        %v1136 = vunpack.c.h.b16 %v758
        %v1137 = vunpack.c.l.b16 %v759
        %v1138 = vunpack.c.h.b16 %v759
        %v1139 = vunpack.c.l.b16 %v760
        %v1140 = vunpack.c.h.b16 %v760
        %v1141 = vunpack.c.l.b16 %v761
        %v1142 = vunpack.c.h.b16 %v761
        %v1143 = vunpack.c.l.b16 %v762
        %v1144 = vunpack.c.h.b16 %v762
        %v1145 = vunpack.c.l.b16 %v763
        %v1146 = vunpack.c.h.b16 %v763
        %v1147 = vunpack.c.l.b16 %v764
        %v1148 = vunpack.c.h.b16 %v764
        %v1149 = vunpack.c.l.b16 %v765
        %v1150 = vunpack.c.h.b16 %v765
        %v1151 = vunpack.c.l.b16 %v766
        %v1152 = vunpack.c.h.b16 %v766
        %v1153 = vunpack.c.l.b16 %v767
        %v1154 = vunpack.c.h.b16 %v767
        %v1155 = vunpack.c.l.b16 %v768
        %v1156 = vunpack.c.h.b16 %v768
        %v1157 = vunpack.c.l.b16 %v769
        %v1158 = vunpack.c.h.b16 %v769
        %v1159 = vunpack.c.l.b16 %v770
        %v1160 = vunpack.c.h.b16 %v770
        %v1161 = vpack.c.b16 %v907, %v905
        %v1162 = vpack.c.b16 %v908, %v906
        %v1163 = vpack.c.b16 %v911, %v909
        %v1164 = vpack.c.b16 %v912, %v910
        %v1165 = vpack.c.b16 %v915, %v913
        %v1166 = vpack.c.b16 %v916, %v914
        %v1167 = vpack.c.b16 %v919, %v917
        %v1168 = vpack.c.b16 %v920, %v918
        %v1169 = vpack.c.b16 %v923, %v921
        %v1170 = vpack.c.b16 %v924, %v922
        %v1171 = vpack.c.b16 %v927, %v925
        %v1172 = vpack.c.b16 %v928, %v926
        %v1173 = vpack.c.b16 %v931, %v929
        %v1174 = vpack.c.b16 %v932, %v930
        %v1175 = vpack.c.b16 %v935, %v933
        %v1176 = vpack.c.b16 %v936, %v934
        %v1177 = vpack.c.b16 %v939, %v937
        %v1178 = vpack.c.b16 %v940, %v938
        %v1179 = vpack.c.b16 %v943, %v941
        %v1180 = vpack.c.b16 %v944, %v942
        %v1181 = vpack.c.b16 %v947, %v945
        %v1182 = vpack.c.b16 %v948, %v946
        %v1183 = vpack.c.b16 %v951, %v949
        %v1184 = vpack.c.b16 %v952, %v950
        %v1185 = vpack.c.b16 %v955, %v953
        %v1186 = vpack.c.b16 %v956, %v954
        %v1187 = vpack.c.b16 %v959, %v957
        %v1188 = vpack.c.b16 %v960, %v958
        %v1189 = vpack.c.b16 %v963, %v961
        %v1190 = vpack.c.b16 %v964, %v962
        %v1191 = vpack.c.b16 %v967, %v965
        %v1192 = vpack.c.b16 %v968, %v966
        %v1193 = vpack.c.b16 %v971, %v969
        %v1194 = vpack.c.b16 %v972, %v970
        %v1195 = vpack.c.b16 %v975, %v973
        %v1196 = vpack.c.b16 %v976, %v974
        %v1197 = vpack.c.b16 %v979, %v977
        %v1198 = vpack.c.b16 %v980, %v978
        %v1199 = vpack.c.b16 %v983, %v981
        %v1200 = vpack.c.b16 %v984, %v982
        %v1201 = vpack.c.b16 %v987, %v985
        %v1202 = vpack.c.b16 %v988, %v986
        %v1203 = vpack.c.b16 %v991, %v989
        %v1204 = vpack.c.b16 %v992, %v990
        %v1205 = vpack.c.b16 %v995, %v993
        %v1206 = vpack.c.b16 %v996, %v994
        %v1207 = vpack.c.b16 %v999, %v997
        %v1208 = vpack.c.b16 %v1000, %v998
        %v1209 = vpack.c.b16 %v1003, %v1001
        %v1210 = vpack.c.b16 %v1004, %v1002
        %v1211 = vpack.c.b16 %v1007, %v1005
        %v1212 = vpack.c.b16 %v1008, %v1006
        %v1213 = vpack.c.b16 %v1011, %v1009
        %v1214 = vpack.c.b16 %v1012, %v1010
        %v1215 = vpack.c.b16 %v1015, %v1013
        %v1216 = vpack.c.b16 %v1016, %v1014
        %v1217 = vpack.c.b16 %v1019, %v1017
        %v1218 = vpack.c.b16 %v1020, %v1018
        %v1219 = vpack.c.b16 %v1023, %v1021
        %v1220 = vpack.c.b16 %v1024, %v1022
        %v1221 = vpack.c.b16 %v1027, %v1025
        %v1222 = vpack.c.b16 %v1028, %v1026
        %v1223 = vpack.c.b16 %v1031, %v1029
        %v1224 = vpack.c.b16 %v1032, %v1030
        %v1225 = vpack.c.b16 %v1035, %v1033
        %v1226 = vpack.c.b16 %v1036, %v1034
        %v1227 = vpack.c.b16 %v1039, %v1037
        %v1228 = vpack.c.b16 %v1040, %v1038
        %v1229 = vpack.c.b16 %v1043, %v1041
        %v1230 = vpack.c.b16 %v1044, %v1042
        %v1231 = vpack.c.b16 %v1047, %v1045
        %v1232 = vpack.c.b16 %v1048, %v1046
        %v1233 = vpack.c.b16 %v1051, %v1049
        %v1234 = vpack.c.b16 %v1052, %v1050
        %v1235 = vpack.c.b16 %v1055, %v1053
        %v1236 = vpack.c.b16 %v1056, %v1054
        %v1237 = vpack.c.b16 %v1059, %v1057
        %v1238 = vpack.c.b16 %v1060, %v1058
        %v1239 = vpack.c.b16 %v1063, %v1061
        %v1240 = vpack.c.b16 %v1064, %v1062
        %v1241 = vpack.c.b16 %v1067, %v1065
        %v1242 = vpack.c.b16 %v1068, %v1066
        %v1243 = vpack.c.b16 %v1071, %v1069
        %v1244 = vpack.c.b16 %v1072, %v1070
        %v1245 = vpack.c.b16 %v1075, %v1073
        %v1246 = vpack.c.b16 %v1076, %v1074
        %v1247 = vpack.c.b16 %v1079, %v1077
        %v1248 = vpack.c.b16 %v1080, %v1078
        %v1249 = vpack.c.b16 %v1083, %v1081
        %v1250 = vpack.c.b16 %v1084, %v1082
        %v1251 = vpack.c.b16 %v1087, %v1085
        %v1252 = vpack.c.b16 %v1088, %v1086
        %v1253 = vpack.c.b16 %v1091, %v1089
        %v1254 = vpack.c.b16 %v1092, %v1090
        %v1255 = vpack.c.b16 %v1095, %v1093
        %v1256 = vpack.c.b16 %v1096, %v1094
        %v1257 = vpack.c.b16 %v1099, %v1097
        %v1258 = vpack.c.b16 %v1100, %v1098
        %v1259 = vpack.c.b16 %v1103, %v1101
        %v1260 = vpack.c.b16 %v1104, %v1102
        %v1261 = vpack.c.b16 %v1107, %v1105
        %v1262 = vpack.c.b16 %v1108, %v1106
        %v1263 = vpack.c.b16 %v1111, %v1109
        %v1264 = vpack.c.b16 %v1112, %v1110
        %v1265 = vpack.c.b16 %v1115, %v1113
        %v1266 = vpack.c.b16 %v1116, %v1114
        %v1267 = vpack.c.b16 %v1119, %v1117
        %v1268 = vpack.c.b16 %v1120, %v1118
        %v1269 = vpack.c.b16 %v1123, %v1121
        %v1270 = vpack.c.b16 %v1124, %v1122
        %v1271 = vpack.c.b16 %v1127, %v1125
        %v1272 = vpack.c.b16 %v1128, %v1126
        %v1273 = vpack.c.b16 %v1131, %v1129
        %v1274 = vpack.c.b16 %v1132, %v1130
        %v1275 = vpack.c.b16 %v1135, %v1133
        %v1276 = vpack.c.b16 %v1136, %v1134
        %v1277 = vpack.c.b16 %v1139, %v1137
        %v1278 = vpack.c.b16 %v1140, %v1138
        %v1279 = vpack.c.b16 %v1143, %v1141
        %v1280 = vpack.c.b16 %v1144, %v1142
        %v1281 = vpack.c.b16 %v1147, %v1145
        %v1282 = vpack.c.b16 %v1148, %v1146
        %v1283 = vpack.c.b16 %v1151, %v1149
        %v1284 = vpack.c.b16 %v1152, %v1150
        %v1285 = vpack.c.b16 %v1155, %v1153
        %v1286 = vpack.c.b16 %v1156, %v1154
        %v1287 = vpack.c.b16 %v1159, %v1157
        %v1288 = vpack.c.b16 %v1160, %v1158
        %1417 = vmatpush.bf16.msra.mxu0 %v1175
        %1418 = vmatpush.bf16.msra.mxu0 %v1173
        %1419 = vmatpush.bf16.msra.mxu0 %v1171
        %1420 = vmatpush.bf16.msra.mxu0 %v1169
        %1421 = vmatpush.bf16.msra.mxu0 %v1167
        %1422 = vmatpush.bf16.msra.mxu0 %v1165
        %1423 = vmatpush.bf16.msra.mxu0 %v1163
        %1424 = vmatpush.bf16.msra.mxu0 %v1161
        %1425 = vmatmul.bf16.gmra.mxu0 %v579
        %v1426 = vpop.f32.mrf.mxu0
        %v1427 = vadd.f32 %v773, %v1426
        %v1428 = vpop.f32.mrf.mxu0
        %v1429 = vadd.f32 %v773, %v1428
        %1430 = vmatmul.bf16.gmra.mxu0 %v587
        %v1431 = vpop.f32.mrf.mxu0
        %v1432 = vadd.f32 %v773, %v1431
        %v1433 = vpop.f32.mrf.mxu0
        %v1434 = vadd.f32 %v773, %v1433
        %1435 = vmatmul.bf16.gmra.mxu0 %v595
        %v1436 = vpop.f32.mrf.mxu0
        %v1437 = vadd.f32 %v773, %v1436
        %v1438 = vpop.f32.mrf.mxu0
        %v1439 = vadd.f32 %v773, %v1438
        %1440 = vmatmul.bf16.gmra.mxu0 %v603
        %v1441 = vpop.f32.mrf.mxu0
        %v1442 = vadd.f32 %v773, %v1441
        %v1443 = vpop.f32.mrf.mxu0
        %v1444 = vadd.f32 %v773, %v1443
        %1445 = vmatmul.bf16.gmra.mxu0 %v611
        %v1446 = vpop.f32.mrf.mxu0
        %v1447 = vadd.f32 %v773, %v1446
        %v1448 = vpop.f32.mrf.mxu0
        %v1449 = vadd.f32 %v773, %v1448
        %1450 = vmatmul.bf16.gmra.mxu0 %v619
        %v1451 = vpop.f32.mrf.mxu0
        %v1452 = vadd.f32 %v773, %v1451
        %v1453 = vpop.f32.mrf.mxu0
        %v1454 = vadd.f32 %v773, %v1453
        %1455 = vmatmul.bf16.gmra.mxu0 %v627
        %v1456 = vpop.f32.mrf.mxu0
        %v1457 = vadd.f32 %v773, %v1456
        %v1458 = vpop.f32.mrf.mxu0
        %v1459 = vadd.f32 %v773, %v1458
        %1460 = vmatmul.bf16.gmra.mxu0 %v635
        %v1461 = vpop.f32.mrf.mxu0
        %v1462 = vadd.f32 %v773, %v1461
        %v1463 = vpop.f32.mrf.mxu0
        %v1464 = vadd.f32 %v773, %v1463
        %1465 = vdwg.mxu0
        %1466 = vmatpush.bf16.msra.mxu0 %v1191
        %1467 = vmatpush.bf16.msra.mxu0 %v1189
        %1468 = vmatpush.bf16.msra.mxu0 %v1187
        %1469 = vmatpush.bf16.msra.mxu0 %v1185
        %1470 = vmatpush.bf16.msra.mxu0 %v1183
        %1471 = vmatpush.bf16.msra.mxu0 %v1181
        %1472 = vmatpush.bf16.msra.mxu0 %v1179
        %1473 = vmatpush.bf16.msra.mxu0 %v1177
        %1474 = vmatmul.bf16.gmra.mxu0 %v580
        %v1475 = vpop.f32.mrf.mxu0
        %v1476 = vadd.f32 %v1427, %v1475
        %v1477 = vpop.f32.mrf.mxu0
        %v1478 = vadd.f32 %v1429, %v1477
        %1479 = vmatmul.bf16.gmra.mxu0 %v588
        %v1480 = vpop.f32.mrf.mxu0
        %v1481 = vadd.f32 %v1432, %v1480
        %v1482 = vpop.f32.mrf.mxu0
        %v1483 = vadd.f32 %v1434, %v1482
        %1484 = vmatmul.bf16.gmra.mxu0 %v596
        %v1485 = vpop.f32.mrf.mxu0
        %v1486 = vadd.f32 %v1437, %v1485
        %v1487 = vpop.f32.mrf.mxu0
        %v1488 = vadd.f32 %v1439, %v1487
        %1489 = vmatmul.bf16.gmra.mxu0 %v604
        %v1490 = vpop.f32.mrf.mxu0
        %v1491 = vadd.f32 %v1442, %v1490
        %v1492 = vpop.f32.mrf.mxu0
        %v1493 = vadd.f32 %v1444, %v1492
        %1494 = vmatmul.bf16.gmra.mxu0 %v612
        %v1495 = vpop.f32.mrf.mxu0
        %v1496 = vadd.f32 %v1447, %v1495
        %v1497 = vpop.f32.mrf.mxu0
        %v1498 = vadd.f32 %v1449, %v1497
        %1499 = vmatmul.bf16.gmra.mxu0 %v620
        %v1500 = vpop.f32.mrf.mxu0
        %v1501 = vadd.f32 %v1452, %v1500
        %v1502 = vpop.f32.mrf.mxu0
        %v1503 = vadd.f32 %v1454, %v1502
        %1504 = vmatmul.bf16.gmra.mxu0 %v628
        %v1505 = vpop.f32.mrf.mxu0
        %v1506 = vadd.f32 %v1457, %v1505
        %v1507 = vpop.f32.mrf.mxu0
        %v1508 = vadd.f32 %v1459, %v1507
        %1509 = vmatmul.bf16.gmra.mxu0 %v636
        %v1510 = vpop.f32.mrf.mxu0
        %v1511 = vadd.f32 %v1462, %v1510
        %v1512 = vpop.f32.mrf.mxu0
        %v1513 = vadd.f32 %v1464, %v1512
        %1514 = vdwg.mxu0
        %1515 = vmatpush.bf16.msra.mxu0 %v1207
        %1516 = vmatpush.bf16.msra.mxu0 %v1205
        %1517 = vmatpush.bf16.msra.mxu0 %v1203
        %1518 = vmatpush.bf16.msra.mxu0 %v1201
        %1519 = vmatpush.bf16.msra.mxu0 %v1199
        %1520 = vmatpush.bf16.msra.mxu0 %v1197
        %1521 = vmatpush.bf16.msra.mxu0 %v1195
        %1522 = vmatpush.bf16.msra.mxu0 %v1193
        %1523 = vmatmul.bf16.gmra.mxu0 %v581
        %v1524 = vpop.f32.mrf.mxu0
        %v1525 = vadd.f32 %v1476, %v1524
        %v1526 = vpop.f32.mrf.mxu0
        %v1527 = vadd.f32 %v1478, %v1526
        %1528 = vmatmul.bf16.gmra.mxu0 %v589
        %v1529 = vpop.f32.mrf.mxu0
        %v1530 = vadd.f32 %v1481, %v1529
        %v1531 = vpop.f32.mrf.mxu0
        %v1532 = vadd.f32 %v1483, %v1531
        %1533 = vmatmul.bf16.gmra.mxu0 %v597
        %v1534 = vpop.f32.mrf.mxu0
        %v1535 = vadd.f32 %v1486, %v1534
        %v1536 = vpop.f32.mrf.mxu0
        %v1537 = vadd.f32 %v1488, %v1536
        %1538 = vmatmul.bf16.gmra.mxu0 %v605
        %v1539 = vpop.f32.mrf.mxu0
        %v1540 = vadd.f32 %v1491, %v1539
        %v1541 = vpop.f32.mrf.mxu0
        %v1542 = vadd.f32 %v1493, %v1541
        %1543 = vmatmul.bf16.gmra.mxu0 %v613
        %v1544 = vpop.f32.mrf.mxu0
        %v1545 = vadd.f32 %v1496, %v1544
        %v1546 = vpop.f32.mrf.mxu0
        %v1547 = vadd.f32 %v1498, %v1546
        %1548 = vmatmul.bf16.gmra.mxu0 %v621
        %v1549 = vpop.f32.mrf.mxu0
        %v1550 = vadd.f32 %v1501, %v1549
        %v1551 = vpop.f32.mrf.mxu0
        %v1552 = vadd.f32 %v1503, %v1551
        %1553 = vmatmul.bf16.gmra.mxu0 %v629
        %v1554 = vpop.f32.mrf.mxu0
        %v1555 = vadd.f32 %v1506, %v1554
        %v1556 = vpop.f32.mrf.mxu0
        %v1557 = vadd.f32 %v1508, %v1556
        %1558 = vmatmul.bf16.gmra.mxu0 %v637
        %v1559 = vpop.f32.mrf.mxu0
        %v1560 = vadd.f32 %v1511, %v1559
        %v1561 = vpop.f32.mrf.mxu0
        %v1562 = vadd.f32 %v1513, %v1561
        %1563 = vdwg.mxu0
        %1564 = vmatpush.bf16.msra.mxu0 %v1223
        %1565 = vmatpush.bf16.msra.mxu0 %v1221
        %1566 = vmatpush.bf16.msra.mxu0 %v1219
        %1567 = vmatpush.bf16.msra.mxu0 %v1217
        %1568 = vmatpush.bf16.msra.mxu0 %v1215
        %1569 = vmatpush.bf16.msra.mxu0 %v1213
        %1570 = vmatpush.bf16.msra.mxu0 %v1211
        %1571 = vmatpush.bf16.msra.mxu0 %v1209
        %1572 = vmatmul.bf16.gmra.mxu0 %v582
        %v1573 = vpop.f32.mrf.mxu0
        %v1574 = vadd.f32 %v1525, %v1573
        %v1575 = vpop.f32.mrf.mxu0
        %v1576 = vadd.f32 %v1527, %v1575
        %1577 = vmatmul.bf16.gmra.mxu0 %v590
        %v1578 = vpop.f32.mrf.mxu0
        %v1579 = vadd.f32 %v1530, %v1578
        %v1580 = vpop.f32.mrf.mxu0
        %v1581 = vadd.f32 %v1532, %v1580
        %1582 = vmatmul.bf16.gmra.mxu0 %v598
        %v1583 = vpop.f32.mrf.mxu0
        %v1584 = vadd.f32 %v1535, %v1583
        %v1585 = vpop.f32.mrf.mxu0
        %v1586 = vadd.f32 %v1537, %v1585
        %1587 = vmatmul.bf16.gmra.mxu0 %v606
        %v1588 = vpop.f32.mrf.mxu0
        %v1589 = vadd.f32 %v1540, %v1588
        %v1590 = vpop.f32.mrf.mxu0
        %v1591 = vadd.f32 %v1542, %v1590
        %1592 = vmatmul.bf16.gmra.mxu0 %v614
        %v1593 = vpop.f32.mrf.mxu0
        %v1594 = vadd.f32 %v1545, %v1593
        %v1595 = vpop.f32.mrf.mxu0
        %v1596 = vadd.f32 %v1547, %v1595
        %1597 = vmatmul.bf16.gmra.mxu0 %v622
        %v1598 = vpop.f32.mrf.mxu0
        %v1599 = vadd.f32 %v1550, %v1598
        %v1600 = vpop.f32.mrf.mxu0
        %v1601 = vadd.f32 %v1552, %v1600
        %1602 = vmatmul.bf16.gmra.mxu0 %v630
        %v1603 = vpop.f32.mrf.mxu0
        %v1604 = vadd.f32 %v1555, %v1603
        %v1605 = vpop.f32.mrf.mxu0
        %v1606 = vadd.f32 %v1557, %v1605
        %1607 = vmatmul.bf16.gmra.mxu0 %v638
        %v1608 = vpop.f32.mrf.mxu0
        %v1609 = vadd.f32 %v1560, %v1608
        %v1610 = vpop.f32.mrf.mxu0
        %v1611 = vadd.f32 %v1562, %v1610
        %1612 = vdwg.mxu0
        %1613 = vmatpush.bf16.msra.mxu0 %v1239
        %1614 = vmatpush.bf16.msra.mxu0 %v1237
        %1615 = vmatpush.bf16.msra.mxu0 %v1235
        %1616 = vmatpush.bf16.msra.mxu0 %v1233
        %1617 = vmatpush.bf16.msra.mxu0 %v1231
        %1618 = vmatpush.bf16.msra.mxu0 %v1229
        %1619 = vmatpush.bf16.msra.mxu0 %v1227
        %1620 = vmatpush.bf16.msra.mxu0 %v1225
        %1621 = vmatmul.bf16.gmra.mxu0 %v583
        %v1622 = vpop.f32.mrf.mxu0
        %v1623 = vadd.f32 %v1574, %v1622
        %v1624 = vpop.f32.mrf.mxu0
        %v1625 = vadd.f32 %v1576, %v1624
        %1626 = vmatmul.bf16.gmra.mxu0 %v591
        %v1627 = vpop.f32.mrf.mxu0
        %v1628 = vadd.f32 %v1579, %v1627
        %v1629 = vpop.f32.mrf.mxu0
        %v1630 = vadd.f32 %v1581, %v1629
        %1631 = vmatmul.bf16.gmra.mxu0 %v599
        %v1632 = vpop.f32.mrf.mxu0
        %v1633 = vadd.f32 %v1584, %v1632
        %v1634 = vpop.f32.mrf.mxu0
        %v1635 = vadd.f32 %v1586, %v1634
        %1636 = vmatmul.bf16.gmra.mxu0 %v607
        %v1637 = vpop.f32.mrf.mxu0
        %v1638 = vadd.f32 %v1589, %v1637
        %v1639 = vpop.f32.mrf.mxu0
        %v1640 = vadd.f32 %v1591, %v1639
        %1641 = vmatmul.bf16.gmra.mxu0 %v615
        %v1642 = vpop.f32.mrf.mxu0
        %v1643 = vadd.f32 %v1594, %v1642
        %v1644 = vpop.f32.mrf.mxu0
        %v1645 = vadd.f32 %v1596, %v1644
        %1646 = vmatmul.bf16.gmra.mxu0 %v623
        %v1647 = vpop.f32.mrf.mxu0
        %v1648 = vadd.f32 %v1599, %v1647
        %v1649 = vpop.f32.mrf.mxu0
        %v1650 = vadd.f32 %v1601, %v1649
        %1651 = vmatmul.bf16.gmra.mxu0 %v631
        %v1652 = vpop.f32.mrf.mxu0
        %v1653 = vadd.f32 %v1604, %v1652
        %v1654 = vpop.f32.mrf.mxu0
        %v1655 = vadd.f32 %v1606, %v1654
        %1656 = vmatmul.bf16.gmra.mxu0 %v639
        %v1657 = vpop.f32.mrf.mxu0
        %v1658 = vadd.f32 %v1609, %v1657
        %v1659 = vpop.f32.mrf.mxu0
        %v1660 = vadd.f32 %v1611, %v1659
        %1661 = vdwg.mxu0
        %1662 = vmatpush.bf16.msra.mxu0 %v1255
        %1663 = vmatpush.bf16.msra.mxu0 %v1253
        %1664 = vmatpush.bf16.msra.mxu0 %v1251
        %1665 = vmatpush.bf16.msra.mxu0 %v1249
        %1666 = vmatpush.bf16.msra.mxu0 %v1247
        %1667 = vmatpush.bf16.msra.mxu0 %v1245
        %1668 = vmatpush.bf16.msra.mxu0 %v1243
        %1669 = vmatpush.bf16.msra.mxu0 %v1241
        %1670 = vmatmul.bf16.gmra.mxu0 %v584
        %v1671 = vpop.f32.mrf.mxu0
        %v1672 = vadd.f32 %v1623, %v1671
        %v1673 = vpop.f32.mrf.mxu0
        %v1674 = vadd.f32 %v1625, %v1673
        %1675 = vmatmul.bf16.gmra.mxu0 %v592
        %v1676 = vpop.f32.mrf.mxu0
        %v1677 = vadd.f32 %v1628, %v1676
        %v1678 = vpop.f32.mrf.mxu0
        %v1679 = vadd.f32 %v1630, %v1678
        %1680 = vmatmul.bf16.gmra.mxu0 %v600
        %v1681 = vpop.f32.mrf.mxu0
        %v1682 = vadd.f32 %v1633, %v1681
        %v1683 = vpop.f32.mrf.mxu0
        %v1684 = vadd.f32 %v1635, %v1683
        %1685 = vmatmul.bf16.gmra.mxu0 %v608
        %v1686 = vpop.f32.mrf.mxu0
        %v1687 = vadd.f32 %v1638, %v1686
        %v1688 = vpop.f32.mrf.mxu0
        %v1689 = vadd.f32 %v1640, %v1688
        %1690 = vmatmul.bf16.gmra.mxu0 %v616
        %v1691 = vpop.f32.mrf.mxu0
        %v1692 = vadd.f32 %v1643, %v1691
        %v1693 = vpop.f32.mrf.mxu0
        %v1694 = vadd.f32 %v1645, %v1693
        %1695 = vmatmul.bf16.gmra.mxu0 %v624
        %v1696 = vpop.f32.mrf.mxu0
        %v1697 = vadd.f32 %v1648, %v1696
        %v1698 = vpop.f32.mrf.mxu0
        %v1699 = vadd.f32 %v1650, %v1698
        %1700 = vmatmul.bf16.gmra.mxu0 %v632
        %v1701 = vpop.f32.mrf.mxu0
        %v1702 = vadd.f32 %v1653, %v1701
        %v1703 = vpop.f32.mrf.mxu0
        %v1704 = vadd.f32 %v1655, %v1703
        %1705 = vmatmul.bf16.gmra.mxu0 %v640
        %v1706 = vpop.f32.mrf.mxu0
        %v1707 = vadd.f32 %v1658, %v1706
        %v1708 = vpop.f32.mrf.mxu0
        %v1709 = vadd.f32 %v1660, %v1708
        %1710 = vdwg.mxu0
        %1711 = vmatpush.bf16.msra.mxu0 %v1271
        %1712 = vmatpush.bf16.msra.mxu0 %v1269
        %1713 = vmatpush.bf16.msra.mxu0 %v1267
        %1714 = vmatpush.bf16.msra.mxu0 %v1265
        %1715 = vmatpush.bf16.msra.mxu0 %v1263
        %1716 = vmatpush.bf16.msra.mxu0 %v1261
        %1717 = vmatpush.bf16.msra.mxu0 %v1259
        %1718 = vmatpush.bf16.msra.mxu0 %v1257
        %1719 = vmatmul.bf16.gmra.mxu0 %v585
        %v1720 = vpop.f32.mrf.mxu0
        %v1721 = vadd.f32 %v1672, %v1720
        %v1722 = vpop.f32.mrf.mxu0
        %v1723 = vadd.f32 %v1674, %v1722
        %1724 = vmatmul.bf16.gmra.mxu0 %v593
        %v1725 = vpop.f32.mrf.mxu0
        %v1726 = vadd.f32 %v1677, %v1725
        %v1727 = vpop.f32.mrf.mxu0
        %v1728 = vadd.f32 %v1679, %v1727
        %1729 = vmatmul.bf16.gmra.mxu0 %v601
        %v1730 = vpop.f32.mrf.mxu0
        %v1731 = vadd.f32 %v1682, %v1730
        %v1732 = vpop.f32.mrf.mxu0
        %v1733 = vadd.f32 %v1684, %v1732
        %1734 = vmatmul.bf16.gmra.mxu0 %v609
        %v1735 = vpop.f32.mrf.mxu0
        %v1736 = vadd.f32 %v1687, %v1735
        %v1737 = vpop.f32.mrf.mxu0
        %v1738 = vadd.f32 %v1689, %v1737
        %1739 = vmatmul.bf16.gmra.mxu0 %v617
        %v1740 = vpop.f32.mrf.mxu0
        %v1741 = vadd.f32 %v1692, %v1740
        %v1742 = vpop.f32.mrf.mxu0
        %v1743 = vadd.f32 %v1694, %v1742
        %1744 = vmatmul.bf16.gmra.mxu0 %v625
        %v1745 = vpop.f32.mrf.mxu0
        %v1746 = vadd.f32 %v1697, %v1745
        %v1747 = vpop.f32.mrf.mxu0
        %v1748 = vadd.f32 %v1699, %v1747
        %1749 = vmatmul.bf16.gmra.mxu0 %v633
        %v1750 = vpop.f32.mrf.mxu0
        %v1751 = vadd.f32 %v1702, %v1750
        %v1752 = vpop.f32.mrf.mxu0
        %v1753 = vadd.f32 %v1704, %v1752
        %1754 = vmatmul.bf16.gmra.mxu0 %v641
        %v1755 = vpop.f32.mrf.mxu0
        %v1756 = vadd.f32 %v1707, %v1755
        %v1757 = vpop.f32.mrf.mxu0
        %v1758 = vadd.f32 %v1709, %v1757
        %1759 = vdwg.mxu0
        %1760 = vmatpush.bf16.msra.mxu0 %v1287
        %1761 = vmatpush.bf16.msra.mxu0 %v1285
        %1762 = vmatpush.bf16.msra.mxu0 %v1283
        %1763 = vmatpush.bf16.msra.mxu0 %v1281
        %1764 = vmatpush.bf16.msra.mxu0 %v1279
        %1765 = vmatpush.bf16.msra.mxu0 %v1277
        %1766 = vmatpush.bf16.msra.mxu0 %v1275
        %1767 = vmatpush.bf16.msra.mxu0 %v1273
        %1768 = vmatmul.bf16.gmra.mxu0 %v586
        %v1769 = vpop.f32.mrf.mxu0
        %v1770 = vadd.f32 %v1721, %v1769
        %v1771 = vpop.f32.mrf.mxu0
        %v1772 = vadd.f32 %v1723, %v1771
        %1773 = vmatmul.bf16.gmra.mxu0 %v594
        %v1774 = vpop.f32.mrf.mxu0
        %v1775 = vadd.f32 %v1726, %v1774
        %v1776 = vpop.f32.mrf.mxu0
        %v1777 = vadd.f32 %v1728, %v1776
        %1778 = vmatmul.bf16.gmra.mxu0 %v602
        %v1779 = vpop.f32.mrf.mxu0
        %v1780 = vadd.f32 %v1731, %v1779
        %v1781 = vpop.f32.mrf.mxu0
        %v1782 = vadd.f32 %v1733, %v1781
        %1783 = vmatmul.bf16.gmra.mxu0 %v610
        %v1784 = vpop.f32.mrf.mxu0
        %v1785 = vadd.f32 %v1736, %v1784
        %v1786 = vpop.f32.mrf.mxu0
        %v1787 = vadd.f32 %v1738, %v1786
        %1788 = vmatmul.bf16.gmra.mxu0 %v618
        %v1789 = vpop.f32.mrf.mxu0
        %v1790 = vadd.f32 %v1741, %v1789
        %v1791 = vpop.f32.mrf.mxu0
        %v1792 = vadd.f32 %v1743, %v1791
        %1793 = vmatmul.bf16.gmra.mxu0 %v626
        %v1794 = vpop.f32.mrf.mxu0
        %v1795 = vadd.f32 %v1746, %v1794
        %v1796 = vpop.f32.mrf.mxu0
        %v1797 = vadd.f32 %v1748, %v1796
        %1798 = vmatmul.bf16.gmra.mxu0 %v634
        %v1799 = vpop.f32.mrf.mxu0
        %v1800 = vadd.f32 %v1751, %v1799
        %v1801 = vpop.f32.mrf.mxu0
        %v1802 = vadd.f32 %v1753, %v1801
        %1803 = vmatmul.bf16.gmra.mxu0 %v642
        %v1804 = vpop.f32.mrf.mxu0
        %v1805 = vadd.f32 %v1756, %v1804
        %v1806 = vpop.f32.mrf.mxu0
        %v1807 = vadd.f32 %v1758, %v1806
        %1808 = vdwg.mxu0
        %1809 = vmatpush.bf16.msra.mxu0 %v1176
        %1810 = vmatpush.bf16.msra.mxu0 %v1174
        %1811 = vmatpush.bf16.msra.mxu0 %v1172
        %1812 = vmatpush.bf16.msra.mxu0 %v1170
        %1813 = vmatpush.bf16.msra.mxu0 %v1168
        %1814 = vmatpush.bf16.msra.mxu0 %v1166
        %1815 = vmatpush.bf16.msra.mxu0 %v1164
        %1816 = vmatpush.bf16.msra.mxu0 %v1162
        %1817 = vmatmul.bf16.gmra.mxu0 %v579
        %v1818 = vpop.f32.mrf.mxu0
        %v1819 = vadd.f32 %v774, %v1818
        %v1820 = vpop.f32.mrf.mxu0
        %v1821 = vadd.f32 %v774, %v1820
        %1822 = vmatmul.bf16.gmra.mxu0 %v587
        %v1823 = vpop.f32.mrf.mxu0
        %v1824 = vadd.f32 %v774, %v1823
        %v1825 = vpop.f32.mrf.mxu0
        %v1826 = vadd.f32 %v774, %v1825
        %1827 = vmatmul.bf16.gmra.mxu0 %v595
        %v1828 = vpop.f32.mrf.mxu0
        %v1829 = vadd.f32 %v774, %v1828
        %v1830 = vpop.f32.mrf.mxu0
        %v1831 = vadd.f32 %v774, %v1830
        %1832 = vmatmul.bf16.gmra.mxu0 %v603
        %v1833 = vpop.f32.mrf.mxu0
        %v1834 = vadd.f32 %v774, %v1833
        %v1835 = vpop.f32.mrf.mxu0
        %v1836 = vadd.f32 %v774, %v1835
        %1837 = vmatmul.bf16.gmra.mxu0 %v611
        %v1838 = vpop.f32.mrf.mxu0
        %v1839 = vadd.f32 %v774, %v1838
        %v1840 = vpop.f32.mrf.mxu0
        %v1841 = vadd.f32 %v774, %v1840
        %1842 = vmatmul.bf16.gmra.mxu0 %v619
        %v1843 = vpop.f32.mrf.mxu0
        %v1844 = vadd.f32 %v774, %v1843
        %v1845 = vpop.f32.mrf.mxu0
        %v1846 = vadd.f32 %v774, %v1845
        %1847 = vmatmul.bf16.gmra.mxu0 %v627
        %v1848 = vpop.f32.mrf.mxu0
        %v1849 = vadd.f32 %v774, %v1848
        %v1850 = vpop.f32.mrf.mxu0
        %v1851 = vadd.f32 %v774, %v1850
        %1852 = vmatmul.bf16.gmra.mxu0 %v635
        %v1853 = vpop.f32.mrf.mxu0
        %v1854 = vadd.f32 %v774, %v1853
        %v1855 = vpop.f32.mrf.mxu0
        %v1856 = vadd.f32 %v774, %v1855
        %1857 = vdwg.mxu0
        %1858 = vmatpush.bf16.msra.mxu0 %v1192
        %1859 = vmatpush.bf16.msra.mxu0 %v1190
        %1860 = vmatpush.bf16.msra.mxu0 %v1188
        %1861 = vmatpush.bf16.msra.mxu0 %v1186
        %1862 = vmatpush.bf16.msra.mxu0 %v1184
        %1863 = vmatpush.bf16.msra.mxu0 %v1182
        %1864 = vmatpush.bf16.msra.mxu0 %v1180
        %1865 = vmatpush.bf16.msra.mxu0 %v1178
        %1866 = vmatmul.bf16.gmra.mxu0 %v580
        %v1867 = vpop.f32.mrf.mxu0
        %v1868 = vadd.f32 %v1819, %v1867
        %v1869 = vpop.f32.mrf.mxu0
        %v1870 = vadd.f32 %v1821, %v1869
        %1871 = vmatmul.bf16.gmra.mxu0 %v588
        %v1872 = vpop.f32.mrf.mxu0
        %v1873 = vadd.f32 %v1824, %v1872
        %v1874 = vpop.f32.mrf.mxu0
        %v1875 = vadd.f32 %v1826, %v1874
        %1876 = vmatmul.bf16.gmra.mxu0 %v596
        %v1877 = vpop.f32.mrf.mxu0
        %v1878 = vadd.f32 %v1829, %v1877
        %v1879 = vpop.f32.mrf.mxu0
        %v1880 = vadd.f32 %v1831, %v1879
        %1881 = vmatmul.bf16.gmra.mxu0 %v604
        %v1882 = vpop.f32.mrf.mxu0
        %v1883 = vadd.f32 %v1834, %v1882
        %v1884 = vpop.f32.mrf.mxu0
        %v1885 = vadd.f32 %v1836, %v1884
        %1886 = vmatmul.bf16.gmra.mxu0 %v612
        %v1887 = vpop.f32.mrf.mxu0
        %v1888 = vadd.f32 %v1839, %v1887
        %v1889 = vpop.f32.mrf.mxu0
        %v1890 = vadd.f32 %v1841, %v1889
        %1891 = vmatmul.bf16.gmra.mxu0 %v620
        %v1892 = vpop.f32.mrf.mxu0
        %v1893 = vadd.f32 %v1844, %v1892
        %v1894 = vpop.f32.mrf.mxu0
        %v1895 = vadd.f32 %v1846, %v1894
        %1896 = vmatmul.bf16.gmra.mxu0 %v628
        %v1897 = vpop.f32.mrf.mxu0
        %v1898 = vadd.f32 %v1849, %v1897
        %v1899 = vpop.f32.mrf.mxu0
        %v1900 = vadd.f32 %v1851, %v1899
        %1901 = vmatmul.bf16.gmra.mxu0 %v636
        %v1902 = vpop.f32.mrf.mxu0
        %v1903 = vadd.f32 %v1854, %v1902
        %v1904 = vpop.f32.mrf.mxu0
        %v1905 = vadd.f32 %v1856, %v1904
        %1906 = vdwg.mxu0
        %1907 = vmatpush.bf16.msra.mxu0 %v1208
        %1908 = vmatpush.bf16.msra.mxu0 %v1206
        %1909 = vmatpush.bf16.msra.mxu0 %v1204
        %1910 = vmatpush.bf16.msra.mxu0 %v1202
        %1911 = vmatpush.bf16.msra.mxu0 %v1200
        %1912 = vmatpush.bf16.msra.mxu0 %v1198
        %1913 = vmatpush.bf16.msra.mxu0 %v1196
        %1914 = vmatpush.bf16.msra.mxu0 %v1194
        %1915 = vmatmul.bf16.gmra.mxu0 %v581
        %v1916 = vpop.f32.mrf.mxu0
        %v1917 = vadd.f32 %v1868, %v1916
        %v1918 = vpop.f32.mrf.mxu0
        %v1919 = vadd.f32 %v1870, %v1918
        %1920 = vmatmul.bf16.gmra.mxu0 %v589
        %v1921 = vpop.f32.mrf.mxu0
        %v1922 = vadd.f32 %v1873, %v1921
        %v1923 = vpop.f32.mrf.mxu0
        %v1924 = vadd.f32 %v1875, %v1923
        %1925 = vmatmul.bf16.gmra.mxu0 %v597
        %v1926 = vpop.f32.mrf.mxu0
        %v1927 = vadd.f32 %v1878, %v1926
        %v1928 = vpop.f32.mrf.mxu0
        %v1929 = vadd.f32 %v1880, %v1928
        %1930 = vmatmul.bf16.gmra.mxu0 %v605
        %v1931 = vpop.f32.mrf.mxu0
        %v1932 = vadd.f32 %v1883, %v1931
        %v1933 = vpop.f32.mrf.mxu0
        %v1934 = vadd.f32 %v1885, %v1933
        %1935 = vmatmul.bf16.gmra.mxu0 %v613
        %v1936 = vpop.f32.mrf.mxu0
        %v1937 = vadd.f32 %v1888, %v1936
        %v1938 = vpop.f32.mrf.mxu0
        %v1939 = vadd.f32 %v1890, %v1938
        %1940 = vmatmul.bf16.gmra.mxu0 %v621
        %v1941 = vpop.f32.mrf.mxu0
        %v1942 = vadd.f32 %v1893, %v1941
        %v1943 = vpop.f32.mrf.mxu0
        %v1944 = vadd.f32 %v1895, %v1943
        %1945 = vmatmul.bf16.gmra.mxu0 %v629
        %v1946 = vpop.f32.mrf.mxu0
        %v1947 = vadd.f32 %v1898, %v1946
        %v1948 = vpop.f32.mrf.mxu0
        %v1949 = vadd.f32 %v1900, %v1948
        %1950 = vmatmul.bf16.gmra.mxu0 %v637
        %v1951 = vpop.f32.mrf.mxu0
        %v1952 = vadd.f32 %v1903, %v1951
        %v1953 = vpop.f32.mrf.mxu0
        %v1954 = vadd.f32 %v1905, %v1953
        %1955 = vdwg.mxu0
        %1956 = vmatpush.bf16.msra.mxu0 %v1224
        %1957 = vmatpush.bf16.msra.mxu0 %v1222
        %1958 = vmatpush.bf16.msra.mxu0 %v1220
        %1959 = vmatpush.bf16.msra.mxu0 %v1218
        %1960 = vmatpush.bf16.msra.mxu0 %v1216
        %1961 = vmatpush.bf16.msra.mxu0 %v1214
        %1962 = vmatpush.bf16.msra.mxu0 %v1212
        %1963 = vmatpush.bf16.msra.mxu0 %v1210
        %1964 = vmatmul.bf16.gmra.mxu0 %v582
        %v1965 = vpop.f32.mrf.mxu0
        %v1966 = vadd.f32 %v1917, %v1965
        %v1967 = vpop.f32.mrf.mxu0
        %v1968 = vadd.f32 %v1919, %v1967
        %1969 = vmatmul.bf16.gmra.mxu0 %v590
        %v1970 = vpop.f32.mrf.mxu0
        %v1971 = vadd.f32 %v1922, %v1970
        %v1972 = vpop.f32.mrf.mxu0
        %v1973 = vadd.f32 %v1924, %v1972
        %1974 = vmatmul.bf16.gmra.mxu0 %v598
        %v1975 = vpop.f32.mrf.mxu0
        %v1976 = vadd.f32 %v1927, %v1975
        %v1977 = vpop.f32.mrf.mxu0
        %v1978 = vadd.f32 %v1929, %v1977
        %1979 = vmatmul.bf16.gmra.mxu0 %v606
        %v1980 = vpop.f32.mrf.mxu0
        %v1981 = vadd.f32 %v1932, %v1980
        %v1982 = vpop.f32.mrf.mxu0
        %v1983 = vadd.f32 %v1934, %v1982
        %1984 = vmatmul.bf16.gmra.mxu0 %v614
        %v1985 = vpop.f32.mrf.mxu0
        %v1986 = vadd.f32 %v1937, %v1985
        %v1987 = vpop.f32.mrf.mxu0
        %v1988 = vadd.f32 %v1939, %v1987
        %1989 = vmatmul.bf16.gmra.mxu0 %v622
        %v1990 = vpop.f32.mrf.mxu0
        %v1991 = vadd.f32 %v1942, %v1990
        %v1992 = vpop.f32.mrf.mxu0
        %v1993 = vadd.f32 %v1944, %v1992
        %1994 = vmatmul.bf16.gmra.mxu0 %v630
        %v1995 = vpop.f32.mrf.mxu0
        %v1996 = vadd.f32 %v1947, %v1995
        %v1997 = vpop.f32.mrf.mxu0
        %v1998 = vadd.f32 %v1949, %v1997
        %1999 = vmatmul.bf16.gmra.mxu0 %v638
        %v2000 = vpop.f32.mrf.mxu0
        %v2001 = vadd.f32 %v1952, %v2000
        %v2002 = vpop.f32.mrf.mxu0
        %v2003 = vadd.f32 %v1954, %v2002
        %2004 = vdwg.mxu0
        %2005 = vmatpush.bf16.msra.mxu0 %v1240
        %2006 = vmatpush.bf16.msra.mxu0 %v1238
        %2007 = vmatpush.bf16.msra.mxu0 %v1236
        %2008 = vmatpush.bf16.msra.mxu0 %v1234
        %2009 = vmatpush.bf16.msra.mxu0 %v1232
        %2010 = vmatpush.bf16.msra.mxu0 %v1230
        %2011 = vmatpush.bf16.msra.mxu0 %v1228
        %2012 = vmatpush.bf16.msra.mxu0 %v1226
        %2013 = vmatmul.bf16.gmra.mxu0 %v583
        %v2014 = vpop.f32.mrf.mxu0
        %v2015 = vadd.f32 %v1966, %v2014
        %v2016 = vpop.f32.mrf.mxu0
        %v2017 = vadd.f32 %v1968, %v2016
        %2018 = vmatmul.bf16.gmra.mxu0 %v591
        %v2019 = vpop.f32.mrf.mxu0
        %v2020 = vadd.f32 %v1971, %v2019
        %v2021 = vpop.f32.mrf.mxu0
        %v2022 = vadd.f32 %v1973, %v2021
        %2023 = vmatmul.bf16.gmra.mxu0 %v599
        %v2024 = vpop.f32.mrf.mxu0
        %v2025 = vadd.f32 %v1976, %v2024
        %v2026 = vpop.f32.mrf.mxu0
        %v2027 = vadd.f32 %v1978, %v2026
        %2028 = vmatmul.bf16.gmra.mxu0 %v607
        %v2029 = vpop.f32.mrf.mxu0
        %v2030 = vadd.f32 %v1981, %v2029
        %v2031 = vpop.f32.mrf.mxu0
        %v2032 = vadd.f32 %v1983, %v2031
        %2033 = vmatmul.bf16.gmra.mxu0 %v615
        %v2034 = vpop.f32.mrf.mxu0
        %v2035 = vadd.f32 %v1986, %v2034
        %v2036 = vpop.f32.mrf.mxu0
        %v2037 = vadd.f32 %v1988, %v2036
        %2038 = vmatmul.bf16.gmra.mxu0 %v623
        %v2039 = vpop.f32.mrf.mxu0
        %v2040 = vadd.f32 %v1991, %v2039
        %v2041 = vpop.f32.mrf.mxu0
        %v2042 = vadd.f32 %v1993, %v2041
        %2043 = vmatmul.bf16.gmra.mxu0 %v631
        %v2044 = vpop.f32.mrf.mxu0
        %v2045 = vadd.f32 %v1996, %v2044
        %v2046 = vpop.f32.mrf.mxu0
        %v2047 = vadd.f32 %v1998, %v2046
        %2048 = vmatmul.bf16.gmra.mxu0 %v639
        %v2049 = vpop.f32.mrf.mxu0
        %v2050 = vadd.f32 %v2001, %v2049
        %v2051 = vpop.f32.mrf.mxu0
        %v2052 = vadd.f32 %v2003, %v2051
        %2053 = vdwg.mxu0
        %2054 = vmatpush.bf16.msra.mxu0 %v1256
        %2055 = vmatpush.bf16.msra.mxu0 %v1254
        %2056 = vmatpush.bf16.msra.mxu0 %v1252
        %2057 = vmatpush.bf16.msra.mxu0 %v1250
        %2058 = vmatpush.bf16.msra.mxu0 %v1248
        %2059 = vmatpush.bf16.msra.mxu0 %v1246
        %2060 = vmatpush.bf16.msra.mxu0 %v1244
        %2061 = vmatpush.bf16.msra.mxu0 %v1242
        %2062 = vmatmul.bf16.gmra.mxu0 %v584
        %v2063 = vpop.f32.mrf.mxu0
        %v2064 = vadd.f32 %v2015, %v2063
        %v2065 = vpop.f32.mrf.mxu0
        %v2066 = vadd.f32 %v2017, %v2065
        %2067 = vmatmul.bf16.gmra.mxu0 %v592
        %v2068 = vpop.f32.mrf.mxu0
        %v2069 = vadd.f32 %v2020, %v2068
        %v2070 = vpop.f32.mrf.mxu0
        %v2071 = vadd.f32 %v2022, %v2070
        %2072 = vmatmul.bf16.gmra.mxu0 %v600
        %v2073 = vpop.f32.mrf.mxu0
        %v2074 = vadd.f32 %v2025, %v2073
        %v2075 = vpop.f32.mrf.mxu0
        %v2076 = vadd.f32 %v2027, %v2075
        %2077 = vmatmul.bf16.gmra.mxu0 %v608
        %v2078 = vpop.f32.mrf.mxu0
        %v2079 = vadd.f32 %v2030, %v2078
        %v2080 = vpop.f32.mrf.mxu0
        %v2081 = vadd.f32 %v2032, %v2080
        %2082 = vmatmul.bf16.gmra.mxu0 %v616
        %v2083 = vpop.f32.mrf.mxu0
        %v2084 = vadd.f32 %v2035, %v2083
        %v2085 = vpop.f32.mrf.mxu0
        %v2086 = vadd.f32 %v2037, %v2085
        %2087 = vmatmul.bf16.gmra.mxu0 %v624
        %v2088 = vpop.f32.mrf.mxu0
        %v2089 = vadd.f32 %v2040, %v2088
        %v2090 = vpop.f32.mrf.mxu0
        %v2091 = vadd.f32 %v2042, %v2090
        %2092 = vmatmul.bf16.gmra.mxu0 %v632
        %v2093 = vpop.f32.mrf.mxu0
        %v2094 = vadd.f32 %v2045, %v2093
        %v2095 = vpop.f32.mrf.mxu0
        %v2096 = vadd.f32 %v2047, %v2095
        %2097 = vmatmul.bf16.gmra.mxu0 %v640
        %v2098 = vpop.f32.mrf.mxu0
        %v2099 = vadd.f32 %v2050, %v2098
        %v2100 = vpop.f32.mrf.mxu0
        %v2101 = vadd.f32 %v2052, %v2100
        %2102 = vdwg.mxu0
        %2103 = vmatpush.bf16.msra.mxu0 %v1272
        %2104 = vmatpush.bf16.msra.mxu0 %v1270
        %2105 = vmatpush.bf16.msra.mxu0 %v1268
        %2106 = vmatpush.bf16.msra.mxu0 %v1266
        %2107 = vmatpush.bf16.msra.mxu0 %v1264
        %2108 = vmatpush.bf16.msra.mxu0 %v1262
        %2109 = vmatpush.bf16.msra.mxu0 %v1260
        %2110 = vmatpush.bf16.msra.mxu0 %v1258
        %2111 = vmatmul.bf16.gmra.mxu0 %v585
        %v2112 = vpop.f32.mrf.mxu0
        %v2113 = vadd.f32 %v2064, %v2112
        %v2114 = vpop.f32.mrf.mxu0
        %v2115 = vadd.f32 %v2066, %v2114
        %2116 = vmatmul.bf16.gmra.mxu0 %v593
        %v2117 = vpop.f32.mrf.mxu0
        %v2118 = vadd.f32 %v2069, %v2117
        %v2119 = vpop.f32.mrf.mxu0
        %v2120 = vadd.f32 %v2071, %v2119
        %2121 = vmatmul.bf16.gmra.mxu0 %v601
        %v2122 = vpop.f32.mrf.mxu0
        %v2123 = vadd.f32 %v2074, %v2122
        %v2124 = vpop.f32.mrf.mxu0
        %v2125 = vadd.f32 %v2076, %v2124
        %2126 = vmatmul.bf16.gmra.mxu0 %v609
        %v2127 = vpop.f32.mrf.mxu0
        %v2128 = vadd.f32 %v2079, %v2127
        %v2129 = vpop.f32.mrf.mxu0
        %v2130 = vadd.f32 %v2081, %v2129
        %2131 = vmatmul.bf16.gmra.mxu0 %v617
        %v2132 = vpop.f32.mrf.mxu0
        %v2133 = vadd.f32 %v2084, %v2132
        %v2134 = vpop.f32.mrf.mxu0
        %v2135 = vadd.f32 %v2086, %v2134
        %2136 = vmatmul.bf16.gmra.mxu0 %v625
        %v2137 = vpop.f32.mrf.mxu0
        %v2138 = vadd.f32 %v2089, %v2137
        %v2139 = vpop.f32.mrf.mxu0
        %v2140 = vadd.f32 %v2091, %v2139
        %2141 = vmatmul.bf16.gmra.mxu0 %v633
        %v2142 = vpop.f32.mrf.mxu0
        %v2143 = vadd.f32 %v2094, %v2142
        %v2144 = vpop.f32.mrf.mxu0
        %v2145 = vadd.f32 %v2096, %v2144
        %2146 = vmatmul.bf16.gmra.mxu0 %v641
        %v2147 = vpop.f32.mrf.mxu0
        %v2148 = vadd.f32 %v2099, %v2147
        %v2149 = vpop.f32.mrf.mxu0
        %v2150 = vadd.f32 %v2101, %v2149
        %2151 = vdwg.mxu0
        %2152 = vmatpush.bf16.msra.mxu0 %v1288
        %2153 = vmatpush.bf16.msra.mxu0 %v1286
        %2154 = vmatpush.bf16.msra.mxu0 %v1284
        %2155 = vmatpush.bf16.msra.mxu0 %v1282
        %2156 = vmatpush.bf16.msra.mxu0 %v1280
        %2157 = vmatpush.bf16.msra.mxu0 %v1278
        %2158 = vmatpush.bf16.msra.mxu0 %v1276
        %2159 = vmatpush.bf16.msra.mxu0 %v1274
        %2160 = vmatmul.bf16.gmra.mxu0 %v586
        %v2161 = vpop.f32.mrf.mxu0
        %v2162 = vadd.f32 %v2113, %v2161
        %v2163 = vpop.f32.mrf.mxu0
        %v2164 = vadd.f32 %v2115, %v2163
        %2165 = vmatmul.bf16.gmra.mxu0 %v594
        %v2166 = vpop.f32.mrf.mxu0
        %v2167 = vadd.f32 %v2118, %v2166
        %v2168 = vpop.f32.mrf.mxu0
        %v2169 = vadd.f32 %v2120, %v2168
        %2170 = vmatmul.bf16.gmra.mxu0 %v602
        %v2171 = vpop.f32.mrf.mxu0
        %v2172 = vadd.f32 %v2123, %v2171
        %v2173 = vpop.f32.mrf.mxu0
        %v2174 = vadd.f32 %v2125, %v2173
        %2175 = vmatmul.bf16.gmra.mxu0 %v610
        %v2176 = vpop.f32.mrf.mxu0
        %v2177 = vadd.f32 %v2128, %v2176
        %v2178 = vpop.f32.mrf.mxu0
        %v2179 = vadd.f32 %v2130, %v2178
        %2180 = vmatmul.bf16.gmra.mxu0 %v618
        %v2181 = vpop.f32.mrf.mxu0
        %v2182 = vadd.f32 %v2133, %v2181
        %v2183 = vpop.f32.mrf.mxu0
        %v2184 = vadd.f32 %v2135, %v2183
        %2185 = vmatmul.bf16.gmra.mxu0 %v626
        %v2186 = vpop.f32.mrf.mxu0
        %v2187 = vadd.f32 %v2138, %v2186
        %v2188 = vpop.f32.mrf.mxu0
        %v2189 = vadd.f32 %v2140, %v2188
        %2190 = vmatmul.bf16.gmra.mxu0 %v634
        %v2191 = vpop.f32.mrf.mxu0
        %v2192 = vadd.f32 %v2143, %v2191
        %v2193 = vpop.f32.mrf.mxu0
        %v2194 = vadd.f32 %v2145, %v2193
        %2195 = vmatmul.bf16.gmra.mxu0 %v642
        %v2196 = vpop.f32.mrf.mxu0
        %v2197 = vadd.f32 %v2148, %v2196
        %v2198 = vpop.f32.mrf.mxu0
        %v2199 = vadd.f32 %v2150, %v2198
        %2200 = vdwg.mxu0
        %v2201 = vmax.f32 %v1770, 0.0
        %v2202 = vmax.f32 %v2162, 0.0
        %v2203 = vmax.f32 %v1772, 0.0
        %v2204 = vmax.f32 %v2164, 0.0
        %v2205 = vmax.f32 %v1775, 0.0
        %v2206 = vmax.f32 %v2167, 0.0
        %v2207 = vmax.f32 %v1777, 0.0
        %v2208 = vmax.f32 %v2169, 0.0
        %v2209 = vmax.f32 %v1780, 0.0
        %v2210 = vmax.f32 %v2172, 0.0
        %v2211 = vmax.f32 %v1782, 0.0
        %v2212 = vmax.f32 %v2174, 0.0
        %v2213 = vmax.f32 %v1785, 0.0
        %v2214 = vmax.f32 %v2177, 0.0
        %v2215 = vmax.f32 %v1787, 0.0
        %v2216 = vmax.f32 %v2179, 0.0
        %v2217 = vmax.f32 %v1790, 0.0
        %v2218 = vmax.f32 %v2182, 0.0
        %v2219 = vmax.f32 %v1792, 0.0
        %v2220 = vmax.f32 %v2184, 0.0
        %v2221 = vmax.f32 %v1795, 0.0
        %v2222 = vmax.f32 %v2187, 0.0
        %v2223 = vmax.f32 %v1797, 0.0
        %v2224 = vmax.f32 %v2189, 0.0
        %v2225 = vmax.f32 %v1800, 0.0
        %v2226 = vmax.f32 %v2192, 0.0
        %v2227 = vmax.f32 %v1802, 0.0
        %v2228 = vmax.f32 %v2194, 0.0
        %v2229 = vmax.f32 %v1805, 0.0
        %v2230 = vmax.f32 %v2197, 0.0
        %v2231 = vmax.f32 %v1807, 0.0
        %v2232 = vmax.f32 %v2199, 0.0
        %v2233 = vpack.c.bf16 %v2203, %v2201
        %v2234 = vpack.c.bf16 %v2204, %v2202
        %v2235 = vpack.c.bf16 %v2207, %v2205
        %v2236 = vpack.c.bf16 %v2208, %v2206
        %v2237 = vpack.c.bf16 %v2211, %v2209
        %v2238 = vpack.c.bf16 %v2212, %v2210
        %v2239 = vpack.c.bf16 %v2215, %v2213
        %v2240 = vpack.c.bf16 %v2216, %v2214
        %v2241 = vpack.c.bf16 %v2219, %v2217
        %v2242 = vpack.c.bf16 %v2220, %v2218
        %v2243 = vpack.c.bf16 %v2223, %v2221
        %v2244 = vpack.c.bf16 %v2224, %v2222
        %v2245 = vpack.c.bf16 %v2227, %v2225
        %v2246 = vpack.c.bf16 %v2228, %v2226
        %v2247 = vpack.c.bf16 %v2231, %v2229
        %v2248 = vpack.c.bf16 %v2232, %v2230
        %v2249 = vld [vmem:[#allocation8] sm:$0xff]
        %v2250 = vld [vmem:[#allocation8 + $0x8] sm:$0xff]
        %v2251 = vld [vmem:[#allocation8 + $0x10] sm:$0xff]
        %v2252 = vld [vmem:[#allocation8 + $0x18] sm:$0xff]
        %v2253 = vld [vmem:[#allocation8 + $0x20] sm:$0xff]
        %v2254 = vld [vmem:[#allocation8 + $0x28] sm:$0xff]
        %v2255 = vld [vmem:[#allocation8 + $0x30] sm:$0xff]
        %v2256 = vld [vmem:[#allocation8 + $0x38] sm:$0xff]
        %v2257 = vld [vmem:[#allocation8 + $0x40] sm:$0xff]
        %v2258 = vld [vmem:[#allocation8 + $0x48] sm:$0xff]
        %v2259 = vld [vmem:[#allocation8 + $0x50] sm:$0xff]
        %v2260 = vld [vmem:[#allocation8 + $0x58] sm:$0xff]
        %v2261 = vld [vmem:[#allocation8 + $0x60] sm:$0xff]
        %v2262 = vld [vmem:[#allocation8 + $0x68] sm:$0xff]
        %v2263 = vld [vmem:[#allocation8 + $0x70] sm:$0xff]
        %v2264 = vld [vmem:[#allocation8 + $0x78] sm:$0xff]
        %v2265 = vld [vmem:[#allocation8 + $0x80] sm:$0xff]
        %v2266 = vld [vmem:[#allocation8 + $0x88] sm:$0xff]
        %v2267 = vld [vmem:[#allocation8 + $0x90] sm:$0xff]
        %v2268 = vld [vmem:[#allocation8 + $0x98] sm:$0xff]
        %v2269 = vld [vmem:[#allocation8 + $0xa0] sm:$0xff]
        %v2270 = vld [vmem:[#allocation8 + $0xa8] sm:$0xff]
        %v2271 = vld [vmem:[#allocation8 + $0xb0] sm:$0xff]
        %v2272 = vld [vmem:[#allocation8 + $0xb8] sm:$0xff]
        %v2273 = vld [vmem:[#allocation8 + $0xc0] sm:$0xff]
        %v2274 = vld [vmem:[#allocation8 + $0xc8] sm:$0xff]
        %v2275 = vld [vmem:[#allocation8 + $0xd0] sm:$0xff]
        %v2276 = vld [vmem:[#allocation8 + $0xd8] sm:$0xff]
        %v2277 = vld [vmem:[#allocation8 + $0xe0] sm:$0xff]
        %v2278 = vld [vmem:[#allocation8 + $0xe8] sm:$0xff]
        %v2279 = vld [vmem:[#allocation8 + $0xf0] sm:$0xff]
        %v2280 = vld [vmem:[#allocation8 + $0xf8] sm:$0xff]
        %v2281 = vld [vmem:[%s4] sm:$0x3]
        %v2283 = vperm.slane %v2281, 0
        %v2284 = vperm.slane %v2281, 1
        %v2319 = vunpack.c.l.b16 %v2249
        %v2320 = vunpack.c.h.b16 %v2249
        %v2321 = vunpack.c.l.b16 %v2250
        %v2322 = vunpack.c.h.b16 %v2250
        %v2323 = vunpack.c.l.b16 %v2251
        %v2324 = vunpack.c.h.b16 %v2251
        %v2325 = vunpack.c.l.b16 %v2252
        %v2326 = vunpack.c.h.b16 %v2252
        %v2327 = vunpack.c.l.b16 %v2253
        %v2328 = vunpack.c.h.b16 %v2253
        %v2329 = vunpack.c.l.b16 %v2254
        %v2330 = vunpack.c.h.b16 %v2254
        %v2331 = vunpack.c.l.b16 %v2255
        %v2332 = vunpack.c.h.b16 %v2255
        %v2333 = vunpack.c.l.b16 %v2256
        %v2334 = vunpack.c.h.b16 %v2256
        %v2335 = vunpack.c.l.b16 %v2257
        %v2336 = vunpack.c.h.b16 %v2257
        %v2337 = vunpack.c.l.b16 %v2258
        %v2338 = vunpack.c.h.b16 %v2258
        %v2339 = vunpack.c.l.b16 %v2259
        %v2340 = vunpack.c.h.b16 %v2259
        %v2341 = vunpack.c.l.b16 %v2260
        %v2342 = vunpack.c.h.b16 %v2260
        %v2343 = vunpack.c.l.b16 %v2261
        %v2344 = vunpack.c.h.b16 %v2261
        %v2345 = vunpack.c.l.b16 %v2262
        %v2346 = vunpack.c.h.b16 %v2262
        %v2347 = vunpack.c.l.b16 %v2263
        %v2348 = vunpack.c.h.b16 %v2263
        %v2349 = vunpack.c.l.b16 %v2264
        %v2350 = vunpack.c.h.b16 %v2264
        %v2351 = vunpack.c.l.b16 %v2265
        %v2352 = vunpack.c.h.b16 %v2265
        %v2353 = vunpack.c.l.b16 %v2266
        %v2354 = vunpack.c.h.b16 %v2266
        %v2355 = vunpack.c.l.b16 %v2267
        %v2356 = vunpack.c.h.b16 %v2267
        %v2357 = vunpack.c.l.b16 %v2268
        %v2358 = vunpack.c.h.b16 %v2268
        %v2359 = vunpack.c.l.b16 %v2269
        %v2360 = vunpack.c.h.b16 %v2269
        %v2361 = vunpack.c.l.b16 %v2270
        %v2362 = vunpack.c.h.b16 %v2270
        %v2363 = vunpack.c.l.b16 %v2271
        %v2364 = vunpack.c.h.b16 %v2271
        %v2365 = vunpack.c.l.b16 %v2272
        %v2366 = vunpack.c.h.b16 %v2272
        %v2367 = vunpack.c.l.b16 %v2273
        %v2368 = vunpack.c.h.b16 %v2273
        %v2369 = vunpack.c.l.b16 %v2274
        %v2370 = vunpack.c.h.b16 %v2274
        %v2371 = vunpack.c.l.b16 %v2275
        %v2372 = vunpack.c.h.b16 %v2275
        %v2373 = vunpack.c.l.b16 %v2276
        %v2374 = vunpack.c.h.b16 %v2276
        %v2375 = vunpack.c.l.b16 %v2277
        %v2376 = vunpack.c.h.b16 %v2277
        %v2377 = vunpack.c.l.b16 %v2278
        %v2378 = vunpack.c.h.b16 %v2278
        %v2379 = vunpack.c.l.b16 %v2279
        %v2380 = vunpack.c.h.b16 %v2279
        %v2381 = vunpack.c.l.b16 %v2280
        %v2382 = vunpack.c.h.b16 %v2280
        %v2383 = vpack.c.b16 %v2321, %v2319
        %v2384 = vpack.c.b16 %v2322, %v2320
        %v2385 = vpack.c.b16 %v2325, %v2323
        %v2386 = vpack.c.b16 %v2326, %v2324
        %v2387 = vpack.c.b16 %v2329, %v2327
        %v2388 = vpack.c.b16 %v2330, %v2328
        %v2389 = vpack.c.b16 %v2333, %v2331
        %v2390 = vpack.c.b16 %v2334, %v2332
        %v2391 = vpack.c.b16 %v2337, %v2335
        %v2392 = vpack.c.b16 %v2338, %v2336
        %v2393 = vpack.c.b16 %v2341, %v2339
        %v2394 = vpack.c.b16 %v2342, %v2340
        %v2395 = vpack.c.b16 %v2345, %v2343
        %v2396 = vpack.c.b16 %v2346, %v2344
        %v2397 = vpack.c.b16 %v2349, %v2347
        %v2398 = vpack.c.b16 %v2350, %v2348
        %v2399 = vpack.c.b16 %v2353, %v2351
        %v2400 = vpack.c.b16 %v2354, %v2352
        %v2401 = vpack.c.b16 %v2357, %v2355
        %v2402 = vpack.c.b16 %v2358, %v2356
        %v2403 = vpack.c.b16 %v2361, %v2359
        %v2404 = vpack.c.b16 %v2362, %v2360
        %v2405 = vpack.c.b16 %v2365, %v2363
        %v2406 = vpack.c.b16 %v2366, %v2364
        %v2407 = vpack.c.b16 %v2369, %v2367
        %v2408 = vpack.c.b16 %v2370, %v2368
        %v2409 = vpack.c.b16 %v2373, %v2371
        %v2410 = vpack.c.b16 %v2374, %v2372
        %v2411 = vpack.c.b16 %v2377, %v2375
        %v2412 = vpack.c.b16 %v2378, %v2376
        %v2413 = vpack.c.b16 %v2381, %v2379
        %v2414 = vpack.c.b16 %v2382, %v2380
        %2447 = vmatpush.bf16.msra.mxu0 %v2397
        %2448 = vmatpush.bf16.msra.mxu0 %v2395
        %2449 = vmatpush.bf16.msra.mxu0 %v2393
        %2450 = vmatpush.bf16.msra.mxu0 %v2391
        %2451 = vmatpush.bf16.msra.mxu0 %v2389
        %2452 = vmatpush.bf16.msra.mxu0 %v2387
        %2453 = vmatpush.bf16.msra.mxu0 %v2385
        %2454 = vmatpush.bf16.msra.mxu0 %v2383
        %2455 = vmatmul.bf16.gmra.mxu0 %v2233
        %v2456 = vpop.f32.mrf.mxu0
        %v2457 = vadd.f32 %v2283, %v2456
        %v2458 = vpop.f32.mrf.mxu0
        %v2459 = vadd.f32 %v2283, %v2458
        %2460 = vmatmul.bf16.gmra.mxu0 %v2235
        %v2461 = vpop.f32.mrf.mxu0
        %v2462 = vadd.f32 %v2283, %v2461
        %v2463 = vpop.f32.mrf.mxu0
        %v2464 = vadd.f32 %v2283, %v2463
        %2465 = vmatmul.bf16.gmra.mxu0 %v2237
        %v2466 = vpop.f32.mrf.mxu0
        %v2467 = vadd.f32 %v2283, %v2466
        %v2468 = vpop.f32.mrf.mxu0
        %v2469 = vadd.f32 %v2283, %v2468
        %2470 = vmatmul.bf16.gmra.mxu0 %v2239
        %v2471 = vpop.f32.mrf.mxu0
        %v2472 = vadd.f32 %v2283, %v2471
        %v2473 = vpop.f32.mrf.mxu0
        %v2474 = vadd.f32 %v2283, %v2473
        %2475 = vmatmul.bf16.gmra.mxu0 %v2241
        %v2476 = vpop.f32.mrf.mxu0
        %v2477 = vadd.f32 %v2283, %v2476
        %v2478 = vpop.f32.mrf.mxu0
        %v2479 = vadd.f32 %v2283, %v2478
        %2480 = vmatmul.bf16.gmra.mxu0 %v2243
        %v2481 = vpop.f32.mrf.mxu0
        %v2482 = vadd.f32 %v2283, %v2481
        %v2483 = vpop.f32.mrf.mxu0
        %v2484 = vadd.f32 %v2283, %v2483
        %2485 = vmatmul.bf16.gmra.mxu0 %v2245
        %v2486 = vpop.f32.mrf.mxu0
        %v2487 = vadd.f32 %v2283, %v2486
        %v2488 = vpop.f32.mrf.mxu0
        %v2489 = vadd.f32 %v2283, %v2488
        %2490 = vmatmul.bf16.gmra.mxu0 %v2247
        %v2491 = vpop.f32.mrf.mxu0
        %v2492 = vadd.f32 %v2283, %v2491
        %v2493 = vpop.f32.mrf.mxu0
        %v2494 = vadd.f32 %v2283, %v2493
        %2495 = vdwg.mxu0
        %2496 = vmatpush.bf16.msra.mxu0 %v2413
        %2497 = vmatpush.bf16.msra.mxu0 %v2411
        %2498 = vmatpush.bf16.msra.mxu0 %v2409
        %2499 = vmatpush.bf16.msra.mxu0 %v2407
        %2500 = vmatpush.bf16.msra.mxu0 %v2405
        %2501 = vmatpush.bf16.msra.mxu0 %v2403
        %2502 = vmatpush.bf16.msra.mxu0 %v2401
        %2503 = vmatpush.bf16.msra.mxu0 %v2399
        %2504 = vmatmul.bf16.gmra.mxu0 %v2234
        %v2505 = vpop.f32.mrf.mxu0
        %v2506 = vadd.f32 %v2457, %v2505
        %v2507 = vpop.f32.mrf.mxu0
        %v2508 = vadd.f32 %v2459, %v2507
        %2509 = vmatmul.bf16.gmra.mxu0 %v2236
        %v2510 = vpop.f32.mrf.mxu0
        %v2511 = vadd.f32 %v2462, %v2510
        %v2512 = vpop.f32.mrf.mxu0
        %v2513 = vadd.f32 %v2464, %v2512
        %2514 = vmatmul.bf16.gmra.mxu0 %v2238
        %v2515 = vpop.f32.mrf.mxu0
        %v2516 = vadd.f32 %v2467, %v2515
        %v2517 = vpop.f32.mrf.mxu0
        %v2518 = vadd.f32 %v2469, %v2517
        %2519 = vmatmul.bf16.gmra.mxu0 %v2240
        %v2520 = vpop.f32.mrf.mxu0
        %v2521 = vadd.f32 %v2472, %v2520
        %v2522 = vpop.f32.mrf.mxu0
        %v2523 = vadd.f32 %v2474, %v2522
        %2524 = vmatmul.bf16.gmra.mxu0 %v2242
        %v2525 = vpop.f32.mrf.mxu0
        %v2526 = vadd.f32 %v2477, %v2525
        %v2527 = vpop.f32.mrf.mxu0
        %v2528 = vadd.f32 %v2479, %v2527
        %2529 = vmatmul.bf16.gmra.mxu0 %v2244
        %v2530 = vpop.f32.mrf.mxu0
        %v2531 = vadd.f32 %v2482, %v2530
        %v2532 = vpop.f32.mrf.mxu0
        %v2533 = vadd.f32 %v2484, %v2532
        %2534 = vmatmul.bf16.gmra.mxu0 %v2246
        %v2535 = vpop.f32.mrf.mxu0
        %v2536 = vadd.f32 %v2487, %v2535
        %v2537 = vpop.f32.mrf.mxu0
        %v2538 = vadd.f32 %v2489, %v2537
        %2539 = vmatmul.bf16.gmra.mxu0 %v2248
        %v2540 = vpop.f32.mrf.mxu0
        %v2541 = vadd.f32 %v2492, %v2540
        %v2542 = vpop.f32.mrf.mxu0
        %v2543 = vadd.f32 %v2494, %v2542
        %2544 = vdwg.mxu0
        %2545 = vmatpush.bf16.msra.mxu0 %v2398
        %2546 = vmatpush.bf16.msra.mxu0 %v2396
        %2547 = vmatpush.bf16.msra.mxu0 %v2394
        %2548 = vmatpush.bf16.msra.mxu0 %v2392
        %2549 = vmatpush.bf16.msra.mxu0 %v2390
        %2550 = vmatpush.bf16.msra.mxu0 %v2388
        %2551 = vmatpush.bf16.msra.mxu0 %v2386
        %2552 = vmatpush.bf16.msra.mxu0 %v2384
        %2553 = vmatmul.bf16.gmra.mxu0 %v2233
        %v2554 = vpop.f32.mrf.mxu0
        %v2555 = vadd.f32 %v2284, %v2554
        %v2556 = vpop.f32.mrf.mxu0
        %v2557 = vadd.f32 %v2284, %v2556
        %2558 = vmatmul.bf16.gmra.mxu0 %v2235
        %v2559 = vpop.f32.mrf.mxu0
        %v2560 = vadd.f32 %v2284, %v2559
        %v2561 = vpop.f32.mrf.mxu0
        %v2562 = vadd.f32 %v2284, %v2561
        %2563 = vmatmul.bf16.gmra.mxu0 %v2237
        %v2564 = vpop.f32.mrf.mxu0
        %v2565 = vadd.f32 %v2284, %v2564
        %v2566 = vpop.f32.mrf.mxu0
        %v2567 = vadd.f32 %v2284, %v2566
        %2568 = vmatmul.bf16.gmra.mxu0 %v2239
        %v2569 = vpop.f32.mrf.mxu0
        %v2570 = vadd.f32 %v2284, %v2569
        %v2571 = vpop.f32.mrf.mxu0
        %v2572 = vadd.f32 %v2284, %v2571
        %2573 = vmatmul.bf16.gmra.mxu0 %v2241
        %v2574 = vpop.f32.mrf.mxu0
        %v2575 = vadd.f32 %v2284, %v2574
        %v2576 = vpop.f32.mrf.mxu0
        %v2577 = vadd.f32 %v2284, %v2576
        %2578 = vmatmul.bf16.gmra.mxu0 %v2243
        %v2579 = vpop.f32.mrf.mxu0
        %v2580 = vadd.f32 %v2284, %v2579
        %v2581 = vpop.f32.mrf.mxu0
        %v2582 = vadd.f32 %v2284, %v2581
        %2583 = vmatmul.bf16.gmra.mxu0 %v2245
        %v2584 = vpop.f32.mrf.mxu0
        %v2585 = vadd.f32 %v2284, %v2584
        %v2586 = vpop.f32.mrf.mxu0
        %v2587 = vadd.f32 %v2284, %v2586
        %2588 = vmatmul.bf16.gmra.mxu0 %v2247
        %v2589 = vpop.f32.mrf.mxu0
        %v2590 = vadd.f32 %v2284, %v2589
        %v2591 = vpop.f32.mrf.mxu0
        %v2592 = vadd.f32 %v2284, %v2591
        %2593 = vdwg.mxu0
        %2594 = vmatpush.bf16.msra.mxu0 %v2414
        %2595 = vmatpush.bf16.msra.mxu0 %v2412
        %2596 = vmatpush.bf16.msra.mxu0 %v2410
        %2597 = vmatpush.bf16.msra.mxu0 %v2408
        %2598 = vmatpush.bf16.msra.mxu0 %v2406
        %2599 = vmatpush.bf16.msra.mxu0 %v2404
        %2600 = vmatpush.bf16.msra.mxu0 %v2402
        %2601 = vmatpush.bf16.msra.mxu0 %v2400
        %2602 = vmatmul.bf16.gmra.mxu0 %v2234
        %v2603 = vpop.f32.mrf.mxu0
        %v2604 = vadd.f32 %v2555, %v2603
        %v2605 = vpop.f32.mrf.mxu0
        %v2606 = vadd.f32 %v2557, %v2605
        %2607 = vmatmul.bf16.gmra.mxu0 %v2236
        %v2608 = vpop.f32.mrf.mxu0
        %v2609 = vadd.f32 %v2560, %v2608
        %v2610 = vpop.f32.mrf.mxu0
        %v2611 = vadd.f32 %v2562, %v2610
        %2612 = vmatmul.bf16.gmra.mxu0 %v2238
        %v2613 = vpop.f32.mrf.mxu0
        %v2614 = vadd.f32 %v2565, %v2613
        %v2615 = vpop.f32.mrf.mxu0
        %v2616 = vadd.f32 %v2567, %v2615
        %2617 = vmatmul.bf16.gmra.mxu0 %v2240
        %v2618 = vpop.f32.mrf.mxu0
        %v2619 = vadd.f32 %v2570, %v2618
        %v2620 = vpop.f32.mrf.mxu0
        %v2621 = vadd.f32 %v2572, %v2620
        %2622 = vmatmul.bf16.gmra.mxu0 %v2242
        %v2623 = vpop.f32.mrf.mxu0
        %v2624 = vadd.f32 %v2575, %v2623
        %v2625 = vpop.f32.mrf.mxu0
        %v2626 = vadd.f32 %v2577, %v2625
        %2627 = vmatmul.bf16.gmra.mxu0 %v2244
        %v2628 = vpop.f32.mrf.mxu0
        %v2629 = vadd.f32 %v2580, %v2628
        %v2630 = vpop.f32.mrf.mxu0
        %v2631 = vadd.f32 %v2582, %v2630
        %2632 = vmatmul.bf16.gmra.mxu0 %v2246
        %v2633 = vpop.f32.mrf.mxu0
        %v2634 = vadd.f32 %v2585, %v2633
        %v2635 = vpop.f32.mrf.mxu0
        %v2636 = vadd.f32 %v2587, %v2635
        %2637 = vmatmul.bf16.gmra.mxu0 %v2248
        %v2638 = vpop.f32.mrf.mxu0
        %v2639 = vadd.f32 %v2590, %v2638
        %v2640 = vpop.f32.mrf.mxu0
        %v2641 = vadd.f32 %v2592, %v2640
        %2642 = vdwg.mxu0
        %v2643 = vmax.f32 %v2506, 0.0
        %v2644 = vmax.f32 %v2604, 0.0
        %v2645 = vmax.f32 %v2508, 0.0
        %v2646 = vmax.f32 %v2606, 0.0
        %v2647 = vmax.f32 %v2511, 0.0
        %v2648 = vmax.f32 %v2609, 0.0
        %v2649 = vmax.f32 %v2513, 0.0
        %v2650 = vmax.f32 %v2611, 0.0
        %v2651 = vmax.f32 %v2516, 0.0
        %v2652 = vmax.f32 %v2614, 0.0
        %v2653 = vmax.f32 %v2518, 0.0
        %v2654 = vmax.f32 %v2616, 0.0
        %v2655 = vmax.f32 %v2521, 0.0
        %v2656 = vmax.f32 %v2619, 0.0
        %v2657 = vmax.f32 %v2523, 0.0
        %v2658 = vmax.f32 %v2621, 0.0
        %v2659 = vmax.f32 %v2526, 0.0
        %v2660 = vmax.f32 %v2624, 0.0
        %v2661 = vmax.f32 %v2528, 0.0
        %v2662 = vmax.f32 %v2626, 0.0
        %v2663 = vmax.f32 %v2531, 0.0
        %v2664 = vmax.f32 %v2629, 0.0
        %v2665 = vmax.f32 %v2533, 0.0
        %v2666 = vmax.f32 %v2631, 0.0
        %v2667 = vmax.f32 %v2536, 0.0
        %v2668 = vmax.f32 %v2634, 0.0
        %v2669 = vmax.f32 %v2538, 0.0
        %v2670 = vmax.f32 %v2636, 0.0
        %v2671 = vmax.f32 %v2541, 0.0
        %v2672 = vmax.f32 %v2639, 0.0
        %v2673 = vmax.f32 %v2543, 0.0
        %v2674 = vmax.f32 %v2641, 0.0
        %v2675 = vpack.c.bf16 %v2645, %v2643
        %v2676 = vpack.c.bf16 %v2646, %v2644
        %v2677 = vpack.c.bf16 %v2649, %v2647
        %v2678 = vpack.c.bf16 %v2650, %v2648
        %v2679 = vpack.c.bf16 %v2653, %v2651
        %v2680 = vpack.c.bf16 %v2654, %v2652
        %v2681 = vpack.c.bf16 %v2657, %v2655
        %v2682 = vpack.c.bf16 %v2658, %v2656
        %v2683 = vpack.c.bf16 %v2661, %v2659
        %v2684 = vpack.c.bf16 %v2662, %v2660
        %v2685 = vpack.c.bf16 %v2665, %v2663
        %v2686 = vpack.c.bf16 %v2666, %v2664
        %v2687 = vpack.c.bf16 %v2669, %v2667
        %v2688 = vpack.c.bf16 %v2670, %v2668
        %v2689 = vpack.c.bf16 %v2673, %v2671
        %v2690 = vpack.c.bf16 %v2674, %v2672
        %v2691 = vld [vmem:[#allocation10] sm:$0xff]
        %v2692 = vld [vmem:[#allocation10 + $0x8] sm:$0xff]
        %v2693 = vld [vmem:[#allocation10 + $0x10] sm:$0xff]
        %v2694 = vld [vmem:[#allocation10 + $0x18] sm:$0xff]
        %v2695 = vld [vmem:[#allocation10 + $0x20] sm:$0xff]
        %v2696 = vld [vmem:[#allocation10 + $0x28] sm:$0xff]
        %v2697 = vld [vmem:[#allocation10 + $0x30] sm:$0xff]
        %v2698 = vld [vmem:[#allocation10 + $0x38] sm:$0xff]
        %v2699 = vld [vmem:[#allocation10 + $0x40] sm:$0xff]
        %v2700 = vld [vmem:[#allocation10 + $0x48] sm:$0xff]
        %v2701 = vld [vmem:[#allocation10 + $0x50] sm:$0xff]
        %v2702 = vld [vmem:[#allocation10 + $0x58] sm:$0xff]
        %v2703 = vld [vmem:[#allocation10 + $0x60] sm:$0xff]
        %v2704 = vld [vmem:[#allocation10 + $0x68] sm:$0xff]
        %v2705 = vld [vmem:[#allocation10 + $0x70] sm:$0xff]
        %v2706 = vld [vmem:[#allocation10 + $0x78] sm:$0xff]
        %v2707 = vld [vmem:[#allocation10 + $0x80] sm:$0xff]
        %v2708 = vld [vmem:[#allocation10 + $0x88] sm:$0xff]
        %v2709 = vld [vmem:[#allocation10 + $0x90] sm:$0xff]
        %v2710 = vld [vmem:[#allocation10 + $0x98] sm:$0xff]
        %v2711 = vld [vmem:[#allocation10 + $0xa0] sm:$0xff]
        %v2712 = vld [vmem:[#allocation10 + $0xa8] sm:$0xff]
        %v2713 = vld [vmem:[#allocation10 + $0xb0] sm:$0xff]
        %v2714 = vld [vmem:[#allocation10 + $0xb8] sm:$0xff]
        %v2715 = vld [vmem:[#allocation10 + $0xc0] sm:$0xff]
        %v2716 = vld [vmem:[#allocation10 + $0xc8] sm:$0xff]
        %v2717 = vld [vmem:[#allocation10 + $0xd0] sm:$0xff]
        %v2718 = vld [vmem:[#allocation10 + $0xd8] sm:$0xff]
        %v2719 = vld [vmem:[#allocation10 + $0xe0] sm:$0xff]
        %v2720 = vld [vmem:[#allocation10 + $0xe8] sm:$0xff]
        %v2721 = vld [vmem:[#allocation10 + $0xf0] sm:$0xff]
        %v2722 = vld [vmem:[#allocation10 + $0xf8] sm:$0xff]
        %v2723 = vld [vmem:[%s6] sm:$0x3]
        %v2725 = vperm.slane %v2723, 0
        %v2726 = vperm.slane %v2723, 1
        %v2761 = vunpack.c.l.b16 %v2691
        %v2762 = vunpack.c.h.b16 %v2691
        %v2763 = vunpack.c.l.b16 %v2692
        %v2764 = vunpack.c.h.b16 %v2692
        %v2765 = vunpack.c.l.b16 %v2693
        %v2766 = vunpack.c.h.b16 %v2693
        %v2767 = vunpack.c.l.b16 %v2694
        %v2768 = vunpack.c.h.b16 %v2694
        %v2769 = vunpack.c.l.b16 %v2695
        %v2770 = vunpack.c.h.b16 %v2695
        %v2771 = vunpack.c.l.b16 %v2696
        %v2772 = vunpack.c.h.b16 %v2696
        %v2773 = vunpack.c.l.b16 %v2697
        %v2774 = vunpack.c.h.b16 %v2697
        %v2775 = vunpack.c.l.b16 %v2698
        %v2776 = vunpack.c.h.b16 %v2698
        %v2777 = vunpack.c.l.b16 %v2699
        %v2778 = vunpack.c.h.b16 %v2699
        %v2779 = vunpack.c.l.b16 %v2700
        %v2780 = vunpack.c.h.b16 %v2700
        %v2781 = vunpack.c.l.b16 %v2701
        %v2782 = vunpack.c.h.b16 %v2701
        %v2783 = vunpack.c.l.b16 %v2702
        %v2784 = vunpack.c.h.b16 %v2702
        %v2785 = vunpack.c.l.b16 %v2703
        %v2786 = vunpack.c.h.b16 %v2703
        %v2787 = vunpack.c.l.b16 %v2704
        %v2788 = vunpack.c.h.b16 %v2704
        %v2789 = vunpack.c.l.b16 %v2705
        %v2790 = vunpack.c.h.b16 %v2705
        %v2791 = vunpack.c.l.b16 %v2706
        %v2792 = vunpack.c.h.b16 %v2706
        %v2793 = vunpack.c.l.b16 %v2707
        %v2794 = vunpack.c.h.b16 %v2707
        %v2795 = vunpack.c.l.b16 %v2708
        %v2796 = vunpack.c.h.b16 %v2708
        %v2797 = vunpack.c.l.b16 %v2709
        %v2798 = vunpack.c.h.b16 %v2709
        %v2799 = vunpack.c.l.b16 %v2710
        %v2800 = vunpack.c.h.b16 %v2710
        %v2801 = vunpack.c.l.b16 %v2711
        %v2802 = vunpack.c.h.b16 %v2711
        %v2803 = vunpack.c.l.b16 %v2712
        %v2804 = vunpack.c.h.b16 %v2712
        %v2805 = vunpack.c.l.b16 %v2713
        %v2806 = vunpack.c.h.b16 %v2713
        %v2807 = vunpack.c.l.b16 %v2714
        %v2808 = vunpack.c.h.b16 %v2714
        %v2809 = vunpack.c.l.b16 %v2715
        %v2810 = vunpack.c.h.b16 %v2715
        %v2811 = vunpack.c.l.b16 %v2716
        %v2812 = vunpack.c.h.b16 %v2716
        %v2813 = vunpack.c.l.b16 %v2717
        %v2814 = vunpack.c.h.b16 %v2717
        %v2815 = vunpack.c.l.b16 %v2718
        %v2816 = vunpack.c.h.b16 %v2718
        %v2817 = vunpack.c.l.b16 %v2719
        %v2818 = vunpack.c.h.b16 %v2719
        %v2819 = vunpack.c.l.b16 %v2720
        %v2820 = vunpack.c.h.b16 %v2720
        %v2821 = vunpack.c.l.b16 %v2721
        %v2822 = vunpack.c.h.b16 %v2721
        %v2823 = vunpack.c.l.b16 %v2722
        %v2824 = vunpack.c.h.b16 %v2722
        %v2825 = vpack.c.b16 %v2763, %v2761
        %v2826 = vpack.c.b16 %v2764, %v2762
        %v2827 = vpack.c.b16 %v2767, %v2765
        %v2828 = vpack.c.b16 %v2768, %v2766
        %v2829 = vpack.c.b16 %v2771, %v2769
        %v2830 = vpack.c.b16 %v2772, %v2770
        %v2831 = vpack.c.b16 %v2775, %v2773
        %v2832 = vpack.c.b16 %v2776, %v2774
        %v2833 = vpack.c.b16 %v2779, %v2777
        %v2834 = vpack.c.b16 %v2780, %v2778
        %v2835 = vpack.c.b16 %v2783, %v2781
        %v2836 = vpack.c.b16 %v2784, %v2782
        %v2837 = vpack.c.b16 %v2787, %v2785
        %v2838 = vpack.c.b16 %v2788, %v2786
        %v2839 = vpack.c.b16 %v2791, %v2789
        %v2840 = vpack.c.b16 %v2792, %v2790
        %v2841 = vpack.c.b16 %v2795, %v2793
        %v2842 = vpack.c.b16 %v2796, %v2794
        %v2843 = vpack.c.b16 %v2799, %v2797
        %v2844 = vpack.c.b16 %v2800, %v2798
        %v2845 = vpack.c.b16 %v2803, %v2801
        %v2846 = vpack.c.b16 %v2804, %v2802
        %v2847 = vpack.c.b16 %v2807, %v2805
        %v2848 = vpack.c.b16 %v2808, %v2806
        %v2849 = vpack.c.b16 %v2811, %v2809
        %v2850 = vpack.c.b16 %v2812, %v2810
        %v2851 = vpack.c.b16 %v2815, %v2813
        %v2852 = vpack.c.b16 %v2816, %v2814
        %v2853 = vpack.c.b16 %v2819, %v2817
        %v2854 = vpack.c.b16 %v2820, %v2818
        %v2855 = vpack.c.b16 %v2823, %v2821
        %v2856 = vpack.c.b16 %v2824, %v2822
        %2889 = vmatpush.bf16.msra.mxu0 %v2839
        %2890 = vmatpush.bf16.msra.mxu0 %v2837
        %2891 = vmatpush.bf16.msra.mxu0 %v2835
        %2892 = vmatpush.bf16.msra.mxu0 %v2833
        %2893 = vmatpush.bf16.msra.mxu0 %v2831
        %2894 = vmatpush.bf16.msra.mxu0 %v2829
        %2895 = vmatpush.bf16.msra.mxu0 %v2827
        %2896 = vmatpush.bf16.msra.mxu0 %v2825
        %2897 = vmatmul.bf16.gmra.mxu0 %v2675
        %v2898 = vpop.f32.mrf.mxu0
        %v2899 = vadd.f32 %v2725, %v2898
        %v2900 = vpop.f32.mrf.mxu0
        %v2901 = vadd.f32 %v2725, %v2900
        %2902 = vmatmul.bf16.gmra.mxu0 %v2677
        %v2903 = vpop.f32.mrf.mxu0
        %v2904 = vadd.f32 %v2725, %v2903
        %v2905 = vpop.f32.mrf.mxu0
        %v2906 = vadd.f32 %v2725, %v2905
        %2907 = vmatmul.bf16.gmra.mxu0 %v2679
        %v2908 = vpop.f32.mrf.mxu0
        %v2909 = vadd.f32 %v2725, %v2908
        %v2910 = vpop.f32.mrf.mxu0
        %v2911 = vadd.f32 %v2725, %v2910
        %2912 = vmatmul.bf16.gmra.mxu0 %v2681
        %v2913 = vpop.f32.mrf.mxu0
        %v2914 = vadd.f32 %v2725, %v2913
        %v2915 = vpop.f32.mrf.mxu0
        %v2916 = vadd.f32 %v2725, %v2915
        %2917 = vmatmul.bf16.gmra.mxu0 %v2683
        %v2918 = vpop.f32.mrf.mxu0
        %v2919 = vadd.f32 %v2725, %v2918
        %v2920 = vpop.f32.mrf.mxu0
        %v2921 = vadd.f32 %v2725, %v2920
        %2922 = vmatmul.bf16.gmra.mxu0 %v2685
        %v2923 = vpop.f32.mrf.mxu0
        %v2924 = vadd.f32 %v2725, %v2923
        %v2925 = vpop.f32.mrf.mxu0
        %v2926 = vadd.f32 %v2725, %v2925
        %2927 = vmatmul.bf16.gmra.mxu0 %v2687
        %v2928 = vpop.f32.mrf.mxu0
        %v2929 = vadd.f32 %v2725, %v2928
        %v2930 = vpop.f32.mrf.mxu0
        %v2931 = vadd.f32 %v2725, %v2930
        %2932 = vmatmul.bf16.gmra.mxu0 %v2689
        %v2933 = vpop.f32.mrf.mxu0
        %v2934 = vadd.f32 %v2725, %v2933
        %v2935 = vpop.f32.mrf.mxu0
        %v2936 = vadd.f32 %v2725, %v2935
        %2937 = vdwg.mxu0
        %2938 = vmatpush.bf16.msra.mxu0 %v2855
        %2939 = vmatpush.bf16.msra.mxu0 %v2853
        %2940 = vmatpush.bf16.msra.mxu0 %v2851
        %2941 = vmatpush.bf16.msra.mxu0 %v2849
        %2942 = vmatpush.bf16.msra.mxu0 %v2847
        %2943 = vmatpush.bf16.msra.mxu0 %v2845
        %2944 = vmatpush.bf16.msra.mxu0 %v2843
        %2945 = vmatpush.bf16.msra.mxu0 %v2841
        %2946 = vmatmul.bf16.gmra.mxu0 %v2676
        %v2947 = vpop.f32.mrf.mxu0
        %v2948 = vadd.f32 %v2899, %v2947
        %v2949 = vpop.f32.mrf.mxu0
        %v2950 = vadd.f32 %v2901, %v2949
        %2951 = vmatmul.bf16.gmra.mxu0 %v2678
        %v2952 = vpop.f32.mrf.mxu0
        %v2953 = vadd.f32 %v2904, %v2952
        %v2954 = vpop.f32.mrf.mxu0
        %v2955 = vadd.f32 %v2906, %v2954
        %2956 = vmatmul.bf16.gmra.mxu0 %v2680
        %v2957 = vpop.f32.mrf.mxu0
        %v2958 = vadd.f32 %v2909, %v2957
        %v2959 = vpop.f32.mrf.mxu0
        %v2960 = vadd.f32 %v2911, %v2959
        %2961 = vmatmul.bf16.gmra.mxu0 %v2682
        %v2962 = vpop.f32.mrf.mxu0
        %v2963 = vadd.f32 %v2914, %v2962
        %v2964 = vpop.f32.mrf.mxu0
        %v2965 = vadd.f32 %v2916, %v2964
        %2966 = vmatmul.bf16.gmra.mxu0 %v2684
        %v2967 = vpop.f32.mrf.mxu0
        %v2968 = vadd.f32 %v2919, %v2967
        %v2969 = vpop.f32.mrf.mxu0
        %v2970 = vadd.f32 %v2921, %v2969
        %2971 = vmatmul.bf16.gmra.mxu0 %v2686
        %v2972 = vpop.f32.mrf.mxu0
        %v2973 = vadd.f32 %v2924, %v2972
        %v2974 = vpop.f32.mrf.mxu0
        %v2975 = vadd.f32 %v2926, %v2974
        %2976 = vmatmul.bf16.gmra.mxu0 %v2688
        %v2977 = vpop.f32.mrf.mxu0
        %v2978 = vadd.f32 %v2929, %v2977
        %v2979 = vpop.f32.mrf.mxu0
        %v2980 = vadd.f32 %v2931, %v2979
        %2981 = vmatmul.bf16.gmra.mxu0 %v2690
        %v2982 = vpop.f32.mrf.mxu0
        %v2983 = vadd.f32 %v2934, %v2982
        %v2984 = vpop.f32.mrf.mxu0
        %v2985 = vadd.f32 %v2936, %v2984
        %2986 = vdwg.mxu0
        %2987 = vmatpush.bf16.msra.mxu0 %v2840
        %2988 = vmatpush.bf16.msra.mxu0 %v2838
        %2989 = vmatpush.bf16.msra.mxu0 %v2836
        %2990 = vmatpush.bf16.msra.mxu0 %v2834
        %2991 = vmatpush.bf16.msra.mxu0 %v2832
        %2992 = vmatpush.bf16.msra.mxu0 %v2830
        %2993 = vmatpush.bf16.msra.mxu0 %v2828
        %2994 = vmatpush.bf16.msra.mxu0 %v2826
        %2995 = vmatmul.bf16.gmra.mxu0 %v2675
        %v2996 = vpop.f32.mrf.mxu0
        %v2997 = vadd.f32 %v2726, %v2996
        %v2998 = vpop.f32.mrf.mxu0
        %v2999 = vadd.f32 %v2726, %v2998
        %3000 = vmatmul.bf16.gmra.mxu0 %v2677
        %v3001 = vpop.f32.mrf.mxu0
        %v3002 = vadd.f32 %v2726, %v3001
        %v3003 = vpop.f32.mrf.mxu0
        %v3004 = vadd.f32 %v2726, %v3003
        %3005 = vmatmul.bf16.gmra.mxu0 %v2679
        %v3006 = vpop.f32.mrf.mxu0
        %v3007 = vadd.f32 %v2726, %v3006
        %v3008 = vpop.f32.mrf.mxu0
        %v3009 = vadd.f32 %v2726, %v3008
        %3010 = vmatmul.bf16.gmra.mxu0 %v2681
        %v3011 = vpop.f32.mrf.mxu0
        %v3012 = vadd.f32 %v2726, %v3011
        %v3013 = vpop.f32.mrf.mxu0
        %v3014 = vadd.f32 %v2726, %v3013
        %3015 = vmatmul.bf16.gmra.mxu0 %v2683
        %v3016 = vpop.f32.mrf.mxu0
        %v3017 = vadd.f32 %v2726, %v3016
        %v3018 = vpop.f32.mrf.mxu0
        %v3019 = vadd.f32 %v2726, %v3018
        %3020 = vmatmul.bf16.gmra.mxu0 %v2685
        %v3021 = vpop.f32.mrf.mxu0
        %v3022 = vadd.f32 %v2726, %v3021
        %v3023 = vpop.f32.mrf.mxu0
        %v3024 = vadd.f32 %v2726, %v3023
        %3025 = vmatmul.bf16.gmra.mxu0 %v2687
        %v3026 = vpop.f32.mrf.mxu0
        %v3027 = vadd.f32 %v2726, %v3026
        %v3028 = vpop.f32.mrf.mxu0
        %v3029 = vadd.f32 %v2726, %v3028
        %3030 = vmatmul.bf16.gmra.mxu0 %v2689
        %v3031 = vpop.f32.mrf.mxu0
        %v3032 = vadd.f32 %v2726, %v3031
        %v3033 = vpop.f32.mrf.mxu0
        %v3034 = vadd.f32 %v2726, %v3033
        %3035 = vdwg.mxu0
        %3036 = vmatpush.bf16.msra.mxu0 %v2856
        %3037 = vmatpush.bf16.msra.mxu0 %v2854
        %3038 = vmatpush.bf16.msra.mxu0 %v2852
        %3039 = vmatpush.bf16.msra.mxu0 %v2850
        %3040 = vmatpush.bf16.msra.mxu0 %v2848
        %3041 = vmatpush.bf16.msra.mxu0 %v2846
        %3042 = vmatpush.bf16.msra.mxu0 %v2844
        %3043 = vmatpush.bf16.msra.mxu0 %v2842
        %3044 = vmatmul.bf16.gmra.mxu0 %v2676
        %v3045 = vpop.f32.mrf.mxu0
        %v3046 = vadd.f32 %v2997, %v3045
        %v3047 = vpop.f32.mrf.mxu0
        %v3048 = vadd.f32 %v2999, %v3047
        %3049 = vmatmul.bf16.gmra.mxu0 %v2678
        %v3050 = vpop.f32.mrf.mxu0
        %v3051 = vadd.f32 %v3002, %v3050
        %v3052 = vpop.f32.mrf.mxu0
        %v3053 = vadd.f32 %v3004, %v3052
        %3054 = vmatmul.bf16.gmra.mxu0 %v2680
        %v3055 = vpop.f32.mrf.mxu0
        %v3056 = vadd.f32 %v3007, %v3055
        %v3057 = vpop.f32.mrf.mxu0
        %v3058 = vadd.f32 %v3009, %v3057
        %3059 = vmatmul.bf16.gmra.mxu0 %v2682
        %v3060 = vpop.f32.mrf.mxu0
        %v3061 = vadd.f32 %v3012, %v3060
        %v3062 = vpop.f32.mrf.mxu0
        %v3063 = vadd.f32 %v3014, %v3062
        %3064 = vmatmul.bf16.gmra.mxu0 %v2684
        %v3065 = vpop.f32.mrf.mxu0
        %v3066 = vadd.f32 %v3017, %v3065
        %v3067 = vpop.f32.mrf.mxu0
        %v3068 = vadd.f32 %v3019, %v3067
        %3069 = vmatmul.bf16.gmra.mxu0 %v2686
        %v3070 = vpop.f32.mrf.mxu0
        %v3071 = vadd.f32 %v3022, %v3070
        %v3072 = vpop.f32.mrf.mxu0
        %v3073 = vadd.f32 %v3024, %v3072
        %3074 = vmatmul.bf16.gmra.mxu0 %v2688
        %v3075 = vpop.f32.mrf.mxu0
        %v3076 = vadd.f32 %v3027, %v3075
        %v3077 = vpop.f32.mrf.mxu0
        %v3078 = vadd.f32 %v3029, %v3077
        %3079 = vmatmul.bf16.gmra.mxu0 %v2690
        %v3080 = vpop.f32.mrf.mxu0
        %v3081 = vadd.f32 %v3032, %v3080
        %v3082 = vpop.f32.mrf.mxu0
        %v3083 = vadd.f32 %v3034, %v3082
        %3084 = vdwg.mxu0
        %v3085 = vmax.f32 %v2948, 0.0
        %v3086 = vmax.f32 %v3046, 0.0
        %v3087 = vmax.f32 %v2950, 0.0
        %v3088 = vmax.f32 %v3048, 0.0
        %v3089 = vmax.f32 %v2953, 0.0
        %v3090 = vmax.f32 %v3051, 0.0
        %v3091 = vmax.f32 %v2955, 0.0
        %v3092 = vmax.f32 %v3053, 0.0
        %v3093 = vmax.f32 %v2958, 0.0
        %v3094 = vmax.f32 %v3056, 0.0
        %v3095 = vmax.f32 %v2960, 0.0
        %v3096 = vmax.f32 %v3058, 0.0
        %v3097 = vmax.f32 %v2963, 0.0
        %v3098 = vmax.f32 %v3061, 0.0
        %v3099 = vmax.f32 %v2965, 0.0
        %v3100 = vmax.f32 %v3063, 0.0
        %v3101 = vmax.f32 %v2968, 0.0
        %v3102 = vmax.f32 %v3066, 0.0
        %v3103 = vmax.f32 %v2970, 0.0
        %v3104 = vmax.f32 %v3068, 0.0
        %v3105 = vmax.f32 %v2973, 0.0
        %v3106 = vmax.f32 %v3071, 0.0
        %v3107 = vmax.f32 %v2975, 0.0
        %v3108 = vmax.f32 %v3073, 0.0
        %v3109 = vmax.f32 %v2978, 0.0
        %v3110 = vmax.f32 %v3076, 0.0
        %v3111 = vmax.f32 %v2980, 0.0
        %v3112 = vmax.f32 %v3078, 0.0
        %v3113 = vmax.f32 %v2983, 0.0
        %v3114 = vmax.f32 %v3081, 0.0
        %v3115 = vmax.f32 %v2985, 0.0
        %v3116 = vmax.f32 %v3083, 0.0
        %v3117 = vpack.c.bf16 %v3087, %v3085
        %v3118 = vpack.c.bf16 %v3088, %v3086
        %v3119 = vpack.c.bf16 %v3091, %v3089
        %v3120 = vpack.c.bf16 %v3092, %v3090
        %v3121 = vpack.c.bf16 %v3095, %v3093
        %v3122 = vpack.c.bf16 %v3096, %v3094
        %v3123 = vpack.c.bf16 %v3099, %v3097
        %v3124 = vpack.c.bf16 %v3100, %v3098
        %v3125 = vpack.c.bf16 %v3103, %v3101
        %v3126 = vpack.c.bf16 %v3104, %v3102
        %v3127 = vpack.c.bf16 %v3107, %v3105
        %v3128 = vpack.c.bf16 %v3108, %v3106
        %v3129 = vpack.c.bf16 %v3111, %v3109
        %v3130 = vpack.c.bf16 %v3112, %v3110
        %v3131 = vpack.c.bf16 %v3115, %v3113
        %v3132 = vpack.c.bf16 %v3116, %v3114
        %v3133 = vld [vmem:[#allocation11] sm:$0xff]
        %v3134 = vld [vmem:[#allocation11 + $0x8] sm:$0xff]
        %v3135 = vld [vmem:[#allocation11 + $0x10] sm:$0xff]
        %v3136 = vld [vmem:[#allocation11 + $0x18] sm:$0xff]
        %v3137 = vld [vmem:[#allocation11 + $0x20] sm:$0xff]
        %v3138 = vld [vmem:[#allocation11 + $0x28] sm:$0xff]
        %v3139 = vld [vmem:[#allocation11 + $0x30] sm:$0xff]
        %v3140 = vld [vmem:[#allocation11 + $0x38] sm:$0xff]
        %v3141 = vld [vmem:[#allocation11 + $0x40] sm:$0xff]
        %v3142 = vld [vmem:[#allocation11 + $0x48] sm:$0xff]
        %v3143 = vld [vmem:[#allocation11 + $0x50] sm:$0xff]
        %v3144 = vld [vmem:[#allocation11 + $0x58] sm:$0xff]
        %v3145 = vld [vmem:[#allocation11 + $0x60] sm:$0xff]
        %v3146 = vld [vmem:[#allocation11 + $0x68] sm:$0xff]
        %v3147 = vld [vmem:[#allocation11 + $0x70] sm:$0xff]
        %v3148 = vld [vmem:[#allocation11 + $0x78] sm:$0xff]
        %v3149 = vld [vmem:[#allocation11 + $0x80] sm:$0xff]
        %v3150 = vld [vmem:[#allocation11 + $0x88] sm:$0xff]
        %v3151 = vld [vmem:[#allocation11 + $0x90] sm:$0xff]
        %v3152 = vld [vmem:[#allocation11 + $0x98] sm:$0xff]
        %v3153 = vld [vmem:[#allocation11 + $0xa0] sm:$0xff]
        %v3154 = vld [vmem:[#allocation11 + $0xa8] sm:$0xff]
        %v3155 = vld [vmem:[#allocation11 + $0xb0] sm:$0xff]
        %v3156 = vld [vmem:[#allocation11 + $0xb8] sm:$0xff]
        %v3157 = vld [vmem:[#allocation11 + $0xc0] sm:$0xff]
        %v3158 = vld [vmem:[#allocation11 + $0xc8] sm:$0xff]
        %v3159 = vld [vmem:[#allocation11 + $0xd0] sm:$0xff]
        %v3160 = vld [vmem:[#allocation11 + $0xd8] sm:$0xff]
        %v3161 = vld [vmem:[#allocation11 + $0xe0] sm:$0xff]
        %v3162 = vld [vmem:[#allocation11 + $0xe8] sm:$0xff]
        %v3163 = vld [vmem:[#allocation11 + $0xf0] sm:$0xff]
        %v3164 = vld [vmem:[#allocation11 + $0xf8] sm:$0xff]
        %v3165 = vld [vmem:[#allocation11 + $0x100] sm:$0xff]
        %v3166 = vld [vmem:[#allocation11 + $0x108] sm:$0xff]
        %v3167 = vld [vmem:[#allocation11 + $0x110] sm:$0xff]
        %v3168 = vld [vmem:[#allocation11 + $0x118] sm:$0xff]
        %v3169 = vld [vmem:[#allocation11 + $0x120] sm:$0xff]
        %v3170 = vld [vmem:[#allocation11 + $0x128] sm:$0xff]
        %v3171 = vld [vmem:[#allocation11 + $0x130] sm:$0xff]
        %v3172 = vld [vmem:[#allocation11 + $0x138] sm:$0xff]
        %v3173 = vld [vmem:[#allocation11 + $0x140] sm:$0xff]
        %v3174 = vld [vmem:[#allocation11 + $0x148] sm:$0xff]
        %v3175 = vld [vmem:[#allocation11 + $0x150] sm:$0xff]
        %v3176 = vld [vmem:[#allocation11 + $0x158] sm:$0xff]
        %v3177 = vld [vmem:[#allocation11 + $0x160] sm:$0xff]
        %v3178 = vld [vmem:[#allocation11 + $0x168] sm:$0xff]
        %v3179 = vld [vmem:[#allocation11 + $0x170] sm:$0xff]
        %v3180 = vld [vmem:[#allocation11 + $0x178] sm:$0xff]
        %v3181 = vld [vmem:[#allocation11 + $0x180] sm:$0xff]
        %v3182 = vld [vmem:[#allocation11 + $0x188] sm:$0xff]
        %v3183 = vld [vmem:[#allocation11 + $0x190] sm:$0xff]
        %v3184 = vld [vmem:[#allocation11 + $0x198] sm:$0xff]
        %v3185 = vld [vmem:[#allocation11 + $0x1a0] sm:$0xff]
        %v3186 = vld [vmem:[#allocation11 + $0x1a8] sm:$0xff]
        %v3187 = vld [vmem:[#allocation11 + $0x1b0] sm:$0xff]
        %v3188 = vld [vmem:[#allocation11 + $0x1b8] sm:$0xff]
        %v3189 = vld [vmem:[#allocation11 + $0x1c0] sm:$0xff]
        %v3190 = vld [vmem:[#allocation11 + $0x1c8] sm:$0xff]
        %v3191 = vld [vmem:[#allocation11 + $0x1d0] sm:$0xff]
        %v3192 = vld [vmem:[#allocation11 + $0x1d8] sm:$0xff]
        %v3193 = vld [vmem:[#allocation11 + $0x1e0] sm:$0xff]
        %v3194 = vld [vmem:[#allocation11 + $0x1e8] sm:$0xff]
        %v3195 = vld [vmem:[#allocation11 + $0x1f0] sm:$0xff]
        %v3196 = vld [vmem:[#allocation11 + $0x1f8] sm:$0xff]
        %v3197 = vld [vmem:[#allocation11 + $0x200] sm:$0xff]
        %v3198 = vld [vmem:[#allocation11 + $0x208] sm:$0xff]
        %v3199 = vld [vmem:[#allocation11 + $0x210] sm:$0xff]
        %v3200 = vld [vmem:[#allocation11 + $0x218] sm:$0xff]
        %v3201 = vld [vmem:[#allocation11 + $0x220] sm:$0xff]
        %v3202 = vld [vmem:[#allocation11 + $0x228] sm:$0xff]
        %v3203 = vld [vmem:[#allocation11 + $0x230] sm:$0xff]
        %v3204 = vld [vmem:[#allocation11 + $0x238] sm:$0xff]
        %v3205 = vld [vmem:[#allocation11 + $0x240] sm:$0xff]
        %v3206 = vld [vmem:[#allocation11 + $0x248] sm:$0xff]
        %v3207 = vld [vmem:[#allocation11 + $0x250] sm:$0xff]
        %v3208 = vld [vmem:[#allocation11 + $0x258] sm:$0xff]
        %v3209 = vld [vmem:[#allocation11 + $0x260] sm:$0xff]
        %v3210 = vld [vmem:[#allocation11 + $0x268] sm:$0xff]
        %v3211 = vld [vmem:[#allocation11 + $0x270] sm:$0xff]
        %v3212 = vld [vmem:[#allocation11 + $0x278] sm:$0xff]
        %v3213 = vld [vmem:[#allocation11 + $0x280] sm:$0xff]
        %v3214 = vld [vmem:[#allocation11 + $0x288] sm:$0xff]
        %v3215 = vld [vmem:[#allocation11 + $0x290] sm:$0xff]
        %v3216 = vld [vmem:[#allocation11 + $0x298] sm:$0xff]
        %v3217 = vld [vmem:[#allocation11 + $0x2a0] sm:$0xff]
        %v3218 = vld [vmem:[#allocation11 + $0x2a8] sm:$0xff]
        %v3219 = vld [vmem:[#allocation11 + $0x2b0] sm:$0xff]
        %v3220 = vld [vmem:[#allocation11 + $0x2b8] sm:$0xff]
        %v3221 = vld [vmem:[#allocation11 + $0x2c0] sm:$0xff]
        %v3222 = vld [vmem:[#allocation11 + $0x2c8] sm:$0xff]
        %v3223 = vld [vmem:[#allocation11 + $0x2d0] sm:$0xff]
        %v3224 = vld [vmem:[#allocation11 + $0x2d8] sm:$0xff]
        %v3225 = vld [vmem:[#allocation11 + $0x2e0] sm:$0xff]
        %v3226 = vld [vmem:[#allocation11 + $0x2e8] sm:$0xff]
        %v3227 = vld [vmem:[#allocation11 + $0x2f0] sm:$0xff]
        %v3228 = vld [vmem:[#allocation11 + $0x2f8] sm:$0xff]
        %v3229 = vld [vmem:[#allocation11 + $0x300] sm:$0xff]
        %v3230 = vld [vmem:[#allocation11 + $0x308] sm:$0xff]
        %v3231 = vld [vmem:[#allocation11 + $0x310] sm:$0xff]
        %v3232 = vld [vmem:[#allocation11 + $0x318] sm:$0xff]
        %v3233 = vld [vmem:[#allocation11 + $0x320] sm:$0xff]
        %v3234 = vld [vmem:[#allocation11 + $0x328] sm:$0xff]
        %v3235 = vld [vmem:[#allocation11 + $0x330] sm:$0xff]
        %v3236 = vld [vmem:[#allocation11 + $0x338] sm:$0xff]
        %v3237 = vld [vmem:[#allocation11 + $0x340] sm:$0xff]
        %v3238 = vld [vmem:[#allocation11 + $0x348] sm:$0xff]
        %v3239 = vld [vmem:[#allocation11 + $0x350] sm:$0xff]
        %v3240 = vld [vmem:[#allocation11 + $0x358] sm:$0xff]
        %v3241 = vld [vmem:[#allocation11 + $0x360] sm:$0xff]
        %v3242 = vld [vmem:[#allocation11 + $0x368] sm:$0xff]
        %v3243 = vld [vmem:[#allocation11 + $0x370] sm:$0xff]
        %v3244 = vld [vmem:[#allocation11 + $0x378] sm:$0xff]
        %v3245 = vld [vmem:[#allocation11 + $0x380] sm:$0xff]
        %v3246 = vld [vmem:[#allocation11 + $0x388] sm:$0xff]
        %v3247 = vld [vmem:[#allocation11 + $0x390] sm:$0xff]
        %v3248 = vld [vmem:[#allocation11 + $0x398] sm:$0xff]
        %v3249 = vld [vmem:[#allocation11 + $0x3a0] sm:$0xff]
        %v3250 = vld [vmem:[#allocation11 + $0x3a8] sm:$0xff]
        %v3251 = vld [vmem:[#allocation11 + $0x3b0] sm:$0xff]
        %v3252 = vld [vmem:[#allocation11 + $0x3b8] sm:$0xff]
        %v3253 = vld [vmem:[#allocation11 + $0x3c0] sm:$0xff]
        %v3254 = vld [vmem:[#allocation11 + $0x3c8] sm:$0xff]
        %v3255 = vld [vmem:[#allocation11 + $0x3d0] sm:$0xff]
        %v3256 = vld [vmem:[#allocation11 + $0x3d8] sm:$0xff]
        %v3257 = vld [vmem:[#allocation11 + $0x3e0] sm:$0xff]
        %v3258 = vld [vmem:[#allocation11 + $0x3e8] sm:$0xff]
        %v3259 = vld [vmem:[#allocation11 + $0x3f0] sm:$0xff]
        %v3260 = vld [vmem:[#allocation11 + $0x3f8] sm:$0xff]
        %v3261 = vld [vmem:[#allocation13] sm:$0xff]
        %v3263 = vperm.slane %v3261, 0
        %v3264 = vperm.slane %v3261, 1
        %v3265 = vperm.slane %v3261, 2
        %v3266 = vperm.slane %v3261, 3
        %v3267 = vperm.slane %v3261, 4
        %v3268 = vperm.slane %v3261, 5
        %v3269 = vperm.slane %v3261, 6
        %v3270 = vperm.slane %v3261, 7
        %v3407 = vunpack.c.l.b16 %v3133
        %v3408 = vunpack.c.h.b16 %v3133
        %v3409 = vunpack.c.l.b16 %v3134
        %v3410 = vunpack.c.h.b16 %v3134
        %v3411 = vunpack.c.l.b16 %v3135
        %v3412 = vunpack.c.h.b16 %v3135
        %v3413 = vunpack.c.l.b16 %v3136
        %v3414 = vunpack.c.h.b16 %v3136
        %v3415 = vunpack.c.l.b16 %v3137
        %v3416 = vunpack.c.h.b16 %v3137
        %v3417 = vunpack.c.l.b16 %v3138
        %v3418 = vunpack.c.h.b16 %v3138
        %v3419 = vunpack.c.l.b16 %v3139
        %v3420 = vunpack.c.h.b16 %v3139
        %v3421 = vunpack.c.l.b16 %v3140
        %v3422 = vunpack.c.h.b16 %v3140
        %v3423 = vunpack.c.l.b16 %v3141
        %v3424 = vunpack.c.h.b16 %v3141
        %v3425 = vunpack.c.l.b16 %v3142
        %v3426 = vunpack.c.h.b16 %v3142
        %v3427 = vunpack.c.l.b16 %v3143
        %v3428 = vunpack.c.h.b16 %v3143
        %v3429 = vunpack.c.l.b16 %v3144
        %v3430 = vunpack.c.h.b16 %v3144
        %v3431 = vunpack.c.l.b16 %v3145
        %v3432 = vunpack.c.h.b16 %v3145
        %v3433 = vunpack.c.l.b16 %v3146
        %v3434 = vunpack.c.h.b16 %v3146
        %v3435 = vunpack.c.l.b16 %v3147
        %v3436 = vunpack.c.h.b16 %v3147
        %v3437 = vunpack.c.l.b16 %v3148
        %v3438 = vunpack.c.h.b16 %v3148
        %v3439 = vunpack.c.l.b16 %v3149
        %v3440 = vunpack.c.h.b16 %v3149
        %v3441 = vunpack.c.l.b16 %v3150
        %v3442 = vunpack.c.h.b16 %v3150
        %v3443 = vunpack.c.l.b16 %v3151
        %v3444 = vunpack.c.h.b16 %v3151
        %v3445 = vunpack.c.l.b16 %v3152
        %v3446 = vunpack.c.h.b16 %v3152
        %v3447 = vunpack.c.l.b16 %v3153
        %v3448 = vunpack.c.h.b16 %v3153
        %v3449 = vunpack.c.l.b16 %v3154
        %v3450 = vunpack.c.h.b16 %v3154
        %v3451 = vunpack.c.l.b16 %v3155
        %v3452 = vunpack.c.h.b16 %v3155
        %v3453 = vunpack.c.l.b16 %v3156
        %v3454 = vunpack.c.h.b16 %v3156
        %v3455 = vunpack.c.l.b16 %v3157
        %v3456 = vunpack.c.h.b16 %v3157
        %v3457 = vunpack.c.l.b16 %v3158
        %v3458 = vunpack.c.h.b16 %v3158
        %v3459 = vunpack.c.l.b16 %v3159
        %v3460 = vunpack.c.h.b16 %v3159
        %v3461 = vunpack.c.l.b16 %v3160
        %v3462 = vunpack.c.h.b16 %v3160
        %v3463 = vunpack.c.l.b16 %v3161
        %v3464 = vunpack.c.h.b16 %v3161
        %v3465 = vunpack.c.l.b16 %v3162
        %v3466 = vunpack.c.h.b16 %v3162
        %v3467 = vunpack.c.l.b16 %v3163
        %v3468 = vunpack.c.h.b16 %v3163
        %v3469 = vunpack.c.l.b16 %v3164
        %v3470 = vunpack.c.h.b16 %v3164
        %v3471 = vunpack.c.l.b16 %v3165
        %v3472 = vunpack.c.h.b16 %v3165
        %v3473 = vunpack.c.l.b16 %v3166
        %v3474 = vunpack.c.h.b16 %v3166
        %v3475 = vunpack.c.l.b16 %v3167
        %v3476 = vunpack.c.h.b16 %v3167
        %v3477 = vunpack.c.l.b16 %v3168
        %v3478 = vunpack.c.h.b16 %v3168
        %v3479 = vunpack.c.l.b16 %v3169
        %v3480 = vunpack.c.h.b16 %v3169
        %v3481 = vunpack.c.l.b16 %v3170
        %v3482 = vunpack.c.h.b16 %v3170
        %v3483 = vunpack.c.l.b16 %v3171
        %v3484 = vunpack.c.h.b16 %v3171
        %v3485 = vunpack.c.l.b16 %v3172
        %v3486 = vunpack.c.h.b16 %v3172
        %v3487 = vunpack.c.l.b16 %v3173
        %v3488 = vunpack.c.h.b16 %v3173
        %v3489 = vunpack.c.l.b16 %v3174
        %v3490 = vunpack.c.h.b16 %v3174
        %v3491 = vunpack.c.l.b16 %v3175
        %v3492 = vunpack.c.h.b16 %v3175
        %v3493 = vunpack.c.l.b16 %v3176
        %v3494 = vunpack.c.h.b16 %v3176
        %v3495 = vunpack.c.l.b16 %v3177
        %v3496 = vunpack.c.h.b16 %v3177
        %v3497 = vunpack.c.l.b16 %v3178
        %v3498 = vunpack.c.h.b16 %v3178
        %v3499 = vunpack.c.l.b16 %v3179
        %v3500 = vunpack.c.h.b16 %v3179
        %v3501 = vunpack.c.l.b16 %v3180
        %v3502 = vunpack.c.h.b16 %v3180
        %v3503 = vunpack.c.l.b16 %v3181
        %v3504 = vunpack.c.h.b16 %v3181
        %v3505 = vunpack.c.l.b16 %v3182
        %v3506 = vunpack.c.h.b16 %v3182
        %v3507 = vunpack.c.l.b16 %v3183
        %v3508 = vunpack.c.h.b16 %v3183
        %v3509 = vunpack.c.l.b16 %v3184
        %v3510 = vunpack.c.h.b16 %v3184
        %v3511 = vunpack.c.l.b16 %v3185
        %v3512 = vunpack.c.h.b16 %v3185
        %v3513 = vunpack.c.l.b16 %v3186
        %v3514 = vunpack.c.h.b16 %v3186
        %v3515 = vunpack.c.l.b16 %v3187
        %v3516 = vunpack.c.h.b16 %v3187
        %v3517 = vunpack.c.l.b16 %v3188
        %v3518 = vunpack.c.h.b16 %v3188
        %v3519 = vunpack.c.l.b16 %v3189
        %v3520 = vunpack.c.h.b16 %v3189
        %v3521 = vunpack.c.l.b16 %v3190
        %v3522 = vunpack.c.h.b16 %v3190
        %v3523 = vunpack.c.l.b16 %v3191
        %v3524 = vunpack.c.h.b16 %v3191
        %v3525 = vunpack.c.l.b16 %v3192
        %v3526 = vunpack.c.h.b16 %v3192
        %v3527 = vunpack.c.l.b16 %v3193
        %v3528 = vunpack.c.h.b16 %v3193
        %v3529 = vunpack.c.l.b16 %v3194
        %v3530 = vunpack.c.h.b16 %v3194
        %v3531 = vunpack.c.l.b16 %v3195
        %v3532 = vunpack.c.h.b16 %v3195
        %v3533 = vunpack.c.l.b16 %v3196
        %v3534 = vunpack.c.h.b16 %v3196
        %v3535 = vunpack.c.l.b16 %v3197
        %v3536 = vunpack.c.h.b16 %v3197
        %v3537 = vunpack.c.l.b16 %v3198
        %v3538 = vunpack.c.h.b16 %v3198
        %v3539 = vunpack.c.l.b16 %v3199
        %v3540 = vunpack.c.h.b16 %v3199
        %v3541 = vunpack.c.l.b16 %v3200
        %v3542 = vunpack.c.h.b16 %v3200
        %v3543 = vunpack.c.l.b16 %v3201
        %v3544 = vunpack.c.h.b16 %v3201
        %v3545 = vunpack.c.l.b16 %v3202
        %v3546 = vunpack.c.h.b16 %v3202
        %v3547 = vunpack.c.l.b16 %v3203
        %v3548 = vunpack.c.h.b16 %v3203
        %v3549 = vunpack.c.l.b16 %v3204
        %v3550 = vunpack.c.h.b16 %v3204
        %v3551 = vunpack.c.l.b16 %v3205
        %v3552 = vunpack.c.h.b16 %v3205
        %v3553 = vunpack.c.l.b16 %v3206
        %v3554 = vunpack.c.h.b16 %v3206
        %v3555 = vunpack.c.l.b16 %v3207
        %v3556 = vunpack.c.h.b16 %v3207
        %v3557 = vunpack.c.l.b16 %v3208
        %v3558 = vunpack.c.h.b16 %v3208
        %v3559 = vunpack.c.l.b16 %v3209
        %v3560 = vunpack.c.h.b16 %v3209
        %v3561 = vunpack.c.l.b16 %v3210
        %v3562 = vunpack.c.h.b16 %v3210
        %v3563 = vunpack.c.l.b16 %v3211
        %v3564 = vunpack.c.h.b16 %v3211
        %v3565 = vunpack.c.l.b16 %v3212
        %v3566 = vunpack.c.h.b16 %v3212
        %v3567 = vunpack.c.l.b16 %v3213
        %v3568 = vunpack.c.h.b16 %v3213
        %v3569 = vunpack.c.l.b16 %v3214
        %v3570 = vunpack.c.h.b16 %v3214
        %v3571 = vunpack.c.l.b16 %v3215
        %v3572 = vunpack.c.h.b16 %v3215
        %v3573 = vunpack.c.l.b16 %v3216
        %v3574 = vunpack.c.h.b16 %v3216
        %v3575 = vunpack.c.l.b16 %v3217
        %v3576 = vunpack.c.h.b16 %v3217
        %v3577 = vunpack.c.l.b16 %v3218
        %v3578 = vunpack.c.h.b16 %v3218
        %v3579 = vunpack.c.l.b16 %v3219
        %v3580 = vunpack.c.h.b16 %v3219
        %v3581 = vunpack.c.l.b16 %v3220
        %v3582 = vunpack.c.h.b16 %v3220
        %v3583 = vunpack.c.l.b16 %v3221
        %v3584 = vunpack.c.h.b16 %v3221
        %v3585 = vunpack.c.l.b16 %v3222
        %v3586 = vunpack.c.h.b16 %v3222
        %v3587 = vunpack.c.l.b16 %v3223
        %v3588 = vunpack.c.h.b16 %v3223
        %v3589 = vunpack.c.l.b16 %v3224
        %v3590 = vunpack.c.h.b16 %v3224
        %v3591 = vunpack.c.l.b16 %v3225
        %v3592 = vunpack.c.h.b16 %v3225
        %v3593 = vunpack.c.l.b16 %v3226
        %v3594 = vunpack.c.h.b16 %v3226
        %v3595 = vunpack.c.l.b16 %v3227
        %v3596 = vunpack.c.h.b16 %v3227
        %v3597 = vunpack.c.l.b16 %v3228
        %v3598 = vunpack.c.h.b16 %v3228
        %v3599 = vunpack.c.l.b16 %v3229
        %v3600 = vunpack.c.h.b16 %v3229
        %v3601 = vunpack.c.l.b16 %v3230
        %v3602 = vunpack.c.h.b16 %v3230
        %v3603 = vunpack.c.l.b16 %v3231
        %v3604 = vunpack.c.h.b16 %v3231
        %v3605 = vunpack.c.l.b16 %v3232
        %v3606 = vunpack.c.h.b16 %v3232
        %v3607 = vunpack.c.l.b16 %v3233
        %v3608 = vunpack.c.h.b16 %v3233
        %v3609 = vunpack.c.l.b16 %v3234
        %v3610 = vunpack.c.h.b16 %v3234
        %v3611 = vunpack.c.l.b16 %v3235
        %v3612 = vunpack.c.h.b16 %v3235
        %v3613 = vunpack.c.l.b16 %v3236
        %v3614 = vunpack.c.h.b16 %v3236
        %v3615 = vunpack.c.l.b16 %v3237
        %v3616 = vunpack.c.h.b16 %v3237
        %v3617 = vunpack.c.l.b16 %v3238
        %v3618 = vunpack.c.h.b16 %v3238
        %v3619 = vunpack.c.l.b16 %v3239
        %v3620 = vunpack.c.h.b16 %v3239
        %v3621 = vunpack.c.l.b16 %v3240
        %v3622 = vunpack.c.h.b16 %v3240
        %v3623 = vunpack.c.l.b16 %v3241
        %v3624 = vunpack.c.h.b16 %v3241
        %v3625 = vunpack.c.l.b16 %v3242
        %v3626 = vunpack.c.h.b16 %v3242
        %v3627 = vunpack.c.l.b16 %v3243
        %v3628 = vunpack.c.h.b16 %v3243
        %v3629 = vunpack.c.l.b16 %v3244
        %v3630 = vunpack.c.h.b16 %v3244
        %v3631 = vunpack.c.l.b16 %v3245
        %v3632 = vunpack.c.h.b16 %v3245
        %v3633 = vunpack.c.l.b16 %v3246
        %v3634 = vunpack.c.h.b16 %v3246
        %v3635 = vunpack.c.l.b16 %v3247
        %v3636 = vunpack.c.h.b16 %v3247
        %v3637 = vunpack.c.l.b16 %v3248
        %v3638 = vunpack.c.h.b16 %v3248
        %v3639 = vunpack.c.l.b16 %v3249
        %v3640 = vunpack.c.h.b16 %v3249
        %v3641 = vunpack.c.l.b16 %v3250
        %v3642 = vunpack.c.h.b16 %v3250
        %v3643 = vunpack.c.l.b16 %v3251
        %v3644 = vunpack.c.h.b16 %v3251
        %v3645 = vunpack.c.l.b16 %v3252
        %v3646 = vunpack.c.h.b16 %v3252
        %v3647 = vunpack.c.l.b16 %v3253
        %v3648 = vunpack.c.h.b16 %v3253
        %v3649 = vunpack.c.l.b16 %v3254
        %v3650 = vunpack.c.h.b16 %v3254
        %v3651 = vunpack.c.l.b16 %v3255
        %v3652 = vunpack.c.h.b16 %v3255
        %v3653 = vunpack.c.l.b16 %v3256
        %v3654 = vunpack.c.h.b16 %v3256
        %v3655 = vunpack.c.l.b16 %v3257
        %v3656 = vunpack.c.h.b16 %v3257
        %v3657 = vunpack.c.l.b16 %v3258
        %v3658 = vunpack.c.h.b16 %v3258
        %v3659 = vunpack.c.l.b16 %v3259
        %v3660 = vunpack.c.h.b16 %v3259
        %v3661 = vunpack.c.l.b16 %v3260
        %v3662 = vunpack.c.h.b16 %v3260
        %v3663 = vpack.c.b16 %v3415, %v3407
        %v3664 = vpack.c.b16 %v3416, %v3408
        %v3665 = vpack.c.b16 %v3417, %v3409
        %v3666 = vpack.c.b16 %v3418, %v3410
        %v3667 = vpack.c.b16 %v3419, %v3411
        %v3668 = vpack.c.b16 %v3420, %v3412
        %v3669 = vpack.c.b16 %v3421, %v3413
        %v3670 = vpack.c.b16 %v3422, %v3414
        %v3671 = vpack.c.b16 %v3431, %v3423
        %v3672 = vpack.c.b16 %v3432, %v3424
        %v3673 = vpack.c.b16 %v3433, %v3425
        %v3674 = vpack.c.b16 %v3434, %v3426
        %v3675 = vpack.c.b16 %v3435, %v3427
        %v3676 = vpack.c.b16 %v3436, %v3428
        %v3677 = vpack.c.b16 %v3437, %v3429
        %v3678 = vpack.c.b16 %v3438, %v3430
        %v3679 = vpack.c.b16 %v3447, %v3439
        %v3680 = vpack.c.b16 %v3448, %v3440
        %v3681 = vpack.c.b16 %v3449, %v3441
        %v3682 = vpack.c.b16 %v3450, %v3442
        %v3683 = vpack.c.b16 %v3451, %v3443
        %v3684 = vpack.c.b16 %v3452, %v3444
        %v3685 = vpack.c.b16 %v3453, %v3445
        %v3686 = vpack.c.b16 %v3454, %v3446
        %v3687 = vpack.c.b16 %v3463, %v3455
        %v3688 = vpack.c.b16 %v3464, %v3456
        %v3689 = vpack.c.b16 %v3465, %v3457
        %v3690 = vpack.c.b16 %v3466, %v3458
        %v3691 = vpack.c.b16 %v3467, %v3459
        %v3692 = vpack.c.b16 %v3468, %v3460
        %v3693 = vpack.c.b16 %v3469, %v3461
        %v3694 = vpack.c.b16 %v3470, %v3462
        %v3695 = vpack.c.b16 %v3479, %v3471
        %v3696 = vpack.c.b16 %v3480, %v3472
        %v3697 = vpack.c.b16 %v3481, %v3473
        %v3698 = vpack.c.b16 %v3482, %v3474
        %v3699 = vpack.c.b16 %v3483, %v3475
        %v3700 = vpack.c.b16 %v3484, %v3476
        %v3701 = vpack.c.b16 %v3485, %v3477
        %v3702 = vpack.c.b16 %v3486, %v3478
        %v3703 = vpack.c.b16 %v3495, %v3487
        %v3704 = vpack.c.b16 %v3496, %v3488
        %v3705 = vpack.c.b16 %v3497, %v3489
        %v3706 = vpack.c.b16 %v3498, %v3490
        %v3707 = vpack.c.b16 %v3499, %v3491
        %v3708 = vpack.c.b16 %v3500, %v3492
        %v3709 = vpack.c.b16 %v3501, %v3493
        %v3710 = vpack.c.b16 %v3502, %v3494
        %v3711 = vpack.c.b16 %v3511, %v3503
        %v3712 = vpack.c.b16 %v3512, %v3504
        %v3713 = vpack.c.b16 %v3513, %v3505
        %v3714 = vpack.c.b16 %v3514, %v3506
        %v3715 = vpack.c.b16 %v3515, %v3507
        %v3716 = vpack.c.b16 %v3516, %v3508
        %v3717 = vpack.c.b16 %v3517, %v3509
        %v3718 = vpack.c.b16 %v3518, %v3510
        %v3719 = vpack.c.b16 %v3527, %v3519
        %v3720 = vpack.c.b16 %v3528, %v3520
        %v3721 = vpack.c.b16 %v3529, %v3521
        %v3722 = vpack.c.b16 %v3530, %v3522
        %v3723 = vpack.c.b16 %v3531, %v3523
        %v3724 = vpack.c.b16 %v3532, %v3524
        %v3725 = vpack.c.b16 %v3533, %v3525
        %v3726 = vpack.c.b16 %v3534, %v3526
        %v3727 = vpack.c.b16 %v3543, %v3535
        %v3728 = vpack.c.b16 %v3544, %v3536
        %v3729 = vpack.c.b16 %v3545, %v3537
        %v3730 = vpack.c.b16 %v3546, %v3538
        %v3731 = vpack.c.b16 %v3547, %v3539
        %v3732 = vpack.c.b16 %v3548, %v3540
        %v3733 = vpack.c.b16 %v3549, %v3541
        %v3734 = vpack.c.b16 %v3550, %v3542
        %v3735 = vpack.c.b16 %v3559, %v3551
        %v3736 = vpack.c.b16 %v3560, %v3552
        %v3737 = vpack.c.b16 %v3561, %v3553
        %v3738 = vpack.c.b16 %v3562, %v3554
        %v3739 = vpack.c.b16 %v3563, %v3555
        %v3740 = vpack.c.b16 %v3564, %v3556
        %v3741 = vpack.c.b16 %v3565, %v3557
        %v3742 = vpack.c.b16 %v3566, %v3558
        %v3743 = vpack.c.b16 %v3575, %v3567
        %v3744 = vpack.c.b16 %v3576, %v3568
        %v3745 = vpack.c.b16 %v3577, %v3569
        %v3746 = vpack.c.b16 %v3578, %v3570
        %v3747 = vpack.c.b16 %v3579, %v3571
        %v3748 = vpack.c.b16 %v3580, %v3572
        %v3749 = vpack.c.b16 %v3581, %v3573
        %v3750 = vpack.c.b16 %v3582, %v3574
        %v3751 = vpack.c.b16 %v3591, %v3583
        %v3752 = vpack.c.b16 %v3592, %v3584
        %v3753 = vpack.c.b16 %v3593, %v3585
        %v3754 = vpack.c.b16 %v3594, %v3586
        %v3755 = vpack.c.b16 %v3595, %v3587
        %v3756 = vpack.c.b16 %v3596, %v3588
        %v3757 = vpack.c.b16 %v3597, %v3589
        %v3758 = vpack.c.b16 %v3598, %v3590
        %v3759 = vpack.c.b16 %v3607, %v3599
        %v3760 = vpack.c.b16 %v3608, %v3600
        %v3761 = vpack.c.b16 %v3609, %v3601
        %v3762 = vpack.c.b16 %v3610, %v3602
        %v3763 = vpack.c.b16 %v3611, %v3603
        %v3764 = vpack.c.b16 %v3612, %v3604
        %v3765 = vpack.c.b16 %v3613, %v3605
        %v3766 = vpack.c.b16 %v3614, %v3606
        %v3767 = vpack.c.b16 %v3623, %v3615
        %v3768 = vpack.c.b16 %v3624, %v3616
        %v3769 = vpack.c.b16 %v3625, %v3617
        %v3770 = vpack.c.b16 %v3626, %v3618
        %v3771 = vpack.c.b16 %v3627, %v3619
        %v3772 = vpack.c.b16 %v3628, %v3620
        %v3773 = vpack.c.b16 %v3629, %v3621
        %v3774 = vpack.c.b16 %v3630, %v3622
        %v3775 = vpack.c.b16 %v3639, %v3631
        %v3776 = vpack.c.b16 %v3640, %v3632
        %v3777 = vpack.c.b16 %v3641, %v3633
        %v3778 = vpack.c.b16 %v3642, %v3634
        %v3779 = vpack.c.b16 %v3643, %v3635
        %v3780 = vpack.c.b16 %v3644, %v3636
        %v3781 = vpack.c.b16 %v3645, %v3637
        %v3782 = vpack.c.b16 %v3646, %v3638
        %v3783 = vpack.c.b16 %v3655, %v3647
        %v3784 = vpack.c.b16 %v3656, %v3648
        %v3785 = vpack.c.b16 %v3657, %v3649
        %v3786 = vpack.c.b16 %v3658, %v3650
        %v3787 = vpack.c.b16 %v3659, %v3651
        %v3788 = vpack.c.b16 %v3660, %v3652
        %v3789 = vpack.c.b16 %v3661, %v3653
        %v3790 = vpack.c.b16 %v3662, %v3654
        %3919 = vmatpush.bf16.msra.mxu0 %v3719
        %3920 = vmatpush.bf16.msra.mxu0 %v3711
        %3921 = vmatpush.bf16.msra.mxu0 %v3703
        %3922 = vmatpush.bf16.msra.mxu0 %v3695
        %3923 = vmatpush.bf16.msra.mxu0 %v3687
        %3924 = vmatpush.bf16.msra.mxu0 %v3679
        %3925 = vmatpush.bf16.msra.mxu0 %v3671
        %3926 = vmatpush.bf16.msra.mxu0 %v3663
        %3927 = vmatmul.bf16.gmra.mxu0 %v3117
        %v3928 = vpop.f32.mrf.mxu0
        %v3929 = vadd.f32 %v3263, %v3928
        %v3930 = vpop.f32.mrf.mxu0
        %v3931 = vadd.f32 %v3263, %v3930
        %3932 = vmatmul.bf16.gmra.mxu0 %v3119
        %v3933 = vpop.f32.mrf.mxu0
        %v3934 = vadd.f32 %v3263, %v3933
        %v3935 = vpop.f32.mrf.mxu0
        %v3936 = vadd.f32 %v3263, %v3935
        %3937 = vmatmul.bf16.gmra.mxu0 %v3121
        %v3938 = vpop.f32.mrf.mxu0
        %v3939 = vadd.f32 %v3263, %v3938
        %v3940 = vpop.f32.mrf.mxu0
        %v3941 = vadd.f32 %v3263, %v3940
        %3942 = vmatmul.bf16.gmra.mxu0 %v3123
        %v3943 = vpop.f32.mrf.mxu0
        %v3944 = vadd.f32 %v3263, %v3943
        %v3945 = vpop.f32.mrf.mxu0
        %v3946 = vadd.f32 %v3263, %v3945
        %3947 = vmatmul.bf16.gmra.mxu0 %v3125
        %v3948 = vpop.f32.mrf.mxu0
        %v3949 = vadd.f32 %v3263, %v3948
        %v3950 = vpop.f32.mrf.mxu0
        %v3951 = vadd.f32 %v3263, %v3950
        %3952 = vmatmul.bf16.gmra.mxu0 %v3127
        %v3953 = vpop.f32.mrf.mxu0
        %v3954 = vadd.f32 %v3263, %v3953
        %v3955 = vpop.f32.mrf.mxu0
        %v3956 = vadd.f32 %v3263, %v3955
        %3957 = vmatmul.bf16.gmra.mxu0 %v3129
        %v3958 = vpop.f32.mrf.mxu0
        %v3959 = vadd.f32 %v3263, %v3958
        %v3960 = vpop.f32.mrf.mxu0
        %v3961 = vadd.f32 %v3263, %v3960
        %3962 = vmatmul.bf16.gmra.mxu0 %v3131
        %v3963 = vpop.f32.mrf.mxu0
        %v3964 = vadd.f32 %v3263, %v3963
        %v3965 = vpop.f32.mrf.mxu0
        %v3966 = vadd.f32 %v3263, %v3965
        %3967 = vdwg.mxu0
        %3968 = vmatpush.bf16.msra.mxu0 %v3783
        %3969 = vmatpush.bf16.msra.mxu0 %v3775
        %3970 = vmatpush.bf16.msra.mxu0 %v3767
        %3971 = vmatpush.bf16.msra.mxu0 %v3759
        %3972 = vmatpush.bf16.msra.mxu0 %v3751
        %3973 = vmatpush.bf16.msra.mxu0 %v3743
        %3974 = vmatpush.bf16.msra.mxu0 %v3735
        %3975 = vmatpush.bf16.msra.mxu0 %v3727
        %3976 = vmatmul.bf16.gmra.mxu0 %v3118
        %v3977 = vpop.f32.mrf.mxu0
        %v3978 = vadd.f32 %v3929, %v3977
        %v3979 = vpop.f32.mrf.mxu0
        %v3980 = vadd.f32 %v3931, %v3979
        %3981 = vmatmul.bf16.gmra.mxu0 %v3120
        %v3982 = vpop.f32.mrf.mxu0
        %v3983 = vadd.f32 %v3934, %v3982
        %v3984 = vpop.f32.mrf.mxu0
        %v3985 = vadd.f32 %v3936, %v3984
        %3986 = vmatmul.bf16.gmra.mxu0 %v3122
        %v3987 = vpop.f32.mrf.mxu0
        %v3988 = vadd.f32 %v3939, %v3987
        %v3989 = vpop.f32.mrf.mxu0
        %v3990 = vadd.f32 %v3941, %v3989
        %3991 = vmatmul.bf16.gmra.mxu0 %v3124
        %v3992 = vpop.f32.mrf.mxu0
        %v3993 = vadd.f32 %v3944, %v3992
        %v3994 = vpop.f32.mrf.mxu0
        %v3995 = vadd.f32 %v3946, %v3994
        %3996 = vmatmul.bf16.gmra.mxu0 %v3126
        %v3997 = vpop.f32.mrf.mxu0
        %v3998 = vadd.f32 %v3949, %v3997
        %v3999 = vpop.f32.mrf.mxu0
        %v4000 = vadd.f32 %v3951, %v3999
        %4001 = vmatmul.bf16.gmra.mxu0 %v3128
        %v4002 = vpop.f32.mrf.mxu0
        %v4003 = vadd.f32 %v3954, %v4002
        %v4004 = vpop.f32.mrf.mxu0
        %v4005 = vadd.f32 %v3956, %v4004
        %4006 = vmatmul.bf16.gmra.mxu0 %v3130
        %v4007 = vpop.f32.mrf.mxu0
        %v4008 = vadd.f32 %v3959, %v4007
        %v4009 = vpop.f32.mrf.mxu0
        %v4010 = vadd.f32 %v3961, %v4009
        %4011 = vmatmul.bf16.gmra.mxu0 %v3132
        %v4012 = vpop.f32.mrf.mxu0
        %v4013 = vadd.f32 %v3964, %v4012
        %v4014 = vpop.f32.mrf.mxu0
        %v4015 = vadd.f32 %v3966, %v4014
        %4016 = vdwg.mxu0
        %4017 = vmatpush.bf16.msra.mxu0 %v3720
        %4018 = vmatpush.bf16.msra.mxu0 %v3712
        %4019 = vmatpush.bf16.msra.mxu0 %v3704
        %4020 = vmatpush.bf16.msra.mxu0 %v3696
        %4021 = vmatpush.bf16.msra.mxu0 %v3688
        %4022 = vmatpush.bf16.msra.mxu0 %v3680
        %4023 = vmatpush.bf16.msra.mxu0 %v3672
        %4024 = vmatpush.bf16.msra.mxu0 %v3664
        %4025 = vmatmul.bf16.gmra.mxu0 %v3117
        %v4026 = vpop.f32.mrf.mxu0
        %v4027 = vadd.f32 %v3264, %v4026
        %v4028 = vpop.f32.mrf.mxu0
        %v4029 = vadd.f32 %v3264, %v4028
        %4030 = vmatmul.bf16.gmra.mxu0 %v3119
        %v4031 = vpop.f32.mrf.mxu0
        %v4032 = vadd.f32 %v3264, %v4031
        %v4033 = vpop.f32.mrf.mxu0
        %v4034 = vadd.f32 %v3264, %v4033
        %4035 = vmatmul.bf16.gmra.mxu0 %v3121
        %v4036 = vpop.f32.mrf.mxu0
        %v4037 = vadd.f32 %v3264, %v4036
        %v4038 = vpop.f32.mrf.mxu0
        %v4039 = vadd.f32 %v3264, %v4038
        %4040 = vmatmul.bf16.gmra.mxu0 %v3123
        %v4041 = vpop.f32.mrf.mxu0
        %v4042 = vadd.f32 %v3264, %v4041
        %v4043 = vpop.f32.mrf.mxu0
        %v4044 = vadd.f32 %v3264, %v4043
        %4045 = vmatmul.bf16.gmra.mxu0 %v3125
        %v4046 = vpop.f32.mrf.mxu0
        %v4047 = vadd.f32 %v3264, %v4046
        %v4048 = vpop.f32.mrf.mxu0
        %v4049 = vadd.f32 %v3264, %v4048
        %4050 = vmatmul.bf16.gmra.mxu0 %v3127
        %v4051 = vpop.f32.mrf.mxu0
        %v4052 = vadd.f32 %v3264, %v4051
        %v4053 = vpop.f32.mrf.mxu0
        %v4054 = vadd.f32 %v3264, %v4053
        %4055 = vmatmul.bf16.gmra.mxu0 %v3129
        %v4056 = vpop.f32.mrf.mxu0
        %v4057 = vadd.f32 %v3264, %v4056
        %v4058 = vpop.f32.mrf.mxu0
        %v4059 = vadd.f32 %v3264, %v4058
        %4060 = vmatmul.bf16.gmra.mxu0 %v3131
        %v4061 = vpop.f32.mrf.mxu0
        %v4062 = vadd.f32 %v3264, %v4061
        %v4063 = vpop.f32.mrf.mxu0
        %v4064 = vadd.f32 %v3264, %v4063
        %4065 = vdwg.mxu0
        %4066 = vmatpush.bf16.msra.mxu0 %v3784
        %4067 = vmatpush.bf16.msra.mxu0 %v3776
        %4068 = vmatpush.bf16.msra.mxu0 %v3768
        %4069 = vmatpush.bf16.msra.mxu0 %v3760
        %4070 = vmatpush.bf16.msra.mxu0 %v3752
        %4071 = vmatpush.bf16.msra.mxu0 %v3744
        %4072 = vmatpush.bf16.msra.mxu0 %v3736
        %4073 = vmatpush.bf16.msra.mxu0 %v3728
        %4074 = vmatmul.bf16.gmra.mxu0 %v3118
        %v4075 = vpop.f32.mrf.mxu0
        %v4076 = vadd.f32 %v4027, %v4075
        %v4077 = vpop.f32.mrf.mxu0
        %v4078 = vadd.f32 %v4029, %v4077
        %4079 = vmatmul.bf16.gmra.mxu0 %v3120
        %v4080 = vpop.f32.mrf.mxu0
        %v4081 = vadd.f32 %v4032, %v4080
        %v4082 = vpop.f32.mrf.mxu0
        %v4083 = vadd.f32 %v4034, %v4082
        %4084 = vmatmul.bf16.gmra.mxu0 %v3122
        %v4085 = vpop.f32.mrf.mxu0
        %v4086 = vadd.f32 %v4037, %v4085
        %v4087 = vpop.f32.mrf.mxu0
        %v4088 = vadd.f32 %v4039, %v4087
        %4089 = vmatmul.bf16.gmra.mxu0 %v3124
        %v4090 = vpop.f32.mrf.mxu0
        %v4091 = vadd.f32 %v4042, %v4090
        %v4092 = vpop.f32.mrf.mxu0
        %v4093 = vadd.f32 %v4044, %v4092
        %4094 = vmatmul.bf16.gmra.mxu0 %v3126
        %v4095 = vpop.f32.mrf.mxu0
        %v4096 = vadd.f32 %v4047, %v4095
        %v4097 = vpop.f32.mrf.mxu0
        %v4098 = vadd.f32 %v4049, %v4097
        %4099 = vmatmul.bf16.gmra.mxu0 %v3128
        %v4100 = vpop.f32.mrf.mxu0
        %v4101 = vadd.f32 %v4052, %v4100
        %v4102 = vpop.f32.mrf.mxu0
        %v4103 = vadd.f32 %v4054, %v4102
        %4104 = vmatmul.bf16.gmra.mxu0 %v3130
        %v4105 = vpop.f32.mrf.mxu0
        %v4106 = vadd.f32 %v4057, %v4105
        %v4107 = vpop.f32.mrf.mxu0
        %v4108 = vadd.f32 %v4059, %v4107
        %4109 = vmatmul.bf16.gmra.mxu0 %v3132
        %v4110 = vpop.f32.mrf.mxu0
        %v4111 = vadd.f32 %v4062, %v4110
        %v4112 = vpop.f32.mrf.mxu0
        %v4113 = vadd.f32 %v4064, %v4112
        %4114 = vdwg.mxu0
        %4115 = vmatpush.bf16.msra.mxu0 %v3721
        %4116 = vmatpush.bf16.msra.mxu0 %v3713
        %4117 = vmatpush.bf16.msra.mxu0 %v3705
        %4118 = vmatpush.bf16.msra.mxu0 %v3697
        %4119 = vmatpush.bf16.msra.mxu0 %v3689
        %4120 = vmatpush.bf16.msra.mxu0 %v3681
        %4121 = vmatpush.bf16.msra.mxu0 %v3673
        %4122 = vmatpush.bf16.msra.mxu0 %v3665
        %4123 = vmatmul.bf16.gmra.mxu0 %v3117
        %v4124 = vpop.f32.mrf.mxu0
        %v4125 = vadd.f32 %v3265, %v4124
        %v4126 = vpop.f32.mrf.mxu0
        %v4127 = vadd.f32 %v3265, %v4126
        %4128 = vmatmul.bf16.gmra.mxu0 %v3119
        %v4129 = vpop.f32.mrf.mxu0
        %v4130 = vadd.f32 %v3265, %v4129
        %v4131 = vpop.f32.mrf.mxu0
        %v4132 = vadd.f32 %v3265, %v4131
        %4133 = vmatmul.bf16.gmra.mxu0 %v3121
        %v4134 = vpop.f32.mrf.mxu0
        %v4135 = vadd.f32 %v3265, %v4134
        %v4136 = vpop.f32.mrf.mxu0
        %v4137 = vadd.f32 %v3265, %v4136
        %4138 = vmatmul.bf16.gmra.mxu0 %v3123
        %v4139 = vpop.f32.mrf.mxu0
        %v4140 = vadd.f32 %v3265, %v4139
        %v4141 = vpop.f32.mrf.mxu0
        %v4142 = vadd.f32 %v3265, %v4141
        %4143 = vmatmul.bf16.gmra.mxu0 %v3125
        %v4144 = vpop.f32.mrf.mxu0
        %v4145 = vadd.f32 %v3265, %v4144
        %v4146 = vpop.f32.mrf.mxu0
        %v4147 = vadd.f32 %v3265, %v4146
        %4148 = vmatmul.bf16.gmra.mxu0 %v3127
        %v4149 = vpop.f32.mrf.mxu0
        %v4150 = vadd.f32 %v3265, %v4149
        %v4151 = vpop.f32.mrf.mxu0
        %v4152 = vadd.f32 %v3265, %v4151
        %4153 = vmatmul.bf16.gmra.mxu0 %v3129
        %v4154 = vpop.f32.mrf.mxu0
        %v4155 = vadd.f32 %v3265, %v4154
        %v4156 = vpop.f32.mrf.mxu0
        %v4157 = vadd.f32 %v3265, %v4156
        %4158 = vmatmul.bf16.gmra.mxu0 %v3131
        %v4159 = vpop.f32.mrf.mxu0
        %v4160 = vadd.f32 %v3265, %v4159
        %v4161 = vpop.f32.mrf.mxu0
        %v4162 = vadd.f32 %v3265, %v4161
        %4163 = vdwg.mxu0
        %4164 = vmatpush.bf16.msra.mxu0 %v3785
        %4165 = vmatpush.bf16.msra.mxu0 %v3777
        %4166 = vmatpush.bf16.msra.mxu0 %v3769
        %4167 = vmatpush.bf16.msra.mxu0 %v3761
        %4168 = vmatpush.bf16.msra.mxu0 %v3753
        %4169 = vmatpush.bf16.msra.mxu0 %v3745
        %4170 = vmatpush.bf16.msra.mxu0 %v3737
        %4171 = vmatpush.bf16.msra.mxu0 %v3729
        %4172 = vmatmul.bf16.gmra.mxu0 %v3118
        %v4173 = vpop.f32.mrf.mxu0
        %v4174 = vadd.f32 %v4125, %v4173
        %v4175 = vpop.f32.mrf.mxu0
        %v4176 = vadd.f32 %v4127, %v4175
        %4177 = vmatmul.bf16.gmra.mxu0 %v3120
        %v4178 = vpop.f32.mrf.mxu0
        %v4179 = vadd.f32 %v4130, %v4178
        %v4180 = vpop.f32.mrf.mxu0
        %v4181 = vadd.f32 %v4132, %v4180
        %4182 = vmatmul.bf16.gmra.mxu0 %v3122
        %v4183 = vpop.f32.mrf.mxu0
        %v4184 = vadd.f32 %v4135, %v4183
        %v4185 = vpop.f32.mrf.mxu0
        %v4186 = vadd.f32 %v4137, %v4185
        %4187 = vmatmul.bf16.gmra.mxu0 %v3124
        %v4188 = vpop.f32.mrf.mxu0
        %v4189 = vadd.f32 %v4140, %v4188
        %v4190 = vpop.f32.mrf.mxu0
        %v4191 = vadd.f32 %v4142, %v4190
        %4192 = vmatmul.bf16.gmra.mxu0 %v3126
        %v4193 = vpop.f32.mrf.mxu0
        %v4194 = vadd.f32 %v4145, %v4193
        %v4195 = vpop.f32.mrf.mxu0
        %v4196 = vadd.f32 %v4147, %v4195
        %4197 = vmatmul.bf16.gmra.mxu0 %v3128
        %v4198 = vpop.f32.mrf.mxu0
        %v4199 = vadd.f32 %v4150, %v4198
        %v4200 = vpop.f32.mrf.mxu0
        %v4201 = vadd.f32 %v4152, %v4200
        %4202 = vmatmul.bf16.gmra.mxu0 %v3130
        %v4203 = vpop.f32.mrf.mxu0
        %v4204 = vadd.f32 %v4155, %v4203
        %v4205 = vpop.f32.mrf.mxu0
        %v4206 = vadd.f32 %v4157, %v4205
        %4207 = vmatmul.bf16.gmra.mxu0 %v3132
        %v4208 = vpop.f32.mrf.mxu0
        %v4209 = vadd.f32 %v4160, %v4208
        %v4210 = vpop.f32.mrf.mxu0
        %v4211 = vadd.f32 %v4162, %v4210
        %4212 = vdwg.mxu0
        %4213 = vmatpush.bf16.msra.mxu0 %v3722
        %4214 = vmatpush.bf16.msra.mxu0 %v3714
        %4215 = vmatpush.bf16.msra.mxu0 %v3706
        %4216 = vmatpush.bf16.msra.mxu0 %v3698
        %4217 = vmatpush.bf16.msra.mxu0 %v3690
        %4218 = vmatpush.bf16.msra.mxu0 %v3682
        %4219 = vmatpush.bf16.msra.mxu0 %v3674
        %4220 = vmatpush.bf16.msra.mxu0 %v3666
        %4221 = vmatmul.bf16.gmra.mxu0 %v3117
        %v4222 = vpop.f32.mrf.mxu0
        %v4223 = vadd.f32 %v3266, %v4222
        %v4224 = vpop.f32.mrf.mxu0
        %v4225 = vadd.f32 %v3266, %v4224
        %4226 = vmatmul.bf16.gmra.mxu0 %v3119
        %v4227 = vpop.f32.mrf.mxu0
        %v4228 = vadd.f32 %v3266, %v4227
        %v4229 = vpop.f32.mrf.mxu0
        %v4230 = vadd.f32 %v3266, %v4229
        %4231 = vmatmul.bf16.gmra.mxu0 %v3121
        %v4232 = vpop.f32.mrf.mxu0
        %v4233 = vadd.f32 %v3266, %v4232
        %v4234 = vpop.f32.mrf.mxu0
        %v4235 = vadd.f32 %v3266, %v4234
        %4236 = vmatmul.bf16.gmra.mxu0 %v3123
        %v4237 = vpop.f32.mrf.mxu0
        %v4238 = vadd.f32 %v3266, %v4237
        %v4239 = vpop.f32.mrf.mxu0
        %v4240 = vadd.f32 %v3266, %v4239
        %4241 = vmatmul.bf16.gmra.mxu0 %v3125
        %v4242 = vpop.f32.mrf.mxu0
        %v4243 = vadd.f32 %v3266, %v4242
        %v4244 = vpop.f32.mrf.mxu0
        %v4245 = vadd.f32 %v3266, %v4244
        %4246 = vmatmul.bf16.gmra.mxu0 %v3127
        %v4247 = vpop.f32.mrf.mxu0
        %v4248 = vadd.f32 %v3266, %v4247
        %v4249 = vpop.f32.mrf.mxu0
        %v4250 = vadd.f32 %v3266, %v4249
        %4251 = vmatmul.bf16.gmra.mxu0 %v3129
        %v4252 = vpop.f32.mrf.mxu0
        %v4253 = vadd.f32 %v3266, %v4252
        %v4254 = vpop.f32.mrf.mxu0
        %v4255 = vadd.f32 %v3266, %v4254
        %4256 = vmatmul.bf16.gmra.mxu0 %v3131
        %v4257 = vpop.f32.mrf.mxu0
        %v4258 = vadd.f32 %v3266, %v4257
        %v4259 = vpop.f32.mrf.mxu0
        %v4260 = vadd.f32 %v3266, %v4259
        %4261 = vdwg.mxu0
        %4262 = vmatpush.bf16.msra.mxu0 %v3786
        %4263 = vmatpush.bf16.msra.mxu0 %v3778
        %4264 = vmatpush.bf16.msra.mxu0 %v3770
        %4265 = vmatpush.bf16.msra.mxu0 %v3762
        %4266 = vmatpush.bf16.msra.mxu0 %v3754
        %4267 = vmatpush.bf16.msra.mxu0 %v3746
        %4268 = vmatpush.bf16.msra.mxu0 %v3738
        %4269 = vmatpush.bf16.msra.mxu0 %v3730
        %4270 = vmatmul.bf16.gmra.mxu0 %v3118
        %v4271 = vpop.f32.mrf.mxu0
        %v4272 = vadd.f32 %v4223, %v4271
        %v4273 = vpop.f32.mrf.mxu0
        %v4274 = vadd.f32 %v4225, %v4273
        %4275 = vmatmul.bf16.gmra.mxu0 %v3120
        %v4276 = vpop.f32.mrf.mxu0
        %v4277 = vadd.f32 %v4228, %v4276
        %v4278 = vpop.f32.mrf.mxu0
        %v4279 = vadd.f32 %v4230, %v4278
        %4280 = vmatmul.bf16.gmra.mxu0 %v3122
        %v4281 = vpop.f32.mrf.mxu0
        %v4282 = vadd.f32 %v4233, %v4281
        %v4283 = vpop.f32.mrf.mxu0
        %v4284 = vadd.f32 %v4235, %v4283
        %4285 = vmatmul.bf16.gmra.mxu0 %v3124
        %v4286 = vpop.f32.mrf.mxu0
        %v4287 = vadd.f32 %v4238, %v4286
        %v4288 = vpop.f32.mrf.mxu0
        %v4289 = vadd.f32 %v4240, %v4288
        %4290 = vmatmul.bf16.gmra.mxu0 %v3126
        %v4291 = vpop.f32.mrf.mxu0
        %v4292 = vadd.f32 %v4243, %v4291
        %v4293 = vpop.f32.mrf.mxu0
        %v4294 = vadd.f32 %v4245, %v4293
        %4295 = vmatmul.bf16.gmra.mxu0 %v3128
        %v4296 = vpop.f32.mrf.mxu0
        %v4297 = vadd.f32 %v4248, %v4296
        %v4298 = vpop.f32.mrf.mxu0
        %v4299 = vadd.f32 %v4250, %v4298
        %4300 = vmatmul.bf16.gmra.mxu0 %v3130
        %v4301 = vpop.f32.mrf.mxu0
        %v4302 = vadd.f32 %v4253, %v4301
        %v4303 = vpop.f32.mrf.mxu0
        %v4304 = vadd.f32 %v4255, %v4303
        %4305 = vmatmul.bf16.gmra.mxu0 %v3132
        %v4306 = vpop.f32.mrf.mxu0
        %v4307 = vadd.f32 %v4258, %v4306
        %v4308 = vpop.f32.mrf.mxu0
        %v4309 = vadd.f32 %v4260, %v4308
        %4310 = vdwg.mxu0
        %4311 = vmatpush.bf16.msra.mxu0 %v3723
        %4312 = vmatpush.bf16.msra.mxu0 %v3715
        %4313 = vmatpush.bf16.msra.mxu0 %v3707
        %4314 = vmatpush.bf16.msra.mxu0 %v3699
        %4315 = vmatpush.bf16.msra.mxu0 %v3691
        %4316 = vmatpush.bf16.msra.mxu0 %v3683
        %4317 = vmatpush.bf16.msra.mxu0 %v3675
        %4318 = vmatpush.bf16.msra.mxu0 %v3667
        %4319 = vmatmul.bf16.gmra.mxu0 %v3117
        %v4320 = vpop.f32.mrf.mxu0
        %v4321 = vadd.f32 %v3267, %v4320
        %v4322 = vpop.f32.mrf.mxu0
        %v4323 = vadd.f32 %v3267, %v4322
        %4324 = vmatmul.bf16.gmra.mxu0 %v3119
        %v4325 = vpop.f32.mrf.mxu0
        %v4326 = vadd.f32 %v3267, %v4325
        %v4327 = vpop.f32.mrf.mxu0
        %v4328 = vadd.f32 %v3267, %v4327
        %4329 = vmatmul.bf16.gmra.mxu0 %v3121
        %v4330 = vpop.f32.mrf.mxu0
        %v4331 = vadd.f32 %v3267, %v4330
        %v4332 = vpop.f32.mrf.mxu0
        %v4333 = vadd.f32 %v3267, %v4332
        %4334 = vmatmul.bf16.gmra.mxu0 %v3123
        %v4335 = vpop.f32.mrf.mxu0
        %v4336 = vadd.f32 %v3267, %v4335
        %v4337 = vpop.f32.mrf.mxu0
        %v4338 = vadd.f32 %v3267, %v4337
        %4339 = vmatmul.bf16.gmra.mxu0 %v3125
        %v4340 = vpop.f32.mrf.mxu0
        %v4341 = vadd.f32 %v3267, %v4340
        %v4342 = vpop.f32.mrf.mxu0
        %v4343 = vadd.f32 %v3267, %v4342
        %4344 = vmatmul.bf16.gmra.mxu0 %v3127
        %v4345 = vpop.f32.mrf.mxu0
        %v4346 = vadd.f32 %v3267, %v4345
        %v4347 = vpop.f32.mrf.mxu0
        %v4348 = vadd.f32 %v3267, %v4347
        %4349 = vmatmul.bf16.gmra.mxu0 %v3129
        %v4350 = vpop.f32.mrf.mxu0
        %v4351 = vadd.f32 %v3267, %v4350
        %v4352 = vpop.f32.mrf.mxu0
        %v4353 = vadd.f32 %v3267, %v4352
        %4354 = vmatmul.bf16.gmra.mxu0 %v3131
        %v4355 = vpop.f32.mrf.mxu0
        %v4356 = vadd.f32 %v3267, %v4355
        %v4357 = vpop.f32.mrf.mxu0
        %v4358 = vadd.f32 %v3267, %v4357
        %4359 = vdwg.mxu0
        %4360 = vmatpush.bf16.msra.mxu0 %v3787
        %4361 = vmatpush.bf16.msra.mxu0 %v3779
        %4362 = vmatpush.bf16.msra.mxu0 %v3771
        %4363 = vmatpush.bf16.msra.mxu0 %v3763
        %4364 = vmatpush.bf16.msra.mxu0 %v3755
        %4365 = vmatpush.bf16.msra.mxu0 %v3747
        %4366 = vmatpush.bf16.msra.mxu0 %v3739
        %4367 = vmatpush.bf16.msra.mxu0 %v3731
        %4368 = vmatmul.bf16.gmra.mxu0 %v3118
        %v4369 = vpop.f32.mrf.mxu0
        %v4370 = vadd.f32 %v4321, %v4369
        %v4371 = vpop.f32.mrf.mxu0
        %v4372 = vadd.f32 %v4323, %v4371
        %4373 = vmatmul.bf16.gmra.mxu0 %v3120
        %v4374 = vpop.f32.mrf.mxu0
        %v4375 = vadd.f32 %v4326, %v4374
        %v4376 = vpop.f32.mrf.mxu0
        %v4377 = vadd.f32 %v4328, %v4376
        %4378 = vmatmul.bf16.gmra.mxu0 %v3122
        %v4379 = vpop.f32.mrf.mxu0
        %v4380 = vadd.f32 %v4331, %v4379
        %v4381 = vpop.f32.mrf.mxu0
        %v4382 = vadd.f32 %v4333, %v4381
        %4383 = vmatmul.bf16.gmra.mxu0 %v3124
        %v4384 = vpop.f32.mrf.mxu0
        %v4385 = vadd.f32 %v4336, %v4384
        %v4386 = vpop.f32.mrf.mxu0
        %v4387 = vadd.f32 %v4338, %v4386
        %4388 = vmatmul.bf16.gmra.mxu0 %v3126
        %v4389 = vpop.f32.mrf.mxu0
        %v4390 = vadd.f32 %v4341, %v4389
        %v4391 = vpop.f32.mrf.mxu0
        %v4392 = vadd.f32 %v4343, %v4391
        %4393 = vmatmul.bf16.gmra.mxu0 %v3128
        %v4394 = vpop.f32.mrf.mxu0
        %v4395 = vadd.f32 %v4346, %v4394
        %v4396 = vpop.f32.mrf.mxu0
        %v4397 = vadd.f32 %v4348, %v4396
        %4398 = vmatmul.bf16.gmra.mxu0 %v3130
        %v4399 = vpop.f32.mrf.mxu0
        %v4400 = vadd.f32 %v4351, %v4399
        %v4401 = vpop.f32.mrf.mxu0
        %v4402 = vadd.f32 %v4353, %v4401
        %4403 = vmatmul.bf16.gmra.mxu0 %v3132
        %v4404 = vpop.f32.mrf.mxu0
        %v4405 = vadd.f32 %v4356, %v4404
        %v4406 = vpop.f32.mrf.mxu0
        %v4407 = vadd.f32 %v4358, %v4406
        %4408 = vdwg.mxu0
        %4409 = vmatpush.bf16.msra.mxu0 %v3724
        %4410 = vmatpush.bf16.msra.mxu0 %v3716
        %4411 = vmatpush.bf16.msra.mxu0 %v3708
        %4412 = vmatpush.bf16.msra.mxu0 %v3700
        %4413 = vmatpush.bf16.msra.mxu0 %v3692
        %4414 = vmatpush.bf16.msra.mxu0 %v3684
        %4415 = vmatpush.bf16.msra.mxu0 %v3676
        %4416 = vmatpush.bf16.msra.mxu0 %v3668
        %4417 = vmatmul.bf16.gmra.mxu0 %v3117
        %v4418 = vpop.f32.mrf.mxu0
        %v4419 = vadd.f32 %v3268, %v4418
        %v4420 = vpop.f32.mrf.mxu0
        %v4421 = vadd.f32 %v3268, %v4420
        %4422 = vmatmul.bf16.gmra.mxu0 %v3119
        %v4423 = vpop.f32.mrf.mxu0
        %v4424 = vadd.f32 %v3268, %v4423
        %v4425 = vpop.f32.mrf.mxu0
        %v4426 = vadd.f32 %v3268, %v4425
        %4427 = vmatmul.bf16.gmra.mxu0 %v3121
        %v4428 = vpop.f32.mrf.mxu0
        %v4429 = vadd.f32 %v3268, %v4428
        %v4430 = vpop.f32.mrf.mxu0
        %v4431 = vadd.f32 %v3268, %v4430
        %4432 = vmatmul.bf16.gmra.mxu0 %v3123
        %v4433 = vpop.f32.mrf.mxu0
        %v4434 = vadd.f32 %v3268, %v4433
        %v4435 = vpop.f32.mrf.mxu0
        %v4436 = vadd.f32 %v3268, %v4435
        %4437 = vmatmul.bf16.gmra.mxu0 %v3125
        %v4438 = vpop.f32.mrf.mxu0
        %v4439 = vadd.f32 %v3268, %v4438
        %v4440 = vpop.f32.mrf.mxu0
        %v4441 = vadd.f32 %v3268, %v4440
        %4442 = vmatmul.bf16.gmra.mxu0 %v3127
        %v4443 = vpop.f32.mrf.mxu0
        %v4444 = vadd.f32 %v3268, %v4443
        %v4445 = vpop.f32.mrf.mxu0
        %v4446 = vadd.f32 %v3268, %v4445
        %4447 = vmatmul.bf16.gmra.mxu0 %v3129
        %v4448 = vpop.f32.mrf.mxu0
        %v4449 = vadd.f32 %v3268, %v4448
        %v4450 = vpop.f32.mrf.mxu0
        %v4451 = vadd.f32 %v3268, %v4450
        %4452 = vmatmul.bf16.gmra.mxu0 %v3131
        %v4453 = vpop.f32.mrf.mxu0
        %v4454 = vadd.f32 %v3268, %v4453
        %v4455 = vpop.f32.mrf.mxu0
        %v4456 = vadd.f32 %v3268, %v4455
        %4457 = vdwg.mxu0
        %4458 = vmatpush.bf16.msra.mxu0 %v3788
        %4459 = vmatpush.bf16.msra.mxu0 %v3780
        %4460 = vmatpush.bf16.msra.mxu0 %v3772
        %4461 = vmatpush.bf16.msra.mxu0 %v3764
        %4462 = vmatpush.bf16.msra.mxu0 %v3756
        %4463 = vmatpush.bf16.msra.mxu0 %v3748
        %4464 = vmatpush.bf16.msra.mxu0 %v3740
        %4465 = vmatpush.bf16.msra.mxu0 %v3732
        %4466 = vmatmul.bf16.gmra.mxu0 %v3118
        %v4467 = vpop.f32.mrf.mxu0
        %v4468 = vadd.f32 %v4419, %v4467
        %v4469 = vpop.f32.mrf.mxu0
        %v4470 = vadd.f32 %v4421, %v4469
        %4471 = vmatmul.bf16.gmra.mxu0 %v3120
        %v4472 = vpop.f32.mrf.mxu0
        %v4473 = vadd.f32 %v4424, %v4472
        %v4474 = vpop.f32.mrf.mxu0
        %v4475 = vadd.f32 %v4426, %v4474
        %4476 = vmatmul.bf16.gmra.mxu0 %v3122
        %v4477 = vpop.f32.mrf.mxu0
        %v4478 = vadd.f32 %v4429, %v4477
        %v4479 = vpop.f32.mrf.mxu0
        %v4480 = vadd.f32 %v4431, %v4479
        %4481 = vmatmul.bf16.gmra.mxu0 %v3124
        %v4482 = vpop.f32.mrf.mxu0
        %v4483 = vadd.f32 %v4434, %v4482
        %v4484 = vpop.f32.mrf.mxu0
        %v4485 = vadd.f32 %v4436, %v4484
        %4486 = vmatmul.bf16.gmra.mxu0 %v3126
        %v4487 = vpop.f32.mrf.mxu0
        %v4488 = vadd.f32 %v4439, %v4487
        %v4489 = vpop.f32.mrf.mxu0
        %v4490 = vadd.f32 %v4441, %v4489
        %4491 = vmatmul.bf16.gmra.mxu0 %v3128
        %v4492 = vpop.f32.mrf.mxu0
        %v4493 = vadd.f32 %v4444, %v4492
        %v4494 = vpop.f32.mrf.mxu0
        %v4495 = vadd.f32 %v4446, %v4494
        %4496 = vmatmul.bf16.gmra.mxu0 %v3130
        %v4497 = vpop.f32.mrf.mxu0
        %v4498 = vadd.f32 %v4449, %v4497
        %v4499 = vpop.f32.mrf.mxu0
        %v4500 = vadd.f32 %v4451, %v4499
        %4501 = vmatmul.bf16.gmra.mxu0 %v3132
        %v4502 = vpop.f32.mrf.mxu0
        %v4503 = vadd.f32 %v4454, %v4502
        %v4504 = vpop.f32.mrf.mxu0
        %v4505 = vadd.f32 %v4456, %v4504
        %4506 = vdwg.mxu0
        %4507 = vmatpush.bf16.msra.mxu0 %v3725
        %4508 = vmatpush.bf16.msra.mxu0 %v3717
        %4509 = vmatpush.bf16.msra.mxu0 %v3709
        %4510 = vmatpush.bf16.msra.mxu0 %v3701
        %4511 = vmatpush.bf16.msra.mxu0 %v3693
        %4512 = vmatpush.bf16.msra.mxu0 %v3685
        %4513 = vmatpush.bf16.msra.mxu0 %v3677
        %4514 = vmatpush.bf16.msra.mxu0 %v3669
        %4515 = vmatmul.bf16.gmra.mxu0 %v3117
        %v4516 = vpop.f32.mrf.mxu0
        %v4517 = vadd.f32 %v3269, %v4516
        %v4518 = vpop.f32.mrf.mxu0
        %v4519 = vadd.f32 %v3269, %v4518
        %4520 = vmatmul.bf16.gmra.mxu0 %v3119
        %v4521 = vpop.f32.mrf.mxu0
        %v4522 = vadd.f32 %v3269, %v4521
        %v4523 = vpop.f32.mrf.mxu0
        %v4524 = vadd.f32 %v3269, %v4523
        %4525 = vmatmul.bf16.gmra.mxu0 %v3121
        %v4526 = vpop.f32.mrf.mxu0
        %v4527 = vadd.f32 %v3269, %v4526
        %v4528 = vpop.f32.mrf.mxu0
        %v4529 = vadd.f32 %v3269, %v4528
        %4530 = vmatmul.bf16.gmra.mxu0 %v3123
        %v4531 = vpop.f32.mrf.mxu0
        %v4532 = vadd.f32 %v3269, %v4531
        %v4533 = vpop.f32.mrf.mxu0
        %v4534 = vadd.f32 %v3269, %v4533
        %4535 = vmatmul.bf16.gmra.mxu0 %v3125
        %v4536 = vpop.f32.mrf.mxu0
        %v4537 = vadd.f32 %v3269, %v4536
        %v4538 = vpop.f32.mrf.mxu0
        %v4539 = vadd.f32 %v3269, %v4538
        %4540 = vmatmul.bf16.gmra.mxu0 %v3127
        %v4541 = vpop.f32.mrf.mxu0
        %v4542 = vadd.f32 %v3269, %v4541
        %v4543 = vpop.f32.mrf.mxu0
        %v4544 = vadd.f32 %v3269, %v4543
        %4545 = vmatmul.bf16.gmra.mxu0 %v3129
        %v4546 = vpop.f32.mrf.mxu0
        %v4547 = vadd.f32 %v3269, %v4546
        %v4548 = vpop.f32.mrf.mxu0
        %v4549 = vadd.f32 %v3269, %v4548
        %4550 = vmatmul.bf16.gmra.mxu0 %v3131
        %v4551 = vpop.f32.mrf.mxu0
        %v4552 = vadd.f32 %v3269, %v4551
        %v4553 = vpop.f32.mrf.mxu0
        %v4554 = vadd.f32 %v3269, %v4553
        %4555 = vdwg.mxu0
        %4556 = vmatpush.bf16.msra.mxu0 %v3789
        %4557 = vmatpush.bf16.msra.mxu0 %v3781
        %4558 = vmatpush.bf16.msra.mxu0 %v3773
        %4559 = vmatpush.bf16.msra.mxu0 %v3765
        %4560 = vmatpush.bf16.msra.mxu0 %v3757
        %4561 = vmatpush.bf16.msra.mxu0 %v3749
        %4562 = vmatpush.bf16.msra.mxu0 %v3741
        %4563 = vmatpush.bf16.msra.mxu0 %v3733
        %4564 = vmatmul.bf16.gmra.mxu0 %v3118
        %v4565 = vpop.f32.mrf.mxu0
        %v4566 = vadd.f32 %v4517, %v4565
        %v4567 = vpop.f32.mrf.mxu0
        %v4568 = vadd.f32 %v4519, %v4567
        %4569 = vmatmul.bf16.gmra.mxu0 %v3120
        %v4570 = vpop.f32.mrf.mxu0
        %v4571 = vadd.f32 %v4522, %v4570
        %v4572 = vpop.f32.mrf.mxu0
        %v4573 = vadd.f32 %v4524, %v4572
        %4574 = vmatmul.bf16.gmra.mxu0 %v3122
        %v4575 = vpop.f32.mrf.mxu0
        %v4576 = vadd.f32 %v4527, %v4575
        %v4577 = vpop.f32.mrf.mxu0
        %v4578 = vadd.f32 %v4529, %v4577
        %4579 = vmatmul.bf16.gmra.mxu0 %v3124
        %v4580 = vpop.f32.mrf.mxu0
        %v4581 = vadd.f32 %v4532, %v4580
        %v4582 = vpop.f32.mrf.mxu0
        %v4583 = vadd.f32 %v4534, %v4582
        %4584 = vmatmul.bf16.gmra.mxu0 %v3126
        %v4585 = vpop.f32.mrf.mxu0
        %v4586 = vadd.f32 %v4537, %v4585
        %v4587 = vpop.f32.mrf.mxu0
        %v4588 = vadd.f32 %v4539, %v4587
        %4589 = vmatmul.bf16.gmra.mxu0 %v3128
        %v4590 = vpop.f32.mrf.mxu0
        %v4591 = vadd.f32 %v4542, %v4590
        %v4592 = vpop.f32.mrf.mxu0
        %v4593 = vadd.f32 %v4544, %v4592
        %4594 = vmatmul.bf16.gmra.mxu0 %v3130
        %v4595 = vpop.f32.mrf.mxu0
        %v4596 = vadd.f32 %v4547, %v4595
        %v4597 = vpop.f32.mrf.mxu0
        %v4598 = vadd.f32 %v4549, %v4597
        %4599 = vmatmul.bf16.gmra.mxu0 %v3132
        %v4600 = vpop.f32.mrf.mxu0
        %v4601 = vadd.f32 %v4552, %v4600
        %v4602 = vpop.f32.mrf.mxu0
        %v4603 = vadd.f32 %v4554, %v4602
        %4604 = vdwg.mxu0
        %4605 = vmatpush.bf16.msra.mxu0 %v3726
        %4606 = vmatpush.bf16.msra.mxu0 %v3718
        %4607 = vmatpush.bf16.msra.mxu0 %v3710
        %4608 = vmatpush.bf16.msra.mxu0 %v3702
        %4609 = vmatpush.bf16.msra.mxu0 %v3694
        %4610 = vmatpush.bf16.msra.mxu0 %v3686
        %4611 = vmatpush.bf16.msra.mxu0 %v3678
        %4612 = vmatpush.bf16.msra.mxu0 %v3670
        %4613 = vmatmul.bf16.gmra.mxu0 %v3117
        %v4614 = vpop.f32.mrf.mxu0
        %v4615 = vadd.f32 %v3270, %v4614
        %v4616 = vpop.f32.mrf.mxu0
        %v4617 = vadd.f32 %v3270, %v4616
        %4618 = vmatmul.bf16.gmra.mxu0 %v3119
        %v4619 = vpop.f32.mrf.mxu0
        %v4620 = vadd.f32 %v3270, %v4619
        %v4621 = vpop.f32.mrf.mxu0
        %v4622 = vadd.f32 %v3270, %v4621
        %4623 = vmatmul.bf16.gmra.mxu0 %v3121
        %v4624 = vpop.f32.mrf.mxu0
        %v4625 = vadd.f32 %v3270, %v4624
        %v4626 = vpop.f32.mrf.mxu0
        %v4627 = vadd.f32 %v3270, %v4626
        %4628 = vmatmul.bf16.gmra.mxu0 %v3123
        %v4629 = vpop.f32.mrf.mxu0
        %v4630 = vadd.f32 %v3270, %v4629
        %v4631 = vpop.f32.mrf.mxu0
        %v4632 = vadd.f32 %v3270, %v4631
        %4633 = vmatmul.bf16.gmra.mxu0 %v3125
        %v4634 = vpop.f32.mrf.mxu0
        %v4635 = vadd.f32 %v3270, %v4634
        %v4636 = vpop.f32.mrf.mxu0
        %v4637 = vadd.f32 %v3270, %v4636
        %4638 = vmatmul.bf16.gmra.mxu0 %v3127
        %v4639 = vpop.f32.mrf.mxu0
        %v4640 = vadd.f32 %v3270, %v4639
        %v4641 = vpop.f32.mrf.mxu0
        %v4642 = vadd.f32 %v3270, %v4641
        %4643 = vmatmul.bf16.gmra.mxu0 %v3129
        %v4644 = vpop.f32.mrf.mxu0
        %v4645 = vadd.f32 %v3270, %v4644
        %v4646 = vpop.f32.mrf.mxu0
        %v4647 = vadd.f32 %v3270, %v4646
        %4648 = vmatmul.bf16.gmra.mxu0 %v3131
        %v4649 = vpop.f32.mrf.mxu0
        %v4650 = vadd.f32 %v3270, %v4649
        %v4651 = vpop.f32.mrf.mxu0
        %v4652 = vadd.f32 %v3270, %v4651
        %4653 = vdwg.mxu0
        %4654 = vmatpush.bf16.msra.mxu0 %v3790
        %4655 = vmatpush.bf16.msra.mxu0 %v3782
        %4656 = vmatpush.bf16.msra.mxu0 %v3774
        %4657 = vmatpush.bf16.msra.mxu0 %v3766
        %4658 = vmatpush.bf16.msra.mxu0 %v3758
        %4659 = vmatpush.bf16.msra.mxu0 %v3750
        %4660 = vmatpush.bf16.msra.mxu0 %v3742
        %4661 = vmatpush.bf16.msra.mxu0 %v3734
        %4662 = vmatmul.bf16.gmra.mxu0 %v3118
        %v4663 = vpop.f32.mrf.mxu0
        %v4664 = vadd.f32 %v4615, %v4663
        %v4665 = vpop.f32.mrf.mxu0
        %v4666 = vadd.f32 %v4617, %v4665
        %4667 = vmatmul.bf16.gmra.mxu0 %v3120
        %v4668 = vpop.f32.mrf.mxu0
        %v4669 = vadd.f32 %v4620, %v4668
        %v4670 = vpop.f32.mrf.mxu0
        %v4671 = vadd.f32 %v4622, %v4670
        %4672 = vmatmul.bf16.gmra.mxu0 %v3122
        %v4673 = vpop.f32.mrf.mxu0
        %v4674 = vadd.f32 %v4625, %v4673
        %v4675 = vpop.f32.mrf.mxu0
        %v4676 = vadd.f32 %v4627, %v4675
        %4677 = vmatmul.bf16.gmra.mxu0 %v3124
        %v4678 = vpop.f32.mrf.mxu0
        %v4679 = vadd.f32 %v4630, %v4678
        %v4680 = vpop.f32.mrf.mxu0
        %v4681 = vadd.f32 %v4632, %v4680
        %4682 = vmatmul.bf16.gmra.mxu0 %v3126
        %v4683 = vpop.f32.mrf.mxu0
        %v4684 = vadd.f32 %v4635, %v4683
        %v4685 = vpop.f32.mrf.mxu0
        %v4686 = vadd.f32 %v4637, %v4685
        %4687 = vmatmul.bf16.gmra.mxu0 %v3128
        %v4688 = vpop.f32.mrf.mxu0
        %v4689 = vadd.f32 %v4640, %v4688
        %v4690 = vpop.f32.mrf.mxu0
        %v4691 = vadd.f32 %v4642, %v4690
        %4692 = vmatmul.bf16.gmra.mxu0 %v3130
        %v4693 = vpop.f32.mrf.mxu0
        %v4694 = vadd.f32 %v4645, %v4693
        %v4695 = vpop.f32.mrf.mxu0
        %v4696 = vadd.f32 %v4647, %v4695
        %4697 = vmatmul.bf16.gmra.mxu0 %v3132
        %v4698 = vpop.f32.mrf.mxu0
        %v4699 = vadd.f32 %v4650, %v4698
        %v4700 = vpop.f32.mrf.mxu0
        %v4701 = vadd.f32 %v4652, %v4700
        %4702 = vdwg.mxu0
        %v4703 = vmax.f32 %v3978, 0.0
        %v4704 = vmax.f32 %v4076, 0.0
        %v4705 = vmax.f32 %v4174, 0.0
        %v4706 = vmax.f32 %v4272, 0.0
        %v4707 = vmax.f32 %v4370, 0.0
        %v4708 = vmax.f32 %v4468, 0.0
        %v4709 = vmax.f32 %v4566, 0.0
        %v4710 = vmax.f32 %v4664, 0.0
        %v4711 = vmax.f32 %v3980, 0.0
        %v4712 = vmax.f32 %v4078, 0.0
        %v4713 = vmax.f32 %v4176, 0.0
        %v4714 = vmax.f32 %v4274, 0.0
        %v4715 = vmax.f32 %v4372, 0.0
        %v4716 = vmax.f32 %v4470, 0.0
        %v4717 = vmax.f32 %v4568, 0.0
        %v4718 = vmax.f32 %v4666, 0.0
        %v4719 = vmax.f32 %v3983, 0.0
        %v4720 = vmax.f32 %v4081, 0.0
        %v4721 = vmax.f32 %v4179, 0.0
        %v4722 = vmax.f32 %v4277, 0.0
        %v4723 = vmax.f32 %v4375, 0.0
        %v4724 = vmax.f32 %v4473, 0.0
        %v4725 = vmax.f32 %v4571, 0.0
        %v4726 = vmax.f32 %v4669, 0.0
        %v4727 = vmax.f32 %v3985, 0.0
        %v4728 = vmax.f32 %v4083, 0.0
        %v4729 = vmax.f32 %v4181, 0.0
        %v4730 = vmax.f32 %v4279, 0.0
        %v4731 = vmax.f32 %v4377, 0.0
        %v4732 = vmax.f32 %v4475, 0.0
        %v4733 = vmax.f32 %v4573, 0.0
        %v4734 = vmax.f32 %v4671, 0.0
        %v4735 = vmax.f32 %v3988, 0.0
        %v4736 = vmax.f32 %v4086, 0.0
        %v4737 = vmax.f32 %v4184, 0.0
        %v4738 = vmax.f32 %v4282, 0.0
        %v4739 = vmax.f32 %v4380, 0.0
        %v4740 = vmax.f32 %v4478, 0.0
        %v4741 = vmax.f32 %v4576, 0.0
        %v4742 = vmax.f32 %v4674, 0.0
        %v4743 = vmax.f32 %v3990, 0.0
        %v4744 = vmax.f32 %v4088, 0.0
        %v4745 = vmax.f32 %v4186, 0.0
        %v4746 = vmax.f32 %v4284, 0.0
        %v4747 = vmax.f32 %v4382, 0.0
        %v4748 = vmax.f32 %v4480, 0.0
        %v4749 = vmax.f32 %v4578, 0.0
        %v4750 = vmax.f32 %v4676, 0.0
        %v4751 = vmax.f32 %v3993, 0.0
        %v4752 = vmax.f32 %v4091, 0.0
        %v4753 = vmax.f32 %v4189, 0.0
        %v4754 = vmax.f32 %v4287, 0.0
        %v4755 = vmax.f32 %v4385, 0.0
        %v4756 = vmax.f32 %v4483, 0.0
        %v4757 = vmax.f32 %v4581, 0.0
        %v4758 = vmax.f32 %v4679, 0.0
        %v4759 = vmax.f32 %v3995, 0.0
        %v4760 = vmax.f32 %v4093, 0.0
        %v4761 = vmax.f32 %v4191, 0.0
        %v4762 = vmax.f32 %v4289, 0.0
        %v4763 = vmax.f32 %v4387, 0.0
        %v4764 = vmax.f32 %v4485, 0.0
        %v4765 = vmax.f32 %v4583, 0.0
        %v4766 = vmax.f32 %v4681, 0.0
        %v4767 = vmax.f32 %v3998, 0.0
        %v4768 = vmax.f32 %v4096, 0.0
        %v4769 = vmax.f32 %v4194, 0.0
        %v4770 = vmax.f32 %v4292, 0.0
        %v4771 = vmax.f32 %v4390, 0.0
        %v4772 = vmax.f32 %v4488, 0.0
        %v4773 = vmax.f32 %v4586, 0.0
        %v4774 = vmax.f32 %v4684, 0.0
        %v4775 = vmax.f32 %v4000, 0.0
        %v4776 = vmax.f32 %v4098, 0.0
        %v4777 = vmax.f32 %v4196, 0.0
        %v4778 = vmax.f32 %v4294, 0.0
        %v4779 = vmax.f32 %v4392, 0.0
        %v4780 = vmax.f32 %v4490, 0.0
        %v4781 = vmax.f32 %v4588, 0.0
        %v4782 = vmax.f32 %v4686, 0.0
        %v4783 = vmax.f32 %v4003, 0.0
        %v4784 = vmax.f32 %v4101, 0.0
        %v4785 = vmax.f32 %v4199, 0.0
        %v4786 = vmax.f32 %v4297, 0.0
        %v4787 = vmax.f32 %v4395, 0.0
        %v4788 = vmax.f32 %v4493, 0.0
        %v4789 = vmax.f32 %v4591, 0.0
        %v4790 = vmax.f32 %v4689, 0.0
        %v4791 = vmax.f32 %v4005, 0.0
        %v4792 = vmax.f32 %v4103, 0.0
        %v4793 = vmax.f32 %v4201, 0.0
        %v4794 = vmax.f32 %v4299, 0.0
        %v4795 = vmax.f32 %v4397, 0.0
        %v4796 = vmax.f32 %v4495, 0.0
        %v4797 = vmax.f32 %v4593, 0.0
        %v4798 = vmax.f32 %v4691, 0.0
        %v4799 = vmax.f32 %v4008, 0.0
        %v4800 = vmax.f32 %v4106, 0.0
        %v4801 = vmax.f32 %v4204, 0.0
        %v4802 = vmax.f32 %v4302, 0.0
        %v4803 = vmax.f32 %v4400, 0.0
        %v4804 = vmax.f32 %v4498, 0.0
        %v4805 = vmax.f32 %v4596, 0.0
        %v4806 = vmax.f32 %v4694, 0.0
        %v4807 = vmax.f32 %v4010, 0.0
        %v4808 = vmax.f32 %v4108, 0.0
        %v4809 = vmax.f32 %v4206, 0.0
        %v4810 = vmax.f32 %v4304, 0.0
        %v4811 = vmax.f32 %v4402, 0.0
        %v4812 = vmax.f32 %v4500, 0.0
        %v4813 = vmax.f32 %v4598, 0.0
        %v4814 = vmax.f32 %v4696, 0.0
        %v4815 = vmax.f32 %v4013, 0.0
        %v4816 = vmax.f32 %v4111, 0.0
        %v4817 = vmax.f32 %v4209, 0.0
        %v4818 = vmax.f32 %v4307, 0.0
        %v4819 = vmax.f32 %v4405, 0.0
        %v4820 = vmax.f32 %v4503, 0.0
        %v4821 = vmax.f32 %v4601, 0.0
        %v4822 = vmax.f32 %v4699, 0.0
        %v4823 = vmax.f32 %v4015, 0.0
        %v4824 = vmax.f32 %v4113, 0.0
        %v4825 = vmax.f32 %v4211, 0.0
        %v4826 = vmax.f32 %v4309, 0.0
        %v4827 = vmax.f32 %v4407, 0.0
        %v4828 = vmax.f32 %v4505, 0.0
        %v4829 = vmax.f32 %v4603, 0.0
        %v4830 = vmax.f32 %v4701, 0.0
        %4831 = vst [vmem:[%s448] sm:$0xff] %v4703
        %4832 = vst [vmem:[%s448 + $0x8] sm:$0xff] %v4704
        %4833 = vst [vmem:[%s448 + $0x10] sm:$0xff] %v4705
        %4834 = vst [vmem:[%s448 + $0x18] sm:$0xff] %v4706
        %4835 = vst [vmem:[%s448 + $0x20] sm:$0xff] %v4707
        %4836 = vst [vmem:[%s448 + $0x28] sm:$0xff] %v4708
        %4837 = vst [vmem:[%s448 + $0x30] sm:$0xff] %v4709
        %4838 = vst [vmem:[%s448 + $0x38] sm:$0xff] %v4710
        %4839 = vst [vmem:[%s448 + $0x40] sm:$0xff] %v4711
        %4840 = vst [vmem:[%s448 + $0x48] sm:$0xff] %v4712
        %4841 = vst [vmem:[%s448 + $0x50] sm:$0xff] %v4713
        %4842 = vst [vmem:[%s448 + $0x58] sm:$0xff] %v4714
        %4843 = vst [vmem:[%s448 + $0x60] sm:$0xff] %v4715
        %4844 = vst [vmem:[%s448 + $0x68] sm:$0xff] %v4716
        %4845 = vst [vmem:[%s448 + $0x70] sm:$0xff] %v4717
        %4846 = vst [vmem:[%s448 + $0x78] sm:$0xff] %v4718
        %4847 = vst [vmem:[%s448 + $0x80] sm:$0xff] %v4719
        %4848 = vst [vmem:[%s448 + $0x88] sm:$0xff] %v4720
        %4849 = vst [vmem:[%s448 + $0x90] sm:$0xff] %v4721
        %4850 = vst [vmem:[%s448 + $0x98] sm:$0xff] %v4722
        %4851 = vst [vmem:[%s448 + $0xa0] sm:$0xff] %v4723
        %4852 = vst [vmem:[%s448 + $0xa8] sm:$0xff] %v4724
        %4853 = vst [vmem:[%s448 + $0xb0] sm:$0xff] %v4725
        %4854 = vst [vmem:[%s448 + $0xb8] sm:$0xff] %v4726
        %4855 = vst [vmem:[%s448 + $0xc0] sm:$0xff] %v4727
        %4856 = vst [vmem:[%s448 + $0xc8] sm:$0xff] %v4728
        %4857 = vst [vmem:[%s448 + $0xd0] sm:$0xff] %v4729
        %4858 = vst [vmem:[%s448 + $0xd8] sm:$0xff] %v4730
        %4859 = vst [vmem:[%s448 + $0xe0] sm:$0xff] %v4731
        %4860 = vst [vmem:[%s448 + $0xe8] sm:$0xff] %v4732
        %4861 = vst [vmem:[%s448 + $0xf0] sm:$0xff] %v4733
        %4862 = vst [vmem:[%s448 + $0xf8] sm:$0xff] %v4734
        %4863 = vst [vmem:[%s448 + $0x100] sm:$0xff] %v4735
        %4864 = vst [vmem:[%s448 + $0x108] sm:$0xff] %v4736
        %4865 = vst [vmem:[%s448 + $0x110] sm:$0xff] %v4737
        %4866 = vst [vmem:[%s448 + $0x118] sm:$0xff] %v4738
        %4867 = vst [vmem:[%s448 + $0x120] sm:$0xff] %v4739
        %4868 = vst [vmem:[%s448 + $0x128] sm:$0xff] %v4740
        %4869 = vst [vmem:[%s448 + $0x130] sm:$0xff] %v4741
        %4870 = vst [vmem:[%s448 + $0x138] sm:$0xff] %v4742
        %4871 = vst [vmem:[%s448 + $0x140] sm:$0xff] %v4743
        %4872 = vst [vmem:[%s448 + $0x148] sm:$0xff] %v4744
        %4873 = vst [vmem:[%s448 + $0x150] sm:$0xff] %v4745
        %4874 = vst [vmem:[%s448 + $0x158] sm:$0xff] %v4746
        %4875 = vst [vmem:[%s448 + $0x160] sm:$0xff] %v4747
        %4876 = vst [vmem:[%s448 + $0x168] sm:$0xff] %v4748
        %4877 = vst [vmem:[%s448 + $0x170] sm:$0xff] %v4749
        %4878 = vst [vmem:[%s448 + $0x178] sm:$0xff] %v4750
        %4879 = vst [vmem:[%s448 + $0x180] sm:$0xff] %v4751
        %4880 = vst [vmem:[%s448 + $0x188] sm:$0xff] %v4752
        %4881 = vst [vmem:[%s448 + $0x190] sm:$0xff] %v4753
        %4882 = vst [vmem:[%s448 + $0x198] sm:$0xff] %v4754
        %4883 = vst [vmem:[%s448 + $0x1a0] sm:$0xff] %v4755
        %4884 = vst [vmem:[%s448 + $0x1a8] sm:$0xff] %v4756
        %4885 = vst [vmem:[%s448 + $0x1b0] sm:$0xff] %v4757
        %4886 = vst [vmem:[%s448 + $0x1b8] sm:$0xff] %v4758
        %4887 = vst [vmem:[%s448 + $0x1c0] sm:$0xff] %v4759
        %4888 = vst [vmem:[%s448 + $0x1c8] sm:$0xff] %v4760
        %4889 = vst [vmem:[%s448 + $0x1d0] sm:$0xff] %v4761
        %4890 = vst [vmem:[%s448 + $0x1d8] sm:$0xff] %v4762
        %4891 = vst [vmem:[%s448 + $0x1e0] sm:$0xff] %v4763
        %4892 = vst [vmem:[%s448 + $0x1e8] sm:$0xff] %v4764
        %4893 = vst [vmem:[%s448 + $0x1f0] sm:$0xff] %v4765
        %4894 = vst [vmem:[%s448 + $0x1f8] sm:$0xff] %v4766
        %4895 = vst [vmem:[%s448 + $0x200] sm:$0xff] %v4767
        %4896 = vst [vmem:[%s448 + $0x208] sm:$0xff] %v4768
        %4897 = vst [vmem:[%s448 + $0x210] sm:$0xff] %v4769
        %4898 = vst [vmem:[%s448 + $0x218] sm:$0xff] %v4770
        %4899 = vst [vmem:[%s448 + $0x220] sm:$0xff] %v4771
        %4900 = vst [vmem:[%s448 + $0x228] sm:$0xff] %v4772
        %4901 = vst [vmem:[%s448 + $0x230] sm:$0xff] %v4773
        %4902 = vst [vmem:[%s448 + $0x238] sm:$0xff] %v4774
        %4903 = vst [vmem:[%s448 + $0x240] sm:$0xff] %v4775
        %4904 = vst [vmem:[%s448 + $0x248] sm:$0xff] %v4776
        %4905 = vst [vmem:[%s448 + $0x250] sm:$0xff] %v4777
        %4906 = vst [vmem:[%s448 + $0x258] sm:$0xff] %v4778
        %4907 = vst [vmem:[%s448 + $0x260] sm:$0xff] %v4779
        %4908 = vst [vmem:[%s448 + $0x268] sm:$0xff] %v4780
        %4909 = vst [vmem:[%s448 + $0x270] sm:$0xff] %v4781
        %4910 = vst [vmem:[%s448 + $0x278] sm:$0xff] %v4782
        %4911 = vst [vmem:[%s448 + $0x280] sm:$0xff] %v4783
        %4912 = vst [vmem:[%s448 + $0x288] sm:$0xff] %v4784
        %4913 = vst [vmem:[%s448 + $0x290] sm:$0xff] %v4785
        %4914 = vst [vmem:[%s448 + $0x298] sm:$0xff] %v4786
        %4915 = vst [vmem:[%s448 + $0x2a0] sm:$0xff] %v4787
        %4916 = vst [vmem:[%s448 + $0x2a8] sm:$0xff] %v4788
        %4917 = vst [vmem:[%s448 + $0x2b0] sm:$0xff] %v4789
        %4918 = vst [vmem:[%s448 + $0x2b8] sm:$0xff] %v4790
        %4919 = vst [vmem:[%s448 + $0x2c0] sm:$0xff] %v4791
        %4920 = vst [vmem:[%s448 + $0x2c8] sm:$0xff] %v4792
        %4921 = vst [vmem:[%s448 + $0x2d0] sm:$0xff] %v4793
        %4922 = vst [vmem:[%s448 + $0x2d8] sm:$0xff] %v4794
        %4923 = vst [vmem:[%s448 + $0x2e0] sm:$0xff] %v4795
        %4924 = vst [vmem:[%s448 + $0x2e8] sm:$0xff] %v4796
        %4925 = vst [vmem:[%s448 + $0x2f0] sm:$0xff] %v4797
        %4926 = vst [vmem:[%s448 + $0x2f8] sm:$0xff] %v4798
        %4927 = vst [vmem:[%s448 + $0x300] sm:$0xff] %v4799
        %4928 = vst [vmem:[%s448 + $0x308] sm:$0xff] %v4800
        %4929 = vst [vmem:[%s448 + $0x310] sm:$0xff] %v4801
        %4930 = vst [vmem:[%s448 + $0x318] sm:$0xff] %v4802
        %4931 = vst [vmem:[%s448 + $0x320] sm:$0xff] %v4803
        %4932 = vst [vmem:[%s448 + $0x328] sm:$0xff] %v4804
        %4933 = vst [vmem:[%s448 + $0x330] sm:$0xff] %v4805
        %4934 = vst [vmem:[%s448 + $0x338] sm:$0xff] %v4806
        %4935 = vst [vmem:[%s448 + $0x340] sm:$0xff] %v4807
        %4936 = vst [vmem:[%s448 + $0x348] sm:$0xff] %v4808
        %4937 = vst [vmem:[%s448 + $0x350] sm:$0xff] %v4809
        %4938 = vst [vmem:[%s448 + $0x358] sm:$0xff] %v4810
        %4939 = vst [vmem:[%s448 + $0x360] sm:$0xff] %v4811
        %4940 = vst [vmem:[%s448 + $0x368] sm:$0xff] %v4812
        %4941 = vst [vmem:[%s448 + $0x370] sm:$0xff] %v4813
        %4942 = vst [vmem:[%s448 + $0x378] sm:$0xff] %v4814
        %4943 = vst [vmem:[%s448 + $0x380] sm:$0xff] %v4815
        %4944 = vst [vmem:[%s448 + $0x388] sm:$0xff] %v4816
        %4945 = vst [vmem:[%s448 + $0x390] sm:$0xff] %v4817
        %4946 = vst [vmem:[%s448 + $0x398] sm:$0xff] %v4818
        %4947 = vst [vmem:[%s448 + $0x3a0] sm:$0xff] %v4819
        %4948 = vst [vmem:[%s448 + $0x3a8] sm:$0xff] %v4820
        %4949 = vst [vmem:[%s448 + $0x3b0] sm:$0xff] %v4821
        %4950 = vst [vmem:[%s448 + $0x3b8] sm:$0xff] %v4822
        %4951 = vst [vmem:[%s448 + $0x3c0] sm:$0xff] %v4823
        %4952 = vst [vmem:[%s448 + $0x3c8] sm:$0xff] %v4824
        %4953 = vst [vmem:[%s448 + $0x3d0] sm:$0xff] %v4825
        %4954 = vst [vmem:[%s448 + $0x3d8] sm:$0xff] %v4826
        %4955 = vst [vmem:[%s448 + $0x3e0] sm:$0xff] %v4827
        %4956 = vst [vmem:[%s448 + $0x3e8] sm:$0xff] %v4828
        %4957 = vst [vmem:[%s448 + $0x3f0] sm:$0xff] %v4829
        %4958 = vst [vmem:[%s448 + $0x3f8] sm:$0xff] %v4830
        %s4959 = sand.u32 %s231, 1
        %s4960 = scalar_lea.sflag [#allocation4], %s4959
        %s4961 = sand.u32 %s231, 1
        %s4962 = smul.addr %s4961, 1024
        %s4963 = scalar_lea.vmem [#allocation14], %s4962
        // Predicated region
        $region85: #{tpu_custom_call.1} parent=55 // pred_check
          %p4964 = pneg %p241
        $region86: #{tpu_custom_call.1} parent=55 // pred_check_branch
          %4966 = sbr.rel (%p4964) target = $region88
        $region87: #{tpu_custom_call.1} parent=55 // pred_region
          %s4967 = smul.u32 16, %s29
          %4969 = vsyncadd %s4960, 0
          %s4970 = smul.addr %s4967, 8
          %s4971 = smul.addr %s4970, 8
          %s4972 = scalar_lea.hbm %s9, %s4971
          %s4973 = sshll.u32 %s4963, 4
          %s4974 = int_to_ptr.vmem [resolvable:$true] %s4973
          %s4975 = sshll.u32 %s4972, 4
          %s4976 = int_to_ptr.hbm [resolvable:$true] %s4975
          %4981 = dma.vmem_to_hbm [thread:$0]  %s4974, 16384, %s4976, %s4960, 1024, 1024, 64
        $region88: #{tpu_custom_call.1} parent=55 // pred_fallthru
          _
      $region56: #{tpu_custom_call.1} parent=5 // pred_fallthru
        _
      %p4982 = scmp.le.s32.totalorder 2, %s24
      // Predicated region
      $region89: #{tpu_custom_call.1} parent=5 // pred_check
        %p4983 = pneg %p4982
      $region90: #{tpu_custom_call.1} parent=5 // pred_check_branch
        %4985 = sbr.rel (%p4983) target = $region92
      $region91: #{tpu_custom_call.1} parent=5 // pred_region
        %s4986 = ssub.s32 %s24, 2
        // Predicated region
        $region93: #{tpu_custom_call.1} parent=91 // pred_check
          %p4987 = pneg %p247
        $region94: #{tpu_custom_call.1} parent=91 // pred_check_branch
          %4989 = sbr.rel (%p4987) target = $region96
        $region95: #{tpu_custom_call.1} parent=91 // pred_region
          %s4990 = sand.u32 %s232, 1
          %s4991 = scalar_lea.sflag [#allocation4], %s4990
          %s4992 = sand.u32 %s232, 1
          %s4993 = smul.addr %s4992, 1024
          %s4994 = scalar_lea.vmem [#allocation14], %s4993
          %4996 = dma.done %s4991, 16384
        $region96: #{tpu_custom_call.1} parent=91 // pred_fallthru
          _
      $region92: #{tpu_custom_call.1} parent=5 // pred_fallthru
        _
    $region6: #{tpu_custom_call.1} parent=1 // loop_footer
      %s28 = sadd.s32 1, %s24
    $region7: #{tpu_custom_call.1} parent=1 // loop_footer_branch
      %23 = sbr.rel target = $region3
    $region8: #{tpu_custom_call.1} parent=1 // loop_exit
      _
    %4997 = vsyncpa [#allocation3], 1
    %s4998 = scalar_lea.sflag [#allocation3], 1
    %4999 = vsyncpa %s4998, 1
    %5000 = vsyncpa [#allocation6], 1
    %5001 = vsyncpa [#allocation9], 1
    %5002 = vsyncpa [#allocation12], 1
    %5003 = vsyncpa [#allocation4], 1
    %s5004 = scalar_lea.sflag [#allocation4], 1
    %5005 = vsyncpa %s5004, 1

</llo_original>
